<compile_context>
chip_gen: v6e
topology: v6e:2x2x1
jax: 0.10.0
libtpu: 0.0.40
codegen_flags: <defaults>
</compile_context>

<pallas_src>
import functools

import jax
import jax.numpy as jnp
from jax import lax
from jax.experimental import pallas as pl
from jax.experimental.pallas import tpu as pltpu


# ----------------------------------------------------------------------------
# Geometry (Python-time shape arithmetic, mirrors the PyTorch conv stack).
# ----------------------------------------------------------------------------
def _conv_out(size, k, s):
    return (size - k) // s + 1


def _geometry(in_h, in_w):
    OH1, OW1 = _conv_out(in_h, 8, 4), _conv_out(in_w, 8, 4)
    OH2, OW2 = _conv_out(OH1, 4, 2), _conv_out(OW1, 4, 2)
    OH3, OW3 = _conv_out(OH2, 3, 1), _conv_out(OW2, 3, 1)
    GU, GV = (OH1 + 1) // 2, (OW1 + 1) // 2   # padded parity-grid extents
    return dict(OH1=OH1, OW1=OW1, OH2=OH2, OW2=OW2,
                OH3=OH3, OW3=OW3, GU=GU, GV=GV)


# ----------------------------------------------------------------------------
# Wrapper-side conv1 im2col, emitted in parity-group order for the fused kernel.
# Row layout: ((p*2+q)*GU + u)*GV + v  <->  conv1 output pixel (2u+p, 2v+q),
# patch channels in (ki, kj, cin) order. Padded rows (u,v past the image) are
# zeros and are never read downstream.
# ----------------------------------------------------------------------------
def _im2col(x, kh, kw, stride):
    B, H, W, C = x.shape
    OH = (H - kh) // stride + 1
    OW = (W - kw) // stride + 1
    cols = []
    for i in range(kh):
        for j in range(kw):
            cols.append(x[:, i:i + stride * (OH - 1) + 1:stride,
                            j:j + stride * (OW - 1) + 1:stride, :])
    p = jnp.stack(cols, axis=3)                    # (B, OH, OW, kh*kw, C)
    return p.reshape(B, OH, OW, kh * kw * C)


def _conv1_patches_parity(x, g):
    B = x.shape[0]
    p = _im2col(x, 8, 8, 4)                        # (B, OH1, OW1, 192)
    K1 = p.shape[-1]
    GU, GV = g["GU"], g["GV"]
    p = jnp.pad(p, ((0, 0), (0, 2 * GU - g["OH1"]), (0, 2 * GV - g["OW1"]), (0, 0)))
    p = p.reshape(B, GU, 2, GV, 2, K1).transpose(0, 2, 4, 1, 3, 5)
    return p.reshape(B, 4 * GU * GV, K1)


# ----------------------------------------------------------------------------
# Fused kernel: per batch element, the entire network with resident weights.
# ----------------------------------------------------------------------------
def _make_actor_kernel(g):
    OH2, OW2, OH3, OW3 = g["OH2"], g["OW2"], g["OH3"], g["OW3"]
    GU, GV = g["GU"], g["GV"]

    def kernel(x_ref, w1_ref, b1_ref, w2_ref, b2_ref, w3_ref, b3_ref,
               wf_ref, bf_ref, wh_ref, bh_ref, o_ref):
        f32, bf16 = jnp.float32, jnp.bfloat16

        # ---- conv1: one MXU matmul over the pre-built (parity-ordered) patches
        x = x_ref[0]                                              # (4*GU*GV, 192)
        c1 = jnp.dot(x, w1_ref[...], preferred_element_type=f32)
        c1 = jnp.maximum(c1 + b1_ref[...], 0.0).astype(bf16)      # (4*GU*GV, 32)

        # ---- conv2 (k=4, s=2) as a stride-1 2x2 conv over the 4 parity groups
        w2 = w2_ref[...]                                          # (512, 64)
        c2_rows = []
        for oh2 in range(OH2):
            pieces = []
            for grp in range(4):                                  # grp = p*2+q
                base = grp * GU * GV
                for ai in range(2):
                    r0 = base + (oh2 + ai) * GV
                    slab = c1[r0:r0 + GV, :]                      # (GV, 32)
                    for bj in range(2):
                        pieces.append(slab[bj:bj + OW2, :])       # (OW2, 32)
            patch = jnp.concatenate(pieces, axis=-1)              # (OW2, 512)
            row = jnp.dot(patch, w2, preferred_element_type=f32)
            c2_rows.append(jnp.maximum(row + b2_ref[...], 0.0).astype(bf16))

        # ---- conv3 (k=3, s=1)
        w3 = w3_ref[...]                                          # (576, 64)
        c3_rows = []
        for u in range(OH3):
            pieces = []
            for di in range(3):
                blk = c2_rows[u + di]                             # (OW2, 64)
                for dj in range(3):
                    pieces.append(blk[dj:dj + OW3, :])            # (OW3, 64)
            patch = jnp.concatenate(pieces, axis=-1)              # (OW3, 576)
            row = jnp.dot(patch, w3, preferred_element_type=f32)
            c3_rows.append(jnp.maximum(row + b3_ref[...], 0.0).astype(bf16))

        # ---- fc: one (1,64)x(64,128) matmul per conv3 pixel, accumulated in f32
        # (avoids any sublane->lane reshape of the feature map).
        wf = wf_ref[...]                                          # (fc_in, 128)
        h = jnp.zeros((1, wf.shape[1]), f32)
        for u in range(OH3):
            blk = c3_rows[u]
            for v in range(OW3):
                s0 = (u * OW3 + v) * 64
                h = h + jnp.dot(blk[v:v + 1, :], wf[s0:s0 + 64, :],
                                preferred_element_type=f32)
        h = jnp.maximum(h + bf_ref[...], 0.0).astype(bf16)        # (1, 128)

        # ---- actor head (zero-padded to 128 lanes) + softmax, lane-dense store
        logits = jnp.dot(h, wh_ref[...], preferred_element_type=f32) + bh_ref[...]
        m = jnp.max(logits, axis=-1, keepdims=True)
        e = jnp.exp(logits - m)
        o_ref[0] = e / jnp.sum(e, axis=-1, keepdims=True)         # (1, 128) f32

    return kernel


# ----------------------------------------------------------------------------
# Forward pass (matches Actor.forward: convs -> flatten -> fc -> ReLU -> head
# -> softmax).  Single pallas_call, grid over batch.
# ----------------------------------------------------------------------------
def actor_forward(params, x_nhwc, action_dim):
    B, H, W, _ = x_nhwc.shape
    g = _geometry(H, W)
    x = x_nhwc.astype(jnp.bfloat16)
    patches = _conv1_patches_parity(x, g)          # (B, 4*GU*GV, 192) bf16
    R, K1 = patches.shape[1], patches.shape[2]
    NP = params["head_w"].shape[1]                 # lane-dense padded head width

    const2 = lambda b: (0, 0)
    out = pl.pallas_call(
        _make_actor_kernel(g),
        out_shape=jax.ShapeDtypeStruct((B, 1, NP), jnp.float32),
        grid=(B,),
        in_specs=[
            pl.BlockSpec((1, R, K1), lambda b: (b, 0, 0)),        # patches: per-batch
            pl.BlockSpec(params["conv1_w"].shape, const2),        # weights/bias resident
            pl.BlockSpec(params["conv1_b"].shape, const2),
            pl.BlockSpec(params["conv2_w"].shape, const2),
            pl.BlockSpec(params["conv2_b"].shape, const2),
            pl.BlockSpec(params["conv3_w"].shape, const2),
            pl.BlockSpec(params["conv3_b"].shape, const2),
            pl.BlockSpec(params["fc_w"].shape, const2),
            pl.BlockSpec(params["fc_b"].shape, const2),
            pl.BlockSpec(params["head_w"].shape, const2),
            pl.BlockSpec(params["head_b"].shape, const2),
        ],
        out_specs=pl.BlockSpec((1, 1, NP), lambda b: (b, 0, 0)),
        compiler_params=pltpu.CompilerParams(
            dimension_semantics=("parallel",),     # v7x: shard batch over 2 TCs
            vmem_limit_bytes=32 * 1024 * 1024,     # safe on v5e/v6e/v7x; usage ~1 MiB
        ),
    )(patches,
      params["conv1_w"], params["conv1_b"],
      params["conv2_w"], params["conv2_b"],
      params["conv3_w"], params["conv3_b"],
      params["fc_w"], params["fc_b"],
      params["head_w"], params["head_b"])
    return out[:, 0, :action_dim]                  # (B, action_dim) f32


# ----------------------------------------------------------------------------
# Parameter setup.  All layout work (parity weight packing, fc NCHW-flatten
# folding, head lane padding, bf16 casts) happens here, never in the forward.
# ----------------------------------------------------------------------------
def init_params(key, in_h, in_w, action_dim):
    g = _geometry(in_h, in_w)
    OH3, OW3 = g["OH3"], g["OW3"]
    fc_in = 64 * OH3 * OW3
    ks = jax.random.split(key, 5)

    def rnd(k, shape, scale):
        return scale * jax.random.normal(k, shape, jnp.float32)

    # PyTorch-layout weights (what the nn.Module would hold).
    conv1_w = rnd(ks[0], (32, 3, 8, 8), 0.05)
    conv2_w = rnd(ks[1], (64, 32, 4, 4), 0.05)
    conv3_w = rnd(ks[2], (64, 64, 3, 3), 0.05)
    fc_w = rnd(ks[3], (128, fc_in), 0.02)
    head_w = rnd(ks[4], (action_dim, 128), 0.02)
    raw = dict(conv1_w=conv1_w, conv2_w=conv2_w, conv3_w=conv3_w,
               fc_w=fc_w, head_w=head_w)

    NP = 128
    # conv1: rows in (ki, kj, cin) order.
    w1 = jnp.transpose(conv1_w, (2, 3, 1, 0)).reshape(192, 32)
    # conv2: rows in (p, q, ai, bj, cin) order with (di, dj) = (2*ai+p, 2*bj+q).
    w2 = jnp.transpose(conv2_w.reshape(64, 32, 2, 2, 2, 2),
                       (3, 5, 2, 4, 1, 0)).reshape(512, 64)
    # conv3: rows in (di, dj, cin) order.
    w3 = jnp.transpose(conv3_w, (2, 3, 1, 0)).reshape(576, 64)
    # fc: fold PyTorch's NCHW flatten into the rows -> (h, w, c) order.
    wf = jnp.transpose(fc_w.reshape(128, 64, OH3, OW3),
                       (2, 3, 1, 0)).reshape(fc_in, 128)
    # head: transpose + zero-pad columns to 128 lanes; pad bias -> -1e30.
    wh = jnp.zeros((128, NP), jnp.float32).at[:, :action_dim].set(head_w.T)
    bh = jnp.full((1, NP), -1e30, jnp.float32).at[:, :action_dim].set(0.0)

    packed = {
        "conv1_w": w1.astype(jnp.bfloat16), "conv1_b": jnp.zeros((1, 32), jnp.float32),
        "conv2_w": w2.astype(jnp.bfloat16), "conv2_b": jnp.zeros((1, 64), jnp.float32),
        "conv3_w": w3.astype(jnp.bfloat16), "conv3_b": jnp.zeros((1, 64), jnp.float32),
        "fc_w": wf.astype(jnp.bfloat16), "fc_b": jnp.zeros((1, 128), jnp.float32),
        "head_w": wh.astype(jnp.bfloat16), "head_b": bh,
    }
    return packed, raw


# ----------------------------------------------------------------------------
# Pure-JAX reference (PyTorch semantics, mirroring the kernel's bf16 rounding).
# ----------------------------------------------------------------------------
def actor_forward_ref(raw, x_nhwc):
    f32 = jnp.float32
    bf = lambda a: a.astype(jnp.bfloat16)
    x = jnp.transpose(x_nhwc, (0, 3, 1, 2))        # NHWC -> NCHW (the permute)

    def conv(a, w, s):
        return lax.conv_general_dilated(
            bf(a), bf(w), (s, s), "VALID",
            dimension_numbers=("NCHW", "OIHW", "NCHW"),
            preferred_element_type=f32)

    x = jnp.maximum(conv(x, raw["conv1_w"], 4), 0.0)
    x = jnp.maximum(conv(x, raw["conv2_w"], 2), 0.0)
    x = jnp.maximum(conv(x, raw["conv3_w"], 1), 0.0)
    x = x.reshape(x.shape[0], -1)
    h = jnp.maximum(jnp.dot(bf(x), bf(raw["fc_w"]).T, preferred_element_type=f32), 0.0)
    logits = jnp.dot(bf(h), bf(raw["head_w"]).T, preferred_element_type=f32)
    return jax.nn.softmax(logits, axis=-1)


if __name__ == "__main__":
    key = jax.random.PRNGKey(0)
    kp, kx = jax.random.split(key)

    B, H, W, C = 2, 64, 64, 3
    ACTION_DIM = 6
    params, raw = init_params(kp, H, W, ACTION_DIM)
    x = jax.random.uniform(kx, (B, H, W, C), jnp.float32)

    fwd = jax.jit(functools.partial(actor_forward, action_dim=ACTION_DIM))
    probs = jax.block_until_ready(fwd(params, x))

    assert probs.shape == (B, ACTION_DIM) and probs.dtype == jnp.float32
    assert bool(jnp.all(jnp.isfinite(probs)))
    assert bool(jnp.all(jnp.abs(jnp.sum(probs, axis=-1) - 1.0) < 1e-3))

    ref = actor_forward_ref(raw, x)
    err = float(jnp.max(jnp.abs(probs - ref)))
    assert err < 2e-2, f"mismatch vs reference: {err}"
    print("KERNEL_OK")
</pallas_src>

<mosaic_0001>
module attributes {stable_mosaic.version = 11 : i64} {
  func.func @kernel(%arg0: i32, %arg1: memref<1x256x192xbf16, #tpu.memory_space<vmem>>, %arg2: memref<192x32xbf16, #tpu.memory_space<vmem>>, %arg3: memref<1x32xf32, #tpu.memory_space<vmem>>, %arg4: memref<512x64xbf16, #tpu.memory_space<vmem>>, %arg5: memref<1x64xf32, #tpu.memory_space<vmem>>, %arg6: memref<576x64xbf16, #tpu.memory_space<vmem>>, %arg7: memref<1x64xf32, #tpu.memory_space<vmem>>, %arg8: memref<1024x128xbf16, #tpu.memory_space<vmem>>, %arg9: memref<1x128xf32, #tpu.memory_space<vmem>>, %arg10: memref<128x128xbf16, #tpu.memory_space<vmem>>, %arg11: memref<1x128xf32, #tpu.memory_space<vmem>>, %arg12: memref<1x1x128xf32, #tpu.memory_space<vmem>>) attributes {dimension_semantics = [#tpu.dimension_semantics<parallel>], iteration_bounds = array<i64: 2>, scalar_prefetch = 0 : i64, scratch_operands = 0 : i64, tpu.core_type = #tpu.core_type<tc>, window_params = [{transform_indices = @transform_0, window_bounds = array<i64: 1, 256, 192>}, {pipeline_mode = #tpu.pipeline_mode<synchronous>, transform_indices = @transform_1, window_bounds = array<i64: 192, 32>}, {pipeline_mode = #tpu.pipeline_mode<synchronous>, transform_indices = @transform_2, window_bounds = array<i64: 1, 32>}, {pipeline_mode = #tpu.pipeline_mode<synchronous>, transform_indices = @transform_3, window_bounds = array<i64: 512, 64>}, {pipeline_mode = #tpu.pipeline_mode<synchronous>, transform_indices = @transform_4, window_bounds = array<i64: 1, 64>}, {pipeline_mode = #tpu.pipeline_mode<synchronous>, transform_indices = @transform_5, window_bounds = array<i64: 576, 64>}, {pipeline_mode = #tpu.pipeline_mode<synchronous>, transform_indices = @transform_6, window_bounds = array<i64: 1, 64>}, {pipeline_mode = #tpu.pipeline_mode<synchronous>, transform_indices = @transform_7, window_bounds = array<i64: 1024, 128>}, {pipeline_mode = #tpu.pipeline_mode<synchronous>, transform_indices = @transform_8, window_bounds = array<i64: 1, 128>}, {pipeline_mode = #tpu.pipeline_mode<synchronous>, transform_indices = @transform_9, window_bounds = array<i64: 128, 128>}, {pipeline_mode = #tpu.pipeline_mode<synchronous>, transform_indices = @transform_10, window_bounds = array<i64: 1, 128>}, {transform_indices = @transform_11, window_bounds = array<i64: 1, 1, 128>}]} {
    %c0 = arith.constant 0 : index
    %c0_0 = arith.constant 0 : index
    %c0_1 = arith.constant 0 : index
    %0 = vector.load %arg1[%c0, %c0_0, %c0_1] : memref<1x256x192xbf16, #tpu.memory_space<vmem>>, vector<1x256x192xbf16>
    %1 = vector.shape_cast %0 : vector<1x256x192xbf16> to vector<256x192xbf16>
    %c0_2 = arith.constant 0 : index
    %c0_3 = arith.constant 0 : index
    %2 = vector.load %arg2[%c0_2, %c0_3] : memref<192x32xbf16, #tpu.memory_space<vmem>>, vector<192x32xbf16>
    %cst = arith.constant dense<0.000000e+00> : vector<256x32xf32>
    %3 = tpu.matmul %1, %2, %cst {dimension_numbers = #tpu.dot_dimension_numbers<[1], [0], [0], [1], [0, 0, 1, 1], [], []>} : vector<256x192xbf16>, vector<192x32xbf16>, vector<256x32xf32> -> vector<256x32xf32>
    %c0_4 = arith.constant 0 : index
    %c0_5 = arith.constant 0 : index
    %4 = vector.load %arg3[%c0_4, %c0_5] : memref<1x32xf32, #tpu.memory_space<vmem>>, vector<1x32xf32>
    %5 = vector.broadcast %4 : vector<1x32xf32> to vector<256x32xf32>
    %6 = arith.addf %3, %5 : vector<256x32xf32>
    %cst_6 = arith.constant 0.000000e+00 : f32
    %7 = vector.broadcast %cst_6 : f32 to vector<256x32xf32>
    %8 = arith.maximumf %6, %7 : vector<256x32xf32>
    %9 = arith.truncf %8 : vector<256x32xf32> to vector<256x32xbf16>
    %c0_7 = arith.constant 0 : index
    %c0_8 = arith.constant 0 : index
    %10 = vector.load %arg4[%c0_7, %c0_8] : memref<512x64xbf16, #tpu.memory_space<vmem>>, vector<512x64xbf16>
    %11 = vector.extract_strided_slice %9 {offsets = [0, 0], sizes = [8, 32], strides = [1, 1]} : vector<256x32xbf16> to vector<8x32xbf16>
    %12 = vector.extract_strided_slice %11 {offsets = [0, 0], sizes = [6, 32], strides = [1, 1]} : vector<8x32xbf16> to vector<6x32xbf16>
    %13 = vector.extract_strided_slice %11 {offsets = [1, 0], sizes = [6, 32], strides = [1, 1]} : vector<8x32xbf16> to vector<6x32xbf16>
    %14 = vector.extract_strided_slice %9 {offsets = [8, 0], sizes = [8, 32], strides = [1, 1]} : vector<256x32xbf16> to vector<8x32xbf16>
    %15 = vector.extract_strided_slice %14 {offsets = [0, 0], sizes = [6, 32], strides = [1, 1]} : vector<8x32xbf16> to vector<6x32xbf16>
    %16 = vector.extract_strided_slice %14 {offsets = [1, 0], sizes = [6, 32], strides = [1, 1]} : vector<8x32xbf16> to vector<6x32xbf16>
    %17 = vector.extract_strided_slice %9 {offsets = [64, 0], sizes = [8, 32], strides = [1, 1]} : vector<256x32xbf16> to vector<8x32xbf16>
    %18 = vector.extract_strided_slice %17 {offsets = [0, 0], sizes = [6, 32], strides = [1, 1]} : vector<8x32xbf16> to vector<6x32xbf16>
    %19 = vector.extract_strided_slice %17 {offsets = [1, 0], sizes = [6, 32], strides = [1, 1]} : vector<8x32xbf16> to vector<6x32xbf16>
    %20 = vector.extract_strided_slice %9 {offsets = [72, 0], sizes = [8, 32], strides = [1, 1]} : vector<256x32xbf16> to vector<8x32xbf16>
    %21 = vector.extract_strided_slice %20 {offsets = [0, 0], sizes = [6, 32], strides = [1, 1]} : vector<8x32xbf16> to vector<6x32xbf16>
    %22 = vector.extract_strided_slice %20 {offsets = [1, 0], sizes = [6, 32], strides = [1, 1]} : vector<8x32xbf16> to vector<6x32xbf16>
    %23 = vector.extract_strided_slice %9 {offsets = [128, 0], sizes = [8, 32], strides = [1, 1]} : vector<256x32xbf16> to vector<8x32xbf16>
    %24 = vector.extract_strided_slice %23 {offsets = [0, 0], sizes = [6, 32], strides = [1, 1]} : vector<8x32xbf16> to vector<6x32xbf16>
    %25 = vector.extract_strided_slice %23 {offsets = [1, 0], sizes = [6, 32], strides = [1, 1]} : vector<8x32xbf16> to vector<6x32xbf16>
    %26 = vector.extract_strided_slice %9 {offsets = [136, 0], sizes = [8, 32], strides = [1, 1]} : vector<256x32xbf16> to vector<8x32xbf16>
    %27 = vector.extract_strided_slice %26 {offsets = [0, 0], sizes = [6, 32], strides = [1, 1]} : vector<8x32xbf16> to vector<6x32xbf16>
    %28 = vector.extract_strided_slice %26 {offsets = [1, 0], sizes = [6, 32], strides = [1, 1]} : vector<8x32xbf16> to vector<6x32xbf16>
    %29 = vector.extract_strided_slice %9 {offsets = [192, 0], sizes = [8, 32], strides = [1, 1]} : vector<256x32xbf16> to vector<8x32xbf16>
    %30 = vector.extract_strided_slice %29 {offsets = [0, 0], sizes = [6, 32], strides = [1, 1]} : vector<8x32xbf16> to vector<6x32xbf16>
    %31 = vector.extract_strided_slice %29 {offsets = [1, 0], sizes = [6, 32], strides = [1, 1]} : vector<8x32xbf16> to vector<6x32xbf16>
    %32 = vector.extract_strided_slice %9 {offsets = [200, 0], sizes = [8, 32], strides = [1, 1]} : vector<256x32xbf16> to vector<8x32xbf16>
    %33 = vector.extract_strided_slice %32 {offsets = [0, 0], sizes = [6, 32], strides = [1, 1]} : vector<8x32xbf16> to vector<6x32xbf16>
    %34 = vector.extract_strided_slice %32 {offsets = [1, 0], sizes = [6, 32], strides = [1, 1]} : vector<8x32xbf16> to vector<6x32xbf16>
    %35 = tpu.concatenate %12, %13, %15, %16, %18, %19, %21, %22, %24, %25, %27, %28, %30, %31, %33, %34 in 1 : vector<6x32xbf16>, vector<6x32xbf16>, vector<6x32xbf16>, vector<6x32xbf16>, vector<6x32xbf16>, vector<6x32xbf16>, vector<6x32xbf16>, vector<6x32xbf16>, vector<6x32xbf16>, vector<6x32xbf16>, vector<6x32xbf16>, vector<6x32xbf16>, vector<6x32xbf16>, vector<6x32xbf16>, vector<6x32xbf16>, vector<6x32xbf16> -> vector<6x512xbf16>
    %cst_9 = arith.constant dense<0.000000e+00> : vector<6x64xf32>
    %36 = tpu.matmul %35, %10, %cst_9 {dimension_numbers = #tpu.dot_dimension_numbers<[1], [0], [0], [1], [0, 0, 1, 1], [], []>} : vector<6x512xbf16>, vector<512x64xbf16>, vector<6x64xf32> -> vector<6x64xf32>
    %c0_10 = arith.constant 0 : index
    %c0_11 = arith.constant 0 : index
    %37 = vector.load %arg5[%c0_10, %c0_11] : memref<1x64xf32, #tpu.memory_space<vmem>>, vector<1x64xf32>
    %38 = vector.broadcast %37 : vector<1x64xf32> to vector<6x64xf32>
    %39 = arith.addf %36, %38 : vector<6x64xf32>
    %cst_12 = arith.constant 0.000000e+00 : f32
    %40 = vector.broadcast %cst_12 : f32 to vector<6x64xf32>
    %41 = arith.maximumf %39, %40 : vector<6x64xf32>
    %42 = arith.truncf %41 : vector<6x64xf32> to vector<6x64xbf16>
    %43 = vector.extract_strided_slice %9 {offsets = [8, 0], sizes = [8, 32], strides = [1, 1]} : vector<256x32xbf16> to vector<8x32xbf16>
    %44 = vector.extract_strided_slice %43 {offsets = [0, 0], sizes = [6, 32], strides = [1, 1]} : vector<8x32xbf16> to vector<6x32xbf16>
    %45 = vector.extract_strided_slice %43 {offsets = [1, 0], sizes = [6, 32], strides = [1, 1]} : vector<8x32xbf16> to vector<6x32xbf16>
    %46 = vector.extract_strided_slice %9 {offsets = [16, 0], sizes = [8, 32], strides = [1, 1]} : vector<256x32xbf16> to vector<8x32xbf16>
    %47 = vector.extract_strided_slice %46 {offsets = [0, 0], sizes = [6, 32], strides = [1, 1]} : vector<8x32xbf16> to vector<6x32xbf16>
    %48 = vector.extract_strided_slice %46 {offsets = [1, 0], sizes = [6, 32], strides = [1, 1]} : vector<8x32xbf16> to vector<6x32xbf16>
    %49 = vector.extract_strided_slice %9 {offsets = [72, 0], sizes = [8, 32], strides = [1, 1]} : vector<256x32xbf16> to vector<8x32xbf16>
    %50 = vector.extract_strided_slice %49 {offsets = [0, 0], sizes = [6, 32], strides = [1, 1]} : vector<8x32xbf16> to vector<6x32xbf16>
    %51 = vector.extract_strided_slice %49 {offsets = [1, 0], sizes = [6, 32], strides = [1, 1]} : vector<8x32xbf16> to vector<6x32xbf16>
    %52 = vector.extract_strided_slice %9 {offsets = [80, 0], sizes = [8, 32], strides = [1, 1]} : vector<256x32xbf16> to vector<8x32xbf16>
    %53 = vector.extract_strided_slice %52 {offsets = [0, 0], sizes = [6, 32], strides = [1, 1]} : vector<8x32xbf16> to vector<6x32xbf16>
    %54 = vector.extract_strided_slice %52 {offsets = [1, 0], sizes = [6, 32], strides = [1, 1]} : vector<8x32xbf16> to vector<6x32xbf16>
    %55 = vector.extract_strided_slice %9 {offsets = [136, 0], sizes = [8, 32], strides = [1, 1]} : vector<256x32xbf16> to vector<8x32xbf16>
    %56 = vector.extract_strided_slice %55 {offsets = [0, 0], sizes = [6, 32], strides = [1, 1]} : vector<8x32xbf16> to vector<6x32xbf16>
    %57 = vector.extract_strided_slice %55 {offsets = [1, 0], sizes = [6, 32], strides = [1, 1]} : vector<8x32xbf16> to vector<6x32xbf16>
    %58 = vector.extract_strided_slice %9 {offsets = [144, 0], sizes = [8, 32], strides = [1, 1]} : vector<256x32xbf16> to vector<8x32xbf16>
    %59 = vector.extract_strided_slice %58 {offsets = [0, 0], sizes = [6, 32], strides = [1, 1]} : vector<8x32xbf16> to vector<6x32xbf16>
    %60 = vector.extract_strided_slice %58 {offsets = [1, 0], sizes = [6, 32], strides = [1, 1]} : vector<8x32xbf16> to vector<6x32xbf16>
    %61 = vector.extract_strided_slice %9 {offsets = [200, 0], sizes = [8, 32], strides = [1, 1]} : vector<256x32xbf16> to vector<8x32xbf16>
    %62 = vector.extract_strided_slice %61 {offsets = [0, 0], sizes = [6, 32], strides = [1, 1]} : vector<8x32xbf16> to vector<6x32xbf16>
    %63 = vector.extract_strided_slice %61 {offsets = [1, 0], sizes = [6, 32], strides = [1, 1]} : vector<8x32xbf16> to vector<6x32xbf16>
    %64 = vector.extract_strided_slice %9 {offsets = [208, 0], sizes = [8, 32], strides = [1, 1]} : vector<256x32xbf16> to vector<8x32xbf16>
    %65 = vector.extract_strided_slice %64 {offsets = [0, 0], sizes = [6, 32], strides = [1, 1]} : vector<8x32xbf16> to vector<6x32xbf16>
    %66 = vector.extract_strided_slice %64 {offsets = [1, 0], sizes = [6, 32], strides = [1, 1]} : vector<8x32xbf16> to vector<6x32xbf16>
    %67 = tpu.concatenate %44, %45, %47, %48, %50, %51, %53, %54, %56, %57, %59, %60, %62, %63, %65, %66 in 1 : vector<6x32xbf16>, vector<6x32xbf16>, vector<6x32xbf16>, vector<6x32xbf16>, vector<6x32xbf16>, vector<6x32xbf16>, vector<6x32xbf16>, vector<6x32xbf16>, vector<6x32xbf16>, vector<6x32xbf16>, vector<6x32xbf16>, vector<6x32xbf16>, vector<6x32xbf16>, vector<6x32xbf16>, vector<6x32xbf16>, vector<6x32xbf16> -> vector<6x512xbf16>
    %cst_13 = arith.constant dense<0.000000e+00> : vector<6x64xf32>
    %68 = tpu.matmul %67, %10, %cst_13 {dimension_numbers = #tpu.dot_dimension_numbers<[1], [0], [0], [1], [0, 0, 1, 1], [], []>} : vector<6x512xbf16>, vector<512x64xbf16>, vector<6x64xf32> -> vector<6x64xf32>
    %c0_14 = arith.constant 0 : index
    %c0_15 = arith.constant 0 : index
    %69 = vector.load %arg5[%c0_14, %c0_15] : memref<1x64xf32, #tpu.memory_space<vmem>>, vector<1x64xf32>
    %70 = vector.broadcast %69 : vector<1x64xf32> to vector<6x64xf32>
    %71 = arith.addf %68, %70 : vector<6x64xf32>
    %cst_16 = arith.constant 0.000000e+00 : f32
    %72 = vector.broadcast %cst_16 : f32 to vector<6x64xf32>
    %73 = arith.maximumf %71, %72 : vector<6x64xf32>
    %74 = arith.truncf %73 : vector<6x64xf32> to vector<6x64xbf16>
    %75 = vector.extract_strided_slice %9 {offsets = [16, 0], sizes = [8, 32], strides = [1, 1]} : vector<256x32xbf16> to vector<8x32xbf16>
    %76 = vector.extract_strided_slice %75 {offsets = [0, 0], sizes = [6, 32], strides = [1, 1]} : vector<8x32xbf16> to vector<6x32xbf16>
    %77 = vector.extract_strided_slice %75 {offsets = [1, 0], sizes = [6, 32], strides = [1, 1]} : vector<8x32xbf16> to vector<6x32xbf16>
    %78 = vector.extract_strided_slice %9 {offsets = [24, 0], sizes = [8, 32], strides = [1, 1]} : vector<256x32xbf16> to vector<8x32xbf16>
    %79 = vector.extract_strided_slice %78 {offsets = [0, 0], sizes = [6, 32], strides = [1, 1]} : vector<8x32xbf16> to vector<6x32xbf16>
    %80 = vector.extract_strided_slice %78 {offsets = [1, 0], sizes = [6, 32], strides = [1, 1]} : vector<8x32xbf16> to vector<6x32xbf16>
    %81 = vector.extract_strided_slice %9 {offsets = [80, 0], sizes = [8, 32], strides = [1, 1]} : vector<256x32xbf16> to vector<8x32xbf16>
    %82 = vector.extract_strided_slice %81 {offsets = [0, 0], sizes = [6, 32], strides = [1, 1]} : vector<8x32xbf16> to vector<6x32xbf16>
    %83 = vector.extract_strided_slice %81 {offsets = [1, 0], sizes = [6, 32], strides = [1, 1]} : vector<8x32xbf16> to vector<6x32xbf16>
    %84 = vector.extract_strided_slice %9 {offsets = [88, 0], sizes = [8, 32], strides = [1, 1]} : vector<256x32xbf16> to vector<8x32xbf16>
    %85 = vector.extract_strided_slice %84 {offsets = [0, 0], sizes = [6, 32], strides = [1, 1]} : vector<8x32xbf16> to vector<6x32xbf16>
    %86 = vector.extract_strided_slice %84 {offsets = [1, 0], sizes = [6, 32], strides = [1, 1]} : vector<8x32xbf16> to vector<6x32xbf16>
    %87 = vector.extract_strided_slice %9 {offsets = [144, 0], sizes = [8, 32], strides = [1, 1]} : vector<256x32xbf16> to vector<8x32xbf16>
    %88 = vector.extract_strided_slice %87 {offsets = [0, 0], sizes = [6, 32], strides = [1, 1]} : vector<8x32xbf16> to vector<6x32xbf16>
    %89 = vector.extract_strided_slice %87 {offsets = [1, 0], sizes = [6, 32], strides = [1, 1]} : vector<8x32xbf16> to vector<6x32xbf16>
    %90 = vector.extract_strided_slice %9 {offsets = [152, 0], sizes = [8, 32], strides = [1, 1]} : vector<256x32xbf16> to vector<8x32xbf16>
    %91 = vector.extract_strided_slice %90 {offsets = [0, 0], sizes = [6, 32], strides = [1, 1]} : vector<8x32xbf16> to vector<6x32xbf16>
    %92 = vector.extract_strided_slice %90 {offsets = [1, 0], sizes = [6, 32], strides = [1, 1]} : vector<8x32xbf16> to vector<6x32xbf16>
    %93 = vector.extract_strided_slice %9 {offsets = [208, 0], sizes = [8, 32], strides = [1, 1]} : vector<256x32xbf16> to vector<8x32xbf16>
    %94 = vector.extract_strided_slice %93 {offsets = [0, 0], sizes = [6, 32], strides = [1, 1]} : vector<8x32xbf16> to vector<6x32xbf16>
    %95 = vector.extract_strided_slice %93 {offsets = [1, 0], sizes = [6, 32], strides = [1, 1]} : vector<8x32xbf16> to vector<6x32xbf16>
    %96 = vector.extract_strided_slice %9 {offsets = [216, 0], sizes = [8, 32], strides = [1, 1]} : vector<256x32xbf16> to vector<8x32xbf16>
    %97 = vector.extract_strided_slice %96 {offsets = [0, 0], sizes = [6, 32], strides = [1, 1]} : vector<8x32xbf16> to vector<6x32xbf16>
    %98 = vector.extract_strided_slice %96 {offsets = [1, 0], sizes = [6, 32], strides = [1, 1]} : vector<8x32xbf16> to vector<6x32xbf16>
    %99 = tpu.concatenate %76, %77, %79, %80, %82, %83, %85, %86, %88, %89, %91, %92, %94, %95, %97, %98 in 1 : vector<6x32xbf16>, vector<6x32xbf16>, vector<6x32xbf16>, vector<6x32xbf16>, vector<6x32xbf16>, vector<6x32xbf16>, vector<6x32xbf16>, vector<6x32xbf16>, vector<6x32xbf16>, vector<6x32xbf16>, vector<6x32xbf16>, vector<6x32xbf16>, vector<6x32xbf16>, vector<6x32xbf16>, vector<6x32xbf16>, vector<6x32xbf16> -> vector<6x512xbf16>
    %cst_17 = arith.constant dense<0.000000e+00> : vector<6x64xf32>
    %100 = tpu.matmul %99, %10, %cst_17 {dimension_numbers = #tpu.dot_dimension_numbers<[1], [0], [0], [1], [0, 0, 1, 1], [], []>} : vector<6x512xbf16>, vector<512x64xbf16>, vector<6x64xf32> -> vector<6x64xf32>
    %c0_18 = arith.constant 0 : index
    %c0_19 = arith.constant 0 : index
    %101 = vector.load %arg5[%c0_18, %c0_19] : memref<1x64xf32, #tpu.memory_space<vmem>>, vector<1x64xf32>
    %102 = vector.broadcast %101 : vector<1x64xf32> to vector<6x64xf32>
    %103 = arith.addf %100, %102 : vector<6x64xf32>
    %cst_20 = arith.constant 0.000000e+00 : f32
    %104 = vector.broadcast %cst_20 : f32 to vector<6x64xf32>
    %105 = arith.maximumf %103, %104 : vector<6x64xf32>
    %106 = arith.truncf %105 : vector<6x64xf32> to vector<6x64xbf16>
    %107 = vector.extract_strided_slice %9 {offsets = [24, 0], sizes = [8, 32], strides = [1, 1]} : vector<256x32xbf16> to vector<8x32xbf16>
    %108 = vector.extract_strided_slice %107 {offsets = [0, 0], sizes = [6, 32], strides = [1, 1]} : vector<8x32xbf16> to vector<6x32xbf16>
    %109 = vector.extract_strided_slice %107 {offsets = [1, 0], sizes = [6, 32], strides = [1, 1]} : vector<8x32xbf16> to vector<6x32xbf16>
    %110 = vector.extract_strided_slice %9 {offsets = [32, 0], sizes = [8, 32], strides = [1, 1]} : vector<256x32xbf16> to vector<8x32xbf16>
    %111 = vector.extract_strided_slice %110 {offsets = [0, 0], sizes = [6, 32], strides = [1, 1]} : vector<8x32xbf16> to vector<6x32xbf16>
    %112 = vector.extract_strided_slice %110 {offsets = [1, 0], sizes = [6, 32], strides = [1, 1]} : vector<8x32xbf16> to vector<6x32xbf16>
    %113 = vector.extract_strided_slice %9 {offsets = [88, 0], sizes = [8, 32], strides = [1, 1]} : vector<256x32xbf16> to vector<8x32xbf16>
    %114 = vector.extract_strided_slice %113 {offsets = [0, 0], sizes = [6, 32], strides = [1, 1]} : vector<8x32xbf16> to vector<6x32xbf16>
    %115 = vector.extract_strided_slice %113 {offsets = [1, 0], sizes = [6, 32], strides = [1, 1]} : vector<8x32xbf16> to vector<6x32xbf16>
    %116 = vector.extract_strided_slice %9 {offsets = [96, 0], sizes = [8, 32], strides = [1, 1]} : vector<256x32xbf16> to vector<8x32xbf16>
    %117 = vector.extract_strided_slice %116 {offsets = [0, 0], sizes = [6, 32], strides = [1, 1]} : vector<8x32xbf16> to vector<6x32xbf16>
    %118 = vector.extract_strided_slice %116 {offsets = [1, 0], sizes = [6, 32], strides = [1, 1]} : vector<8x32xbf16> to vector<6x32xbf16>
    %119 = vector.extract_strided_slice %9 {offsets = [152, 0], sizes = [8, 32], strides = [1, 1]} : vector<256x32xbf16> to vector<8x32xbf16>
    %120 = vector.extract_strided_slice %119 {offsets = [0, 0], sizes = [6, 32], strides = [1, 1]} : vector<8x32xbf16> to vector<6x32xbf16>
    %121 = vector.extract_strided_slice %119 {offsets = [1, 0], sizes = [6, 32], strides = [1, 1]} : vector<8x32xbf16> to vector<6x32xbf16>
    %122 = vector.extract_strided_slice %9 {offsets = [160, 0], sizes = [8, 32], strides = [1, 1]} : vector<256x32xbf16> to vector<8x32xbf16>
    %123 = vector.extract_strided_slice %122 {offsets = [0, 0], sizes = [6, 32], strides = [1, 1]} : vector<8x32xbf16> to vector<6x32xbf16>
    %124 = vector.extract_strided_slice %122 {offsets = [1, 0], sizes = [6, 32], strides = [1, 1]} : vector<8x32xbf16> to vector<6x32xbf16>
    %125 = vector.extract_strided_slice %9 {offsets = [216, 0], sizes = [8, 32], strides = [1, 1]} : vector<256x32xbf16> to vector<8x32xbf16>
    %126 = vector.extract_strided_slice %125 {offsets = [0, 0], sizes = [6, 32], strides = [1, 1]} : vector<8x32xbf16> to vector<6x32xbf16>
    %127 = vector.extract_strided_slice %125 {offsets = [1, 0], sizes = [6, 32], strides = [1, 1]} : vector<8x32xbf16> to vector<6x32xbf16>
    %128 = vector.extract_strided_slice %9 {offsets = [224, 0], sizes = [8, 32], strides = [1, 1]} : vector<256x32xbf16> to vector<8x32xbf16>
    %129 = vector.extract_strided_slice %128 {offsets = [0, 0], sizes = [6, 32], strides = [1, 1]} : vector<8x32xbf16> to vector<6x32xbf16>
    %130 = vector.extract_strided_slice %128 {offsets = [1, 0], sizes = [6, 32], strides = [1, 1]} : vector<8x32xbf16> to vector<6x32xbf16>
    %131 = tpu.concatenate %108, %109, %111, %112, %114, %115, %117, %118, %120, %121, %123, %124, %126, %127, %129, %130 in 1 : vector<6x32xbf16>, vector<6x32xbf16>, vector<6x32xbf16>, vector<6x32xbf16>, vector<6x32xbf16>, vector<6x32xbf16>, vector<6x32xbf16>, vector<6x32xbf16>, vector<6x32xbf16>, vector<6x32xbf16>, vector<6x32xbf16>, vector<6x32xbf16>, vector<6x32xbf16>, vector<6x32xbf16>, vector<6x32xbf16>, vector<6x32xbf16> -> vector<6x512xbf16>
    %cst_21 = arith.constant dense<0.000000e+00> : vector<6x64xf32>
    %132 = tpu.matmul %131, %10, %cst_21 {dimension_numbers = #tpu.dot_dimension_numbers<[1], [0], [0], [1], [0, 0, 1, 1], [], []>} : vector<6x512xbf16>, vector<512x64xbf16>, vector<6x64xf32> -> vector<6x64xf32>
    %c0_22 = arith.constant 0 : index
    %c0_23 = arith.constant 0 : index
    %133 = vector.load %arg5[%c0_22, %c0_23] : memref<1x64xf32, #tpu.memory_space<vmem>>, vector<1x64xf32>
    %134 = vector.broadcast %133 : vector<1x64xf32> to vector<6x64xf32>
    %135 = arith.addf %132, %134 : vector<6x64xf32>
    %cst_24 = arith.constant 0.000000e+00 : f32
    %136 = vector.broadcast %cst_24 : f32 to vector<6x64xf32>
    %137 = arith.maximumf %135, %136 : vector<6x64xf32>
    %138 = arith.truncf %137 : vector<6x64xf32> to vector<6x64xbf16>
    %139 = vector.extract_strided_slice %9 {offsets = [32, 0], sizes = [8, 32], strides = [1, 1]} : vector<256x32xbf16> to vector<8x32xbf16>
    %140 = vector.extract_strided_slice %139 {offsets = [0, 0], sizes = [6, 32], strides = [1, 1]} : vector<8x32xbf16> to vector<6x32xbf16>
    %141 = vector.extract_strided_slice %139 {offsets = [1, 0], sizes = [6, 32], strides = [1, 1]} : vector<8x32xbf16> to vector<6x32xbf16>
    %142 = vector.extract_strided_slice %9 {offsets = [40, 0], sizes = [8, 32], strides = [1, 1]} : vector<256x32xbf16> to vector<8x32xbf16>
    %143 = vector.extract_strided_slice %142 {offsets = [0, 0], sizes = [6, 32], strides = [1, 1]} : vector<8x32xbf16> to vector<6x32xbf16>
    %144 = vector.extract_strided_slice %142 {offsets = [1, 0], sizes = [6, 32], strides = [1, 1]} : vector<8x32xbf16> to vector<6x32xbf16>
    %145 = vector.extract_strided_slice %9 {offsets = [96, 0], sizes = [8, 32], strides = [1, 1]} : vector<256x32xbf16> to vector<8x32xbf16>
    %146 = vector.extract_strided_slice %145 {offsets = [0, 0], sizes = [6, 32], strides = [1, 1]} : vector<8x32xbf16> to vector<6x32xbf16>
    %147 = vector.extract_strided_slice %145 {offsets = [1, 0], sizes = [6, 32], strides = [1, 1]} : vector<8x32xbf16> to vector<6x32xbf16>
    %148 = vector.extract_strided_slice %9 {offsets = [104, 0], sizes = [8, 32], strides = [1, 1]} : vector<256x32xbf16> to vector<8x32xbf16>
    %149 = vector.extract_strided_slice %148 {offsets = [0, 0], sizes = [6, 32], strides = [1, 1]} : vector<8x32xbf16> to vector<6x32xbf16>
    %150 = vector.extract_strided_slice %148 {offsets = [1, 0], sizes = [6, 32], strides = [1, 1]} : vector<8x32xbf16> to vector<6x32xbf16>
    %151 = vector.extract_strided_slice %9 {offsets = [160, 0], sizes = [8, 32], strides = [1, 1]} : vector<256x32xbf16> to vector<8x32xbf16>
    %152 = vector.extract_strided_slice %151 {offsets = [0, 0], sizes = [6, 32], strides = [1, 1]} : vector<8x32xbf16> to vector<6x32xbf16>
    %153 = vector.extract_strided_slice %151 {offsets = [1, 0], sizes = [6, 32], strides = [1, 1]} : vector<8x32xbf16> to vector<6x32xbf16>
    %154 = vector.extract_strided_slice %9 {offsets = [168, 0], sizes = [8, 32], strides = [1, 1]} : vector<256x32xbf16> to vector<8x32xbf16>
    %155 = vector.extract_strided_slice %154 {offsets = [0, 0], sizes = [6, 32], strides = [1, 1]} : vector<8x32xbf16> to vector<6x32xbf16>
    %156 = vector.extract_strided_slice %154 {offsets = [1, 0], sizes = [6, 32], strides = [1, 1]} : vector<8x32xbf16> to vector<6x32xbf16>
    %157 = vector.extract_strided_slice %9 {offsets = [224, 0], sizes = [8, 32], strides = [1, 1]} : vector<256x32xbf16> to vector<8x32xbf16>
    %158 = vector.extract_strided_slice %157 {offsets = [0, 0], sizes = [6, 32], strides = [1, 1]} : vector<8x32xbf16> to vector<6x32xbf16>
    %159 = vector.extract_strided_slice %157 {offsets = [1, 0], sizes = [6, 32], strides = [1, 1]} : vector<8x32xbf16> to vector<6x32xbf16>
    %160 = vector.extract_strided_slice %9 {offsets = [232, 0], sizes = [8, 32], strides = [1, 1]} : vector<256x32xbf16> to vector<8x32xbf16>
    %161 = vector.extract_strided_slice %160 {offsets = [0, 0], sizes = [6, 32], strides = [1, 1]} : vector<8x32xbf16> to vector<6x32xbf16>
    %162 = vector.extract_strided_slice %160 {offsets = [1, 0], sizes = [6, 32], strides = [1, 1]} : vector<8x32xbf16> to vector<6x32xbf16>
    %163 = tpu.concatenate %140, %141, %143, %144, %146, %147, %149, %150, %152, %153, %155, %156, %158, %159, %161, %162 in 1 : vector<6x32xbf16>, vector<6x32xbf16>, vector<6x32xbf16>, vector<6x32xbf16>, vector<6x32xbf16>, vector<6x32xbf16>, vector<6x32xbf16>, vector<6x32xbf16>, vector<6x32xbf16>, vector<6x32xbf16>, vector<6x32xbf16>, vector<6x32xbf16>, vector<6x32xbf16>, vector<6x32xbf16>, vector<6x32xbf16>, vector<6x32xbf16> -> vector<6x512xbf16>
    %cst_25 = arith.constant dense<0.000000e+00> : vector<6x64xf32>
    %164 = tpu.matmul %163, %10, %cst_25 {dimension_numbers = #tpu.dot_dimension_numbers<[1], [0], [0], [1], [0, 0, 1, 1], [], []>} : vector<6x512xbf16>, vector<512x64xbf16>, vector<6x64xf32> -> vector<6x64xf32>
    %c0_26 = arith.constant 0 : index
    %c0_27 = arith.constant 0 : index
    %165 = vector.load %arg5[%c0_26, %c0_27] : memref<1x64xf32, #tpu.memory_space<vmem>>, vector<1x64xf32>
    %166 = vector.broadcast %165 : vector<1x64xf32> to vector<6x64xf32>
    %167 = arith.addf %164, %166 : vector<6x64xf32>
    %cst_28 = arith.constant 0.000000e+00 : f32
    %168 = vector.broadcast %cst_28 : f32 to vector<6x64xf32>
    %169 = arith.maximumf %167, %168 : vector<6x64xf32>
    %170 = arith.truncf %169 : vector<6x64xf32> to vector<6x64xbf16>
    %171 = vector.extract_strided_slice %9 {offsets = [40, 0], sizes = [8, 32], strides = [1, 1]} : vector<256x32xbf16> to vector<8x32xbf16>
    %172 = vector.extract_strided_slice %171 {offsets = [0, 0], sizes = [6, 32], strides = [1, 1]} : vector<8x32xbf16> to vector<6x32xbf16>
    %173 = vector.extract_strided_slice %171 {offsets = [1, 0], sizes = [6, 32], strides = [1, 1]} : vector<8x32xbf16> to vector<6x32xbf16>
    %174 = vector.extract_strided_slice %9 {offsets = [48, 0], sizes = [8, 32], strides = [1, 1]} : vector<256x32xbf16> to vector<8x32xbf16>
    %175 = vector.extract_strided_slice %174 {offsets = [0, 0], sizes = [6, 32], strides = [1, 1]} : vector<8x32xbf16> to vector<6x32xbf16>
    %176 = vector.extract_strided_slice %174 {offsets = [1, 0], sizes = [6, 32], strides = [1, 1]} : vector<8x32xbf16> to vector<6x32xbf16>
    %177 = vector.extract_strided_slice %9 {offsets = [104, 0], sizes = [8, 32], strides = [1, 1]} : vector<256x32xbf16> to vector<8x32xbf16>
    %178 = vector.extract_strided_slice %177 {offsets = [0, 0], sizes = [6, 32], strides = [1, 1]} : vector<8x32xbf16> to vector<6x32xbf16>
    %179 = vector.extract_strided_slice %177 {offsets = [1, 0], sizes = [6, 32], strides = [1, 1]} : vector<8x32xbf16> to vector<6x32xbf16>
    %180 = vector.extract_strided_slice %9 {offsets = [112, 0], sizes = [8, 32], strides = [1, 1]} : vector<256x32xbf16> to vector<8x32xbf16>
    %181 = vector.extract_strided_slice %180 {offsets = [0, 0], sizes = [6, 32], strides = [1, 1]} : vector<8x32xbf16> to vector<6x32xbf16>
    %182 = vector.extract_strided_slice %180 {offsets = [1, 0], sizes = [6, 32], strides = [1, 1]} : vector<8x32xbf16> to vector<6x32xbf16>
    %183 = vector.extract_strided_slice %9 {offsets = [168, 0], sizes = [8, 32], strides = [1, 1]} : vector<256x32xbf16> to vector<8x32xbf16>
    %184 = vector.extract_strided_slice %183 {offsets = [0, 0], sizes = [6, 32], strides = [1, 1]} : vector<8x32xbf16> to vector<6x32xbf16>
    %185 = vector.extract_strided_slice %183 {offsets = [1, 0], sizes = [6, 32], strides = [1, 1]} : vector<8x32xbf16> to vector<6x32xbf16>
    %186 = vector.extract_strided_slice %9 {offsets = [176, 0], sizes = [8, 32], strides = [1, 1]} : vector<256x32xbf16> to vector<8x32xbf16>
    %187 = vector.extract_strided_slice %186 {offsets = [0, 0], sizes = [6, 32], strides = [1, 1]} : vector<8x32xbf16> to vector<6x32xbf16>
    %188 = vector.extract_strided_slice %186 {offsets = [1, 0], sizes = [6, 32], strides = [1, 1]} : vector<8x32xbf16> to vector<6x32xbf16>
    %189 = vector.extract_strided_slice %9 {offsets = [232, 0], sizes = [8, 32], strides = [1, 1]} : vector<256x32xbf16> to vector<8x32xbf16>
    %190 = vector.extract_strided_slice %189 {offsets = [0, 0], sizes = [6, 32], strides = [1, 1]} : vector<8x32xbf16> to vector<6x32xbf16>
    %191 = vector.extract_strided_slice %189 {offsets = [1, 0], sizes = [6, 32], strides = [1, 1]} : vector<8x32xbf16> to vector<6x32xbf16>
    %192 = vector.extract_strided_slice %9 {offsets = [240, 0], sizes = [8, 32], strides = [1, 1]} : vector<256x32xbf16> to vector<8x32xbf16>
    %193 = vector.extract_strided_slice %192 {offsets = [0, 0], sizes = [6, 32], strides = [1, 1]} : vector<8x32xbf16> to vector<6x32xbf16>
    %194 = vector.extract_strided_slice %192 {offsets = [1, 0], sizes = [6, 32], strides = [1, 1]} : vector<8x32xbf16> to vector<6x32xbf16>
    %195 = tpu.concatenate %172, %173, %175, %176, %178, %179, %181, %182, %184, %185, %187, %188, %190, %191, %193, %194 in 1 : vector<6x32xbf16>, vector<6x32xbf16>, vector<6x32xbf16>, vector<6x32xbf16>, vector<6x32xbf16>, vector<6x32xbf16>, vector<6x32xbf16>, vector<6x32xbf16>, vector<6x32xbf16>, vector<6x32xbf16>, vector<6x32xbf16>, vector<6x32xbf16>, vector<6x32xbf16>, vector<6x32xbf16>, vector<6x32xbf16>, vector<6x32xbf16> -> vector<6x512xbf16>
    %cst_29 = arith.constant dense<0.000000e+00> : vector<6x64xf32>
    %196 = tpu.matmul %195, %10, %cst_29 {dimension_numbers = #tpu.dot_dimension_numbers<[1], [0], [0], [1], [0, 0, 1, 1], [], []>} : vector<6x512xbf16>, vector<512x64xbf16>, vector<6x64xf32> -> vector<6x64xf32>
    %c0_30 = arith.constant 0 : index
    %c0_31 = arith.constant 0 : index
    %197 = vector.load %arg5[%c0_30, %c0_31] : memref<1x64xf32, #tpu.memory_space<vmem>>, vector<1x64xf32>
    %198 = vector.broadcast %197 : vector<1x64xf32> to vector<6x64xf32>
    %199 = arith.addf %196, %198 : vector<6x64xf32>
    %cst_32 = arith.constant 0.000000e+00 : f32
    %200 = vector.broadcast %cst_32 : f32 to vector<6x64xf32>
    %201 = arith.maximumf %199, %200 : vector<6x64xf32>
    %202 = arith.truncf %201 : vector<6x64xf32> to vector<6x64xbf16>
    %c0_33 = arith.constant 0 : index
    %c0_34 = arith.constant 0 : index
    %203 = vector.load %arg6[%c0_33, %c0_34] : memref<576x64xbf16, #tpu.memory_space<vmem>>, vector<576x64xbf16>
    %204 = vector.extract_strided_slice %42 {offsets = [0, 0], sizes = [4, 64], strides = [1, 1]} : vector<6x64xbf16> to vector<4x64xbf16>
    %205 = vector.extract_strided_slice %42 {offsets = [1, 0], sizes = [4, 64], strides = [1, 1]} : vector<6x64xbf16> to vector<4x64xbf16>
    %206 = vector.extract_strided_slice %42 {offsets = [2, 0], sizes = [4, 64], strides = [1, 1]} : vector<6x64xbf16> to vector<4x64xbf16>
    %207 = vector.extract_strided_slice %74 {offsets = [0, 0], sizes = [4, 64], strides = [1, 1]} : vector<6x64xbf16> to vector<4x64xbf16>
    %208 = vector.extract_strided_slice %74 {offsets = [1, 0], sizes = [4, 64], strides = [1, 1]} : vector<6x64xbf16> to vector<4x64xbf16>
    %209 = vector.extract_strided_slice %74 {offsets = [2, 0], sizes = [4, 64], strides = [1, 1]} : vector<6x64xbf16> to vector<4x64xbf16>
    %210 = vector.extract_strided_slice %106 {offsets = [0, 0], sizes = [4, 64], strides = [1, 1]} : vector<6x64xbf16> to vector<4x64xbf16>
    %211 = vector.extract_strided_slice %106 {offsets = [1, 0], sizes = [4, 64], strides = [1, 1]} : vector<6x64xbf16> to vector<4x64xbf16>
    %212 = vector.extract_strided_slice %106 {offsets = [2, 0], sizes = [4, 64], strides = [1, 1]} : vector<6x64xbf16> to vector<4x64xbf16>
    %213 = tpu.concatenate %204, %205, %206, %207, %208, %209, %210, %211, %212 in 1 : vector<4x64xbf16>, vector<4x64xbf16>, vector<4x64xbf16>, vector<4x64xbf16>, vector<4x64xbf16>, vector<4x64xbf16>, vector<4x64xbf16>, vector<4x64xbf16>, vector<4x64xbf16> -> vector<4x576xbf16>
    %cst_35 = arith.constant dense<0.000000e+00> : vector<4x64xf32>
    %214 = tpu.matmul %213, %203, %cst_35 {dimension_numbers = #tpu.dot_dimension_numbers<[1], [0], [0], [1], [0, 0, 1, 1], [], []>} : vector<4x576xbf16>, vector<576x64xbf16>, vector<4x64xf32> -> vector<4x64xf32>
    %c0_36 = arith.constant 0 : index
    %c0_37 = arith.constant 0 : index
    %215 = vector.load %arg7[%c0_36, %c0_37] : memref<1x64xf32, #tpu.memory_space<vmem>>, vector<1x64xf32>
    %216 = vector.broadcast %215 : vector<1x64xf32> to vector<4x64xf32>
    %217 = arith.addf %214, %216 : vector<4x64xf32>
    %cst_38 = arith.constant 0.000000e+00 : f32
    %218 = vector.broadcast %cst_38 : f32 to vector<4x64xf32>
    %219 = arith.maximumf %217, %218 : vector<4x64xf32>
    %220 = arith.truncf %219 : vector<4x64xf32> to vector<4x64xbf16>
    %221 = vector.extract_strided_slice %74 {offsets = [0, 0], sizes = [4, 64], strides = [1, 1]} : vector<6x64xbf16> to vector<4x64xbf16>
    %222 = vector.extract_strided_slice %74 {offsets = [1, 0], sizes = [4, 64], strides = [1, 1]} : vector<6x64xbf16> to vector<4x64xbf16>
    %223 = vector.extract_strided_slice %74 {offsets = [2, 0], sizes = [4, 64], strides = [1, 1]} : vector<6x64xbf16> to vector<4x64xbf16>
    %224 = vector.extract_strided_slice %106 {offsets = [0, 0], sizes = [4, 64], strides = [1, 1]} : vector<6x64xbf16> to vector<4x64xbf16>
    %225 = vector.extract_strided_slice %106 {offsets = [1, 0], sizes = [4, 64], strides = [1, 1]} : vector<6x64xbf16> to vector<4x64xbf16>
    %226 = vector.extract_strided_slice %106 {offsets = [2, 0], sizes = [4, 64], strides = [1, 1]} : vector<6x64xbf16> to vector<4x64xbf16>
    %227 = vector.extract_strided_slice %138 {offsets = [0, 0], sizes = [4, 64], strides = [1, 1]} : vector<6x64xbf16> to vector<4x64xbf16>
    %228 = vector.extract_strided_slice %138 {offsets = [1, 0], sizes = [4, 64], strides = [1, 1]} : vector<6x64xbf16> to vector<4x64xbf16>
    %229 = vector.extract_strided_slice %138 {offsets = [2, 0], sizes = [4, 64], strides = [1, 1]} : vector<6x64xbf16> to vector<4x64xbf16>
    %230 = tpu.concatenate %221, %222, %223, %224, %225, %226, %227, %228, %229 in 1 : vector<4x64xbf16>, vector<4x64xbf16>, vector<4x64xbf16>, vector<4x64xbf16>, vector<4x64xbf16>, vector<4x64xbf16>, vector<4x64xbf16>, vector<4x64xbf16>, vector<4x64xbf16> -> vector<4x576xbf16>
    %cst_39 = arith.constant dense<0.000000e+00> : vector<4x64xf32>
    %231 = tpu.matmul %230, %203, %cst_39 {dimension_numbers = #tpu.dot_dimension_numbers<[1], [0], [0], [1], [0, 0, 1, 1], [], []>} : vector<4x576xbf16>, vector<576x64xbf16>, vector<4x64xf32> -> vector<4x64xf32>
    %c0_40 = arith.constant 0 : index
    %c0_41 = arith.constant 0 : index
    %232 = vector.load %arg7[%c0_40, %c0_41] : memref<1x64xf32, #tpu.memory_space<vmem>>, vector<1x64xf32>
    %233 = vector.broadcast %232 : vector<1x64xf32> to vector<4x64xf32>
    %234 = arith.addf %231, %233 : vector<4x64xf32>
    %cst_42 = arith.constant 0.000000e+00 : f32
    %235 = vector.broadcast %cst_42 : f32 to vector<4x64xf32>
    %236 = arith.maximumf %234, %235 : vector<4x64xf32>
    %237 = arith.truncf %236 : vector<4x64xf32> to vector<4x64xbf16>
    %238 = vector.extract_strided_slice %106 {offsets = [0, 0], sizes = [4, 64], strides = [1, 1]} : vector<6x64xbf16> to vector<4x64xbf16>
    %239 = vector.extract_strided_slice %106 {offsets = [1, 0], sizes = [4, 64], strides = [1, 1]} : vector<6x64xbf16> to vector<4x64xbf16>
    %240 = vector.extract_strided_slice %106 {offsets = [2, 0], sizes = [4, 64], strides = [1, 1]} : vector<6x64xbf16> to vector<4x64xbf16>
    %241 = vector.extract_strided_slice %138 {offsets = [0, 0], sizes = [4, 64], strides = [1, 1]} : vector<6x64xbf16> to vector<4x64xbf16>
    %242 = vector.extract_strided_slice %138 {offsets = [1, 0], sizes = [4, 64], strides = [1, 1]} : vector<6x64xbf16> to vector<4x64xbf16>
    %243 = vector.extract_strided_slice %138 {offsets = [2, 0], sizes = [4, 64], strides = [1, 1]} : vector<6x64xbf16> to vector<4x64xbf16>
    %244 = vector.extract_strided_slice %170 {offsets = [0, 0], sizes = [4, 64], strides = [1, 1]} : vector<6x64xbf16> to vector<4x64xbf16>
    %245 = vector.extract_strided_slice %170 {offsets = [1, 0], sizes = [4, 64], strides = [1, 1]} : vector<6x64xbf16> to vector<4x64xbf16>
    %246 = vector.extract_strided_slice %170 {offsets = [2, 0], sizes = [4, 64], strides = [1, 1]} : vector<6x64xbf16> to vector<4x64xbf16>
    %247 = tpu.concatenate %238, %239, %240, %241, %242, %243, %244, %245, %246 in 1 : vector<4x64xbf16>, vector<4x64xbf16>, vector<4x64xbf16>, vector<4x64xbf16>, vector<4x64xbf16>, vector<4x64xbf16>, vector<4x64xbf16>, vector<4x64xbf16>, vector<4x64xbf16> -> vector<4x576xbf16>
    %cst_43 = arith.constant dense<0.000000e+00> : vector<4x64xf32>
    %248 = tpu.matmul %247, %203, %cst_43 {dimension_numbers = #tpu.dot_dimension_numbers<[1], [0], [0], [1], [0, 0, 1, 1], [], []>} : vector<4x576xbf16>, vector<576x64xbf16>, vector<4x64xf32> -> vector<4x64xf32>
    %c0_44 = arith.constant 0 : index
    %c0_45 = arith.constant 0 : index
    %249 = vector.load %arg7[%c0_44, %c0_45] : memref<1x64xf32, #tpu.memory_space<vmem>>, vector<1x64xf32>
    %250 = vector.broadcast %249 : vector<1x64xf32> to vector<4x64xf32>
    %251 = arith.addf %248, %250 : vector<4x64xf32>
    %cst_46 = arith.constant 0.000000e+00 : f32
    %252 = vector.broadcast %cst_46 : f32 to vector<4x64xf32>
    %253 = arith.maximumf %251, %252 : vector<4x64xf32>
    %254 = arith.truncf %253 : vector<4x64xf32> to vector<4x64xbf16>
    %255 = vector.extract_strided_slice %138 {offsets = [0, 0], sizes = [4, 64], strides = [1, 1]} : vector<6x64xbf16> to vector<4x64xbf16>
    %256 = vector.extract_strided_slice %138 {offsets = [1, 0], sizes = [4, 64], strides = [1, 1]} : vector<6x64xbf16> to vector<4x64xbf16>
    %257 = vector.extract_strided_slice %138 {offsets = [2, 0], sizes = [4, 64], strides = [1, 1]} : vector<6x64xbf16> to vector<4x64xbf16>
    %258 = vector.extract_strided_slice %170 {offsets = [0, 0], sizes = [4, 64], strides = [1, 1]} : vector<6x64xbf16> to vector<4x64xbf16>
    %259 = vector.extract_strided_slice %170 {offsets = [1, 0], sizes = [4, 64], strides = [1, 1]} : vector<6x64xbf16> to vector<4x64xbf16>
    %260 = vector.extract_strided_slice %170 {offsets = [2, 0], sizes = [4, 64], strides = [1, 1]} : vector<6x64xbf16> to vector<4x64xbf16>
    %261 = vector.extract_strided_slice %202 {offsets = [0, 0], sizes = [4, 64], strides = [1, 1]} : vector<6x64xbf16> to vector<4x64xbf16>
    %262 = vector.extract_strided_slice %202 {offsets = [1, 0], sizes = [4, 64], strides = [1, 1]} : vector<6x64xbf16> to vector<4x64xbf16>
    %263 = vector.extract_strided_slice %202 {offsets = [2, 0], sizes = [4, 64], strides = [1, 1]} : vector<6x64xbf16> to vector<4x64xbf16>
    %264 = tpu.concatenate %255, %256, %257, %258, %259, %260, %261, %262, %263 in 1 : vector<4x64xbf16>, vector<4x64xbf16>, vector<4x64xbf16>, vector<4x64xbf16>, vector<4x64xbf16>, vector<4x64xbf16>, vector<4x64xbf16>, vector<4x64xbf16>, vector<4x64xbf16> -> vector<4x576xbf16>
    %cst_47 = arith.constant dense<0.000000e+00> : vector<4x64xf32>
    %265 = tpu.matmul %264, %203, %cst_47 {dimension_numbers = #tpu.dot_dimension_numbers<[1], [0], [0], [1], [0, 0, 1, 1], [], []>} : vector<4x576xbf16>, vector<576x64xbf16>, vector<4x64xf32> -> vector<4x64xf32>
    %c0_48 = arith.constant 0 : index
    %c0_49 = arith.constant 0 : index
    %266 = vector.load %arg7[%c0_48, %c0_49] : memref<1x64xf32, #tpu.memory_space<vmem>>, vector<1x64xf32>
    %267 = vector.broadcast %266 : vector<1x64xf32> to vector<4x64xf32>
    %268 = arith.addf %265, %267 : vector<4x64xf32>
    %cst_50 = arith.constant 0.000000e+00 : f32
    %269 = vector.broadcast %cst_50 : f32 to vector<4x64xf32>
    %270 = arith.maximumf %268, %269 : vector<4x64xf32>
    %271 = arith.truncf %270 : vector<4x64xf32> to vector<4x64xbf16>
    %c0_51 = arith.constant 0 : index
    %c0_52 = arith.constant 0 : index
    %272 = vector.load %arg8[%c0_51, %c0_52] : memref<1024x128xbf16, #tpu.memory_space<vmem>>, vector<1024x128xbf16>
    %cst_53 = arith.constant 0.000000e+00 : f32
    %273 = vector.broadcast %cst_53 : f32 to vector<1x128xf32>
    %274 = vector.extract_strided_slice %220 {offsets = [0, 0], sizes = [1, 64], strides = [1, 1]} : vector<4x64xbf16> to vector<1x64xbf16>
    %275 = vector.extract_strided_slice %272 {offsets = [0, 0], sizes = [64, 128], strides = [1, 1]} : vector<1024x128xbf16> to vector<64x128xbf16>
    %cst_54 = arith.constant dense<0.000000e+00> : vector<1x128xf32>
    %276 = tpu.matmul %274, %275, %cst_54 {dimension_numbers = #tpu.dot_dimension_numbers<[1], [0], [0], [1], [0, 0, 1, 1], [], []>} : vector<1x64xbf16>, vector<64x128xbf16>, vector<1x128xf32> -> vector<1x128xf32>
    %277 = arith.addf %273, %276 : vector<1x128xf32>
    %278 = vector.extract_strided_slice %220 {offsets = [1, 0], sizes = [1, 64], strides = [1, 1]} : vector<4x64xbf16> to vector<1x64xbf16>
    %279 = vector.extract_strided_slice %272 {offsets = [64, 0], sizes = [64, 128], strides = [1, 1]} : vector<1024x128xbf16> to vector<64x128xbf16>
    %cst_55 = arith.constant dense<0.000000e+00> : vector<1x128xf32>
    %280 = tpu.matmul %278, %279, %cst_55 {dimension_numbers = #tpu.dot_dimension_numbers<[1], [0], [0], [1], [0, 0, 1, 1], [], []>} : vector<1x64xbf16>, vector<64x128xbf16>, vector<1x128xf32> -> vector<1x128xf32>
    %281 = arith.addf %277, %280 : vector<1x128xf32>
    %282 = vector.extract_strided_slice %220 {offsets = [2, 0], sizes = [1, 64], strides = [1, 1]} : vector<4x64xbf16> to vector<1x64xbf16>
    %283 = vector.extract_strided_slice %272 {offsets = [128, 0], sizes = [64, 128], strides = [1, 1]} : vector<1024x128xbf16> to vector<64x128xbf16>
    %cst_56 = arith.constant dense<0.000000e+00> : vector<1x128xf32>
    %284 = tpu.matmul %282, %283, %cst_56 {dimension_numbers = #tpu.dot_dimension_numbers<[1], [0], [0], [1], [0, 0, 1, 1], [], []>} : vector<1x64xbf16>, vector<64x128xbf16>, vector<1x128xf32> -> vector<1x128xf32>
    %285 = arith.addf %281, %284 : vector<1x128xf32>
    %286 = vector.extract_strided_slice %220 {offsets = [3, 0], sizes = [1, 64], strides = [1, 1]} : vector<4x64xbf16> to vector<1x64xbf16>
    %287 = vector.extract_strided_slice %272 {offsets = [192, 0], sizes = [64, 128], strides = [1, 1]} : vector<1024x128xbf16> to vector<64x128xbf16>
    %cst_57 = arith.constant dense<0.000000e+00> : vector<1x128xf32>
    %288 = tpu.matmul %286, %287, %cst_57 {dimension_numbers = #tpu.dot_dimension_numbers<[1], [0], [0], [1], [0, 0, 1, 1], [], []>} : vector<1x64xbf16>, vector<64x128xbf16>, vector<1x128xf32> -> vector<1x128xf32>
    %289 = arith.addf %285, %288 : vector<1x128xf32>
    %290 = vector.extract_strided_slice %237 {offsets = [0, 0], sizes = [1, 64], strides = [1, 1]} : vector<4x64xbf16> to vector<1x64xbf16>
    %291 = vector.extract_strided_slice %272 {offsets = [256, 0], sizes = [64, 128], strides = [1, 1]} : vector<1024x128xbf16> to vector<64x128xbf16>
    %cst_58 = arith.constant dense<0.000000e+00> : vector<1x128xf32>
    %292 = tpu.matmul %290, %291, %cst_58 {dimension_numbers = #tpu.dot_dimension_numbers<[1], [0], [0], [1], [0, 0, 1, 1], [], []>} : vector<1x64xbf16>, vector<64x128xbf16>, vector<1x128xf32> -> vector<1x128xf32>
    %293 = arith.addf %289, %292 : vector<1x128xf32>
    %294 = vector.extract_strided_slice %237 {offsets = [1, 0], sizes = [1, 64], strides = [1, 1]} : vector<4x64xbf16> to vector<1x64xbf16>
    %295 = vector.extract_strided_slice %272 {offsets = [320, 0], sizes = [64, 128], strides = [1, 1]} : vector<1024x128xbf16> to vector<64x128xbf16>
    %cst_59 = arith.constant dense<0.000000e+00> : vector<1x128xf32>
    %296 = tpu.matmul %294, %295, %cst_59 {dimension_numbers = #tpu.dot_dimension_numbers<[1], [0], [0], [1], [0, 0, 1, 1], [], []>} : vector<1x64xbf16>, vector<64x128xbf16>, vector<1x128xf32> -> vector<1x128xf32>
    %297 = arith.addf %293, %296 : vector<1x128xf32>
    %298 = vector.extract_strided_slice %237 {offsets = [2, 0], sizes = [1, 64], strides = [1, 1]} : vector<4x64xbf16> to vector<1x64xbf16>
    %299 = vector.extract_strided_slice %272 {offsets = [384, 0], sizes = [64, 128], strides = [1, 1]} : vector<1024x128xbf16> to vector<64x128xbf16>
    %cst_60 = arith.constant dense<0.000000e+00> : vector<1x128xf32>
    %300 = tpu.matmul %298, %299, %cst_60 {dimension_numbers = #tpu.dot_dimension_numbers<[1], [0], [0], [1], [0, 0, 1, 1], [], []>} : vector<1x64xbf16>, vector<64x128xbf16>, vector<1x128xf32> -> vector<1x128xf32>
    %301 = arith.addf %297, %300 : vector<1x128xf32>
    %302 = vector.extract_strided_slice %237 {offsets = [3, 0], sizes = [1, 64], strides = [1, 1]} : vector<4x64xbf16> to vector<1x64xbf16>
    %303 = vector.extract_strided_slice %272 {offsets = [448, 0], sizes = [64, 128], strides = [1, 1]} : vector<1024x128xbf16> to vector<64x128xbf16>
    %cst_61 = arith.constant dense<0.000000e+00> : vector<1x128xf32>
    %304 = tpu.matmul %302, %303, %cst_61 {dimension_numbers = #tpu.dot_dimension_numbers<[1], [0], [0], [1], [0, 0, 1, 1], [], []>} : vector<1x64xbf16>, vector<64x128xbf16>, vector<1x128xf32> -> vector<1x128xf32>
    %305 = arith.addf %301, %304 : vector<1x128xf32>
    %306 = vector.extract_strided_slice %254 {offsets = [0, 0], sizes = [1, 64], strides = [1, 1]} : vector<4x64xbf16> to vector<1x64xbf16>
    %307 = vector.extract_strided_slice %272 {offsets = [512, 0], sizes = [64, 128], strides = [1, 1]} : vector<1024x128xbf16> to vector<64x128xbf16>
    %cst_62 = arith.constant dense<0.000000e+00> : vector<1x128xf32>
    %308 = tpu.matmul %306, %307, %cst_62 {dimension_numbers = #tpu.dot_dimension_numbers<[1], [0], [0], [1], [0, 0, 1, 1], [], []>} : vector<1x64xbf16>, vector<64x128xbf16>, vector<1x128xf32> -> vector<1x128xf32>
    %309 = arith.addf %305, %308 : vector<1x128xf32>
    %310 = vector.extract_strided_slice %254 {offsets = [1, 0], sizes = [1, 64], strides = [1, 1]} : vector<4x64xbf16> to vector<1x64xbf16>
    %311 = vector.extract_strided_slice %272 {offsets = [576, 0], sizes = [64, 128], strides = [1, 1]} : vector<1024x128xbf16> to vector<64x128xbf16>
    %cst_63 = arith.constant dense<0.000000e+00> : vector<1x128xf32>
    %312 = tpu.matmul %310, %311, %cst_63 {dimension_numbers = #tpu.dot_dimension_numbers<[1], [0], [0], [1], [0, 0, 1, 1], [], []>} : vector<1x64xbf16>, vector<64x128xbf16>, vector<1x128xf32> -> vector<1x128xf32>
    %313 = arith.addf %309, %312 : vector<1x128xf32>
    %314 = vector.extract_strided_slice %254 {offsets = [2, 0], sizes = [1, 64], strides = [1, 1]} : vector<4x64xbf16> to vector<1x64xbf16>
    %315 = vector.extract_strided_slice %272 {offsets = [640, 0], sizes = [64, 128], strides = [1, 1]} : vector<1024x128xbf16> to vector<64x128xbf16>
    %cst_64 = arith.constant dense<0.000000e+00> : vector<1x128xf32>
    %316 = tpu.matmul %314, %315, %cst_64 {dimension_numbers = #tpu.dot_dimension_numbers<[1], [0], [0], [1], [0, 0, 1, 1], [], []>} : vector<1x64xbf16>, vector<64x128xbf16>, vector<1x128xf32> -> vector<1x128xf32>
    %317 = arith.addf %313, %316 : vector<1x128xf32>
    %318 = vector.extract_strided_slice %254 {offsets = [3, 0], sizes = [1, 64], strides = [1, 1]} : vector<4x64xbf16> to vector<1x64xbf16>
    %319 = vector.extract_strided_slice %272 {offsets = [704, 0], sizes = [64, 128], strides = [1, 1]} : vector<1024x128xbf16> to vector<64x128xbf16>
    %cst_65 = arith.constant dense<0.000000e+00> : vector<1x128xf32>
    %320 = tpu.matmul %318, %319, %cst_65 {dimension_numbers = #tpu.dot_dimension_numbers<[1], [0], [0], [1], [0, 0, 1, 1], [], []>} : vector<1x64xbf16>, vector<64x128xbf16>, vector<1x128xf32> -> vector<1x128xf32>
    %321 = arith.addf %317, %320 : vector<1x128xf32>
    %322 = vector.extract_strided_slice %271 {offsets = [0, 0], sizes = [1, 64], strides = [1, 1]} : vector<4x64xbf16> to vector<1x64xbf16>
    %323 = vector.extract_strided_slice %272 {offsets = [768, 0], sizes = [64, 128], strides = [1, 1]} : vector<1024x128xbf16> to vector<64x128xbf16>
    %cst_66 = arith.constant dense<0.000000e+00> : vector<1x128xf32>
    %324 = tpu.matmul %322, %323, %cst_66 {dimension_numbers = #tpu.dot_dimension_numbers<[1], [0], [0], [1], [0, 0, 1, 1], [], []>} : vector<1x64xbf16>, vector<64x128xbf16>, vector<1x128xf32> -> vector<1x128xf32>
    %325 = arith.addf %321, %324 : vector<1x128xf32>
    %326 = vector.extract_strided_slice %271 {offsets = [1, 0], sizes = [1, 64], strides = [1, 1]} : vector<4x64xbf16> to vector<1x64xbf16>
    %327 = vector.extract_strided_slice %272 {offsets = [832, 0], sizes = [64, 128], strides = [1, 1]} : vector<1024x128xbf16> to vector<64x128xbf16>
    %cst_67 = arith.constant dense<0.000000e+00> : vector<1x128xf32>
    %328 = tpu.matmul %326, %327, %cst_67 {dimension_numbers = #tpu.dot_dimension_numbers<[1], [0], [0], [1], [0, 0, 1, 1], [], []>} : vector<1x64xbf16>, vector<64x128xbf16>, vector<1x128xf32> -> vector<1x128xf32>
    %329 = arith.addf %325, %328 : vector<1x128xf32>
    %330 = vector.extract_strided_slice %271 {offsets = [2, 0], sizes = [1, 64], strides = [1, 1]} : vector<4x64xbf16> to vector<1x64xbf16>
    %331 = vector.extract_strided_slice %272 {offsets = [896, 0], sizes = [64, 128], strides = [1, 1]} : vector<1024x128xbf16> to vector<64x128xbf16>
    %cst_68 = arith.constant dense<0.000000e+00> : vector<1x128xf32>
    %332 = tpu.matmul %330, %331, %cst_68 {dimension_numbers = #tpu.dot_dimension_numbers<[1], [0], [0], [1], [0, 0, 1, 1], [], []>} : vector<1x64xbf16>, vector<64x128xbf16>, vector<1x128xf32> -> vector<1x128xf32>
    %333 = arith.addf %329, %332 : vector<1x128xf32>
    %334 = vector.extract_strided_slice %271 {offsets = [3, 0], sizes = [1, 64], strides = [1, 1]} : vector<4x64xbf16> to vector<1x64xbf16>
    %335 = vector.extract_strided_slice %272 {offsets = [960, 0], sizes = [64, 128], strides = [1, 1]} : vector<1024x128xbf16> to vector<64x128xbf16>
    %cst_69 = arith.constant dense<0.000000e+00> : vector<1x128xf32>
    %336 = tpu.matmul %334, %335, %cst_69 {dimension_numbers = #tpu.dot_dimension_numbers<[1], [0], [0], [1], [0, 0, 1, 1], [], []>} : vector<1x64xbf16>, vector<64x128xbf16>, vector<1x128xf32> -> vector<1x128xf32>
    %337 = arith.addf %333, %336 : vector<1x128xf32>
    %c0_70 = arith.constant 0 : index
    %c0_71 = arith.constant 0 : index
    %338 = vector.load %arg9[%c0_70, %c0_71] : memref<1x128xf32, #tpu.memory_space<vmem>>, vector<1x128xf32>
    %339 = arith.addf %337, %338 : vector<1x128xf32>
    %cst_72 = arith.constant 0.000000e+00 : f32
    %340 = vector.broadcast %cst_72 : f32 to vector<1x128xf32>
    %341 = arith.maximumf %339, %340 : vector<1x128xf32>
    %342 = arith.truncf %341 : vector<1x128xf32> to vector<1x128xbf16>
    %c0_73 = arith.constant 0 : index
    %c0_74 = arith.constant 0 : index
    %343 = vector.load %arg10[%c0_73, %c0_74] : memref<128x128xbf16, #tpu.memory_space<vmem>>, vector<128x128xbf16>
    %cst_75 = arith.constant dense<0.000000e+00> : vector<1x128xf32>
    %344 = tpu.matmul %342, %343, %cst_75 {dimension_numbers = #tpu.dot_dimension_numbers<[1], [0], [0], [1], [0, 0, 1, 1], [], []>} : vector<1x128xbf16>, vector<128x128xbf16>, vector<1x128xf32> -> vector<1x128xf32>
    %c0_76 = arith.constant 0 : index
    %c0_77 = arith.constant 0 : index
    %345 = vector.load %arg11[%c0_76, %c0_77] : memref<1x128xf32, #tpu.memory_space<vmem>>, vector<1x128xf32>
    %346 = arith.addf %344, %345 : vector<1x128xf32>
    %cst_78 = arith.constant dense<0xFF800000> : vector<1xf32>
    %347 = vector.multi_reduction <maximumf>, %346, %cst_78 [1] : vector<1x128xf32> to vector<1xf32>
    %348 = vector.shape_cast %347 : vector<1xf32> to vector<1x1xf32>
    %349 = vector.broadcast %348 : vector<1x1xf32> to vector<1x128xf32>
    %350 = arith.subf %346, %349 : vector<1x128xf32>
    %351 = math.exp %350 : vector<1x128xf32>
    %cst_79 = arith.constant dense<0.000000e+00> : vector<1xf32>
    %352 = vector.multi_reduction <add>, %351, %cst_79 [1] : vector<1x128xf32> to vector<1xf32>
    %353 = vector.shape_cast %352 : vector<1xf32> to vector<1x1xf32>
    %354 = vector.broadcast %353 : vector<1x1xf32> to vector<1x128xf32>
    %355 = arith.divf %351, %354 : vector<1x128xf32>
    %c0_80 = arith.constant 0 : index
    %c0_81 = arith.constant 0 : index
    %c0_82 = arith.constant 0 : index
    %356 = vector.load %arg12[%c0_80, %c0_81, %c0_82] : memref<1x1x128xf32, #tpu.memory_space<vmem>>, vector<1x1x128xf32>
    %357 = vector.shape_cast %356 : vector<1x1x128xf32> to vector<1x128xf32>
    %358 = vector.shape_cast %355 : vector<1x128xf32> to vector<1x1x128xf32>
    tpu.vector_store %arg12[%c0_80, %c0_81, %c0_82], %358 {strides = array<i32>} : memref<1x1x128xf32, #tpu.memory_space<vmem>>, vector<1x1x128xf32>,
    return
  }
  func.func @transform_0(%arg0: i32) -> (i32, i32, i32) {
    %c0_i32 = arith.constant 0 : i32
    %c0_i32_0 = arith.constant 0 : i32
    %c0_i32_1 = arith.constant 0 : i32
    return %arg0, %c0_i32, %c0_i32_0 : i32, i32, i32
  }
  func.func @transform_1(%arg0: i32) -> (i32, i32) {
    %c0_i32 = arith.constant 0 : i32
    %c0_i32_0 = arith.constant 0 : i32
    %c0_i32_1 = arith.constant 0 : i32
    return %c0_i32, %c0_i32_0 : i32, i32
  }
  func.func @transform_2(%arg0: i32) -> (i32, i32) {
    %c0_i32 = arith.constant 0 : i32
    %c0_i32_0 = arith.constant 0 : i32
    %c0_i32_1 = arith.constant 0 : i32
    return %c0_i32, %c0_i32_0 : i32, i32
  }
  func.func @transform_3(%arg0: i32) -> (i32, i32) {
    %c0_i32 = arith.constant 0 : i32
    %c0_i32_0 = arith.constant 0 : i32
    %c0_i32_1 = arith.constant 0 : i32
    return %c0_i32, %c0_i32_0 : i32, i32
  }
  func.func @transform_4(%arg0: i32) -> (i32, i32) {
    %c0_i32 = arith.constant 0 : i32
    %c0_i32_0 = arith.constant 0 : i32
    %c0_i32_1 = arith.constant 0 : i32
    return %c0_i32, %c0_i32_0 : i32, i32
  }
  func.func @transform_5(%arg0: i32) -> (i32, i32) {
    %c0_i32 = arith.constant 0 : i32
    %c0_i32_0 = arith.constant 0 : i32
    %c0_i32_1 = arith.constant 0 : i32
    return %c0_i32, %c0_i32_0 : i32, i32
  }
  func.func @transform_6(%arg0: i32) -> (i32, i32) {
    %c0_i32 = arith.constant 0 : i32
    %c0_i32_0 = arith.constant 0 : i32
    %c0_i32_1 = arith.constant 0 : i32
    return %c0_i32, %c0_i32_0 : i32, i32
  }
  func.func @transform_7(%arg0: i32) -> (i32, i32) {
    %c0_i32 = arith.constant 0 : i32
    %c0_i32_0 = arith.constant 0 : i32
    %c0_i32_1 = arith.constant 0 : i32
    return %c0_i32, %c0_i32_0 : i32, i32
  }
  func.func @transform_8(%arg0: i32) -> (i32, i32) {
    %c0_i32 = arith.constant 0 : i32
    %c0_i32_0 = arith.constant 0 : i32
    %c0_i32_1 = arith.constant 0 : i32
    return %c0_i32, %c0_i32_0 : i32, i32
  }
  func.func @transform_9(%arg0: i32) -> (i32, i32) {
    %c0_i32 = arith.constant 0 : i32
    %c0_i32_0 = arith.constant 0 : i32
    %c0_i32_1 = arith.constant 0 : i32
    return %c0_i32, %c0_i32_0 : i32, i32
  }
  func.func @transform_10(%arg0: i32) -> (i32, i32) {
    %c0_i32 = arith.constant 0 : i32
    %c0_i32_0 = arith.constant 0 : i32
    %c0_i32_1 = arith.constant 0 : i32
    return %c0_i32, %c0_i32_0 : i32, i32
  }
  func.func @transform_11(%arg0: i32) -> (i32, i32, i32) {
    %c0_i32 = arith.constant 0 : i32
    %c0_i32_0 = arith.constant 0 : i32
    %c0_i32_1 = arith.constant 0 : i32
    return %arg0, %c0_i32, %c0_i32_0 : i32, i32, i32
  }
}

</mosaic_0001>

<llo_original>
// kernel: actor_forward.1
$region0: #{actor_forward.1}
  #allocation0 [shape = 'u32[]', space=smem, size = 0x4, offset = 0x4, fixed_abs, tag = 'smem constant byte address 0x4 - core index']
  #allocation1 [shape = 'u32[144,128]{1,0:T(1,128)}', space=vmem, size = 0x12000, scoped, tag = 'internal scratch']
  %s0 = inlined_call_operand.vmem [shape: bf16[2,256,192], index: 0, kind: input, shape index: {}]
  %s1 = inlined_call_operand.vmem [shape: bf16[192,32], index: 1, kind: input, shape index: {}]
  %s2 = inlined_call_operand.vmem [shape: f32[1,32], index: 2, kind: input, shape index: {}]
  %s3 = inlined_call_operand.vmem [shape: bf16[512,64], index: 3, kind: input, shape index: {}]
  %s4 = inlined_call_operand.vmem [shape: f32[1,64], index: 4, kind: input, shape index: {}]
  %s5 = inlined_call_operand.vmem [shape: bf16[576,64], index: 5, kind: input, shape index: {}]
  %s6 = inlined_call_operand.vmem [shape: f32[1,64], index: 6, kind: input, shape index: {}]
  %s7 = inlined_call_operand.vmem [shape: bf16[1024,128], index: 7, kind: input, shape index: {}]
  %s8 = inlined_call_operand.vmem [shape: f32[1,128], index: 8, kind: input, shape index: {}]
  %s9 = inlined_call_operand.vmem [shape: bf16[128,128], index: 9, kind: input, shape index: {}]
  %s10 = inlined_call_operand.vmem [shape: f32[1,128], index: 10, kind: input, shape index: {}]
  %s11 = inlined_call_operand.hbm [shape: f32[2,1,128], index: 11, kind: output, shape index: {}]
  %s12 = sld [smem:[#allocation0]]
  $region77: #{actor_forward.1} parent=0
    _
  %s14 = ssub.s32 1, %s12
  %s15 = scalar_select 0, %s14, %s12
  $region1: #{actor_forward.1} parent=0
    #allocation2 [shape = 'u8[1024]{0}', space=vmem, size = 0x400, scoped, tag = 'output window, operand 0']
    #allocation3 [shape = 's32[2]{0}', space=sflag, size = 0x8, scoped, tag = 'scoped memory for actor_forward.1']
    %16 = vsyncpa [#allocation3], 0
    %s17 = scalar_lea.sflag [#allocation3], 1
    %18 = vsyncpa %s17, 0
    loop: start=0, step=1, limit=4
    $region2: #{actor_forward.1} parent=1 // loop_pre_header
      _
    $region3: #{actor_forward.1} parent=1 // loop_header
      %s20 = sphi 0, %s24
      %p21 = scmp.ge.s32.totalorder %s20, 4
      %s30 = sphi 0, %s32
      %s33 = sphi 0, %s30
      %s34 = sphi 0, %s33
      %s50 = sphi 0, %s34
      %s54 = sphi 0, %s54
      %s56 = sphi 0, %s54
      %s57 = sphi 0, %s56
      %s71 = sphi 0, %s57
      %s75 = sphi 0, %s75
      %s77 = sphi 0, %s75
      %s78 = sphi 0, %s77
      %s92 = sphi 0, %s78
      %s96 = sphi 0, %s96
      %s98 = sphi 0, %s96
      %s99 = sphi 0, %s98
      %s113 = sphi 0, %s99
      %s117 = sphi 0, %s117
      %s119 = sphi 0, %s117
      %s120 = sphi 0, %s119
      %s134 = sphi 0, %s120
      %s138 = sphi 0, %s138
      %s140 = sphi 0, %s138
      %s141 = sphi 0, %s140
      %s155 = sphi 0, %s141
      %s159 = sphi 0, %s159
      %s161 = sphi 0, %s159
      %s162 = sphi 0, %s161
      %s176 = sphi 0, %s162
      %s180 = sphi 0, %s180
      %s182 = sphi 0, %s180
      %s183 = sphi 0, %s182
      %s197 = sphi 0, %s183
      %s201 = sphi 0, %s201
      %s203 = sphi 0, %s201
      %s204 = sphi 0, %s203
      %s218 = sphi 0, %s204
      %s222 = sphi 0, %s222
      %s224 = sphi 0, %s222
      %s225 = sphi 0, %s224
      %s239 = sphi 0, %s225
      %s243 = sphi 0, %s243
      %s245 = sphi 0, %s243
      %s246 = sphi 0, %s245
      %s260 = sphi 0, %s246
      %s266 = sphi 0, %s268
      %s269 = sphi 0, %s266
      %s270 = sphi 0, %s269
      %s286 = sphi 0, %s270
    $region4: #{actor_forward.1} parent=1 // loop_header_branch
      %23 = sbr.rel (%p21) target = $region8
    $region5: #{actor_forward.1} parent=1 // loop_body
      %s25 = ssub.s32 %s20, 1
      %s26 = ssub.s32 %s20, 2
      %s27 = sadd.s32 %s20, 1
      %s28 = ssub.s32 %s20, %s27
      %p29 = scmp.eq.s32.totalorder %s28, 0
      %s31 = sadd.s32 %s30, 1
      %s32 = scalar_select %p29, %s30, %s31
      %p35 = pneg %p29
      %p36 = scmp.eq.s32.totalorder %s20, 1
      %p37 = por %p35, %p36
      %p38 = scmp.ne.s32.totalorder %s30, %s33
      %p39 = scmp.eq.s32.totalorder %s20, 0
      %p40 = por %p38, %p39
      %p41 = scmp.ne.s32.totalorder %s30, %s33
      %p42 = scmp.eq.s32.totalorder %s25, 1
      %p43 = por %p41, %p42
      %p44 = scmp.ne.s32.totalorder %s33, %s34
      %p45 = scmp.eq.s32.totalorder %s25, 0
      %p46 = por %p44, %p45
      %p47 = scmp.ne.s32.totalorder %s33, %s34
      %p48 = scmp.eq.s32.totalorder %s26, 1
      %p49 = por %p47, %p48
      %p51 = scmp.ne.s32.totalorder %s34, %s50
      %p52 = scmp.eq.s32.totalorder %s26, 0
      %p53 = por %p51, %p52
      %s55 = sadd.s32 %s54, 1
      %p58 = scmp.eq.s32.totalorder %s20, 1
      %p59 = scmp.ne.s32.totalorder %s54, %s56
      %p60 = scmp.eq.s32.totalorder %s20, 0
      %p61 = por %p59, %p60
      %p62 = scmp.ne.s32.totalorder %s54, %s56
      %p63 = scmp.eq.s32.totalorder %s25, 1
      %p64 = por %p62, %p63
      %p65 = scmp.ne.s32.totalorder %s56, %s57
      %p66 = scmp.eq.s32.totalorder %s25, 0
      %p67 = por %p65, %p66
      %p68 = scmp.ne.s32.totalorder %s56, %s57
      %p69 = scmp.eq.s32.totalorder %s26, 1
      %p70 = por %p68, %p69
      %p72 = scmp.ne.s32.totalorder %s57, %s71
      %p73 = scmp.eq.s32.totalorder %s26, 0
      %p74 = por %p72, %p73
      %s76 = sadd.s32 %s75, 1
      %p79 = scmp.eq.s32.totalorder %s20, 1
      %p80 = scmp.ne.s32.totalorder %s75, %s77
      %p81 = scmp.eq.s32.totalorder %s20, 0
      %p82 = por %p80, %p81
      %p83 = scmp.ne.s32.totalorder %s75, %s77
      %p84 = scmp.eq.s32.totalorder %s25, 1
      %p85 = por %p83, %p84
      %p86 = scmp.ne.s32.totalorder %s77, %s78
      %p87 = scmp.eq.s32.totalorder %s25, 0
      %p88 = por %p86, %p87
      %p89 = scmp.ne.s32.totalorder %s77, %s78
      %p90 = scmp.eq.s32.totalorder %s26, 1
      %p91 = por %p89, %p90
      %p93 = scmp.ne.s32.totalorder %s78, %s92
      %p94 = scmp.eq.s32.totalorder %s26, 0
      %p95 = por %p93, %p94
      %s97 = sadd.s32 %s96, 1
      %p100 = scmp.eq.s32.totalorder %s20, 1
      %p101 = scmp.ne.s32.totalorder %s96, %s98
      %p102 = scmp.eq.s32.totalorder %s20, 0
      %p103 = por %p101, %p102
      %p104 = scmp.ne.s32.totalorder %s96, %s98
      %p105 = scmp.eq.s32.totalorder %s25, 1
      %p106 = por %p104, %p105
      %p107 = scmp.ne.s32.totalorder %s98, %s99
      %p108 = scmp.eq.s32.totalorder %s25, 0
      %p109 = por %p107, %p108
      %p110 = scmp.ne.s32.totalorder %s98, %s99
      %p111 = scmp.eq.s32.totalorder %s26, 1
      %p112 = por %p110, %p111
      %p114 = scmp.ne.s32.totalorder %s99, %s113
      %p115 = scmp.eq.s32.totalorder %s26, 0
      %p116 = por %p114, %p115
      %s118 = sadd.s32 %s117, 1
      %p121 = scmp.eq.s32.totalorder %s20, 1
      %p122 = scmp.ne.s32.totalorder %s117, %s119
      %p123 = scmp.eq.s32.totalorder %s20, 0
      %p124 = por %p122, %p123
      %p125 = scmp.ne.s32.totalorder %s117, %s119
      %p126 = scmp.eq.s32.totalorder %s25, 1
      %p127 = por %p125, %p126
      %p128 = scmp.ne.s32.totalorder %s119, %s120
      %p129 = scmp.eq.s32.totalorder %s25, 0
      %p130 = por %p128, %p129
      %p131 = scmp.ne.s32.totalorder %s119, %s120
      %p132 = scmp.eq.s32.totalorder %s26, 1
      %p133 = por %p131, %p132
      %p135 = scmp.ne.s32.totalorder %s120, %s134
      %p136 = scmp.eq.s32.totalorder %s26, 0
      %p137 = por %p135, %p136
      %s139 = sadd.s32 %s138, 1
      %p142 = scmp.eq.s32.totalorder %s20, 1
      %p143 = scmp.ne.s32.totalorder %s138, %s140
      %p144 = scmp.eq.s32.totalorder %s20, 0
      %p145 = por %p143, %p144
      %p146 = scmp.ne.s32.totalorder %s138, %s140
      %p147 = scmp.eq.s32.totalorder %s25, 1
      %p148 = por %p146, %p147
      %p149 = scmp.ne.s32.totalorder %s140, %s141
      %p150 = scmp.eq.s32.totalorder %s25, 0
      %p151 = por %p149, %p150
      %p152 = scmp.ne.s32.totalorder %s140, %s141
      %p153 = scmp.eq.s32.totalorder %s26, 1
      %p154 = por %p152, %p153
      %p156 = scmp.ne.s32.totalorder %s141, %s155
      %p157 = scmp.eq.s32.totalorder %s26, 0
      %p158 = por %p156, %p157
      %s160 = sadd.s32 %s159, 1
      %p163 = scmp.eq.s32.totalorder %s20, 1
      %p164 = scmp.ne.s32.totalorder %s159, %s161
      %p165 = scmp.eq.s32.totalorder %s20, 0
      %p166 = por %p164, %p165
      %p167 = scmp.ne.s32.totalorder %s159, %s161
      %p168 = scmp.eq.s32.totalorder %s25, 1
      %p169 = por %p167, %p168
      %p170 = scmp.ne.s32.totalorder %s161, %s162
      %p171 = scmp.eq.s32.totalorder %s25, 0
      %p172 = por %p170, %p171
      %p173 = scmp.ne.s32.totalorder %s161, %s162
      %p174 = scmp.eq.s32.totalorder %s26, 1
      %p175 = por %p173, %p174
      %p177 = scmp.ne.s32.totalorder %s162, %s176
      %p178 = scmp.eq.s32.totalorder %s26, 0
      %p179 = por %p177, %p178
      %s181 = sadd.s32 %s180, 1
      %p184 = scmp.eq.s32.totalorder %s20, 1
      %p185 = scmp.ne.s32.totalorder %s180, %s182
      %p186 = scmp.eq.s32.totalorder %s20, 0
      %p187 = por %p185, %p186
      %p188 = scmp.ne.s32.totalorder %s180, %s182
      %p189 = scmp.eq.s32.totalorder %s25, 1
      %p190 = por %p188, %p189
      %p191 = scmp.ne.s32.totalorder %s182, %s183
      %p192 = scmp.eq.s32.totalorder %s25, 0
      %p193 = por %p191, %p192
      %p194 = scmp.ne.s32.totalorder %s182, %s183
      %p195 = scmp.eq.s32.totalorder %s26, 1
      %p196 = por %p194, %p195
      %p198 = scmp.ne.s32.totalorder %s183, %s197
      %p199 = scmp.eq.s32.totalorder %s26, 0
      %p200 = por %p198, %p199
      %s202 = sadd.s32 %s201, 1
      %p205 = scmp.eq.s32.totalorder %s20, 1
      %p206 = scmp.ne.s32.totalorder %s201, %s203
      %p207 = scmp.eq.s32.totalorder %s20, 0
      %p208 = por %p206, %p207
      %p209 = scmp.ne.s32.totalorder %s201, %s203
      %p210 = scmp.eq.s32.totalorder %s25, 1
      %p211 = por %p209, %p210
      %p212 = scmp.ne.s32.totalorder %s203, %s204
      %p213 = scmp.eq.s32.totalorder %s25, 0
      %p214 = por %p212, %p213
      %p215 = scmp.ne.s32.totalorder %s203, %s204
      %p216 = scmp.eq.s32.totalorder %s26, 1
      %p217 = por %p215, %p216
      %p219 = scmp.ne.s32.totalorder %s204, %s218
      %p220 = scmp.eq.s32.totalorder %s26, 0
      %p221 = por %p219, %p220
      %s223 = sadd.s32 %s222, 1
      %p226 = scmp.eq.s32.totalorder %s20, 1
      %p227 = scmp.ne.s32.totalorder %s222, %s224
      %p228 = scmp.eq.s32.totalorder %s20, 0
      %p229 = por %p227, %p228
      %p230 = scmp.ne.s32.totalorder %s222, %s224
      %p231 = scmp.eq.s32.totalorder %s25, 1
      %p232 = por %p230, %p231
      %p233 = scmp.ne.s32.totalorder %s224, %s225
      %p234 = scmp.eq.s32.totalorder %s25, 0
      %p235 = por %p233, %p234
      %p236 = scmp.ne.s32.totalorder %s224, %s225
      %p237 = scmp.eq.s32.totalorder %s26, 1
      %p238 = por %p236, %p237
      %p240 = scmp.ne.s32.totalorder %s225, %s239
      %p241 = scmp.eq.s32.totalorder %s26, 0
      %p242 = por %p240, %p241
      %s244 = sadd.s32 %s243, 1
      %p247 = scmp.eq.s32.totalorder %s20, 1
      %p248 = scmp.ne.s32.totalorder %s243, %s245
      %p249 = scmp.eq.s32.totalorder %s20, 0
      %p250 = por %p248, %p249
      %p251 = scmp.ne.s32.totalorder %s243, %s245
      %p252 = scmp.eq.s32.totalorder %s25, 1
      %p253 = por %p251, %p252
      %p254 = scmp.ne.s32.totalorder %s245, %s246
      %p255 = scmp.eq.s32.totalorder %s25, 0
      %p256 = por %p254, %p255
      %p257 = scmp.ne.s32.totalorder %s245, %s246
      %p258 = scmp.eq.s32.totalorder %s26, 1
      %p259 = por %p257, %p258
      %p261 = scmp.ne.s32.totalorder %s246, %s260
      %p262 = scmp.eq.s32.totalorder %s26, 0
      %p263 = por %p261, %p262
      %s264 = ssub.s32 %s20, %s27
      %p265 = scmp.eq.s32.totalorder %s264, 0
      %s267 = sadd.s32 %s266, 1
      %s268 = scalar_select %p265, %s266, %s267
      %p271 = pneg %p265
      %p272 = scmp.eq.s32.totalorder %s20, 1
      %p273 = por %p271, %p272
      %p274 = scmp.ne.s32.totalorder %s266, %s269
      %p275 = scmp.eq.s32.totalorder %s20, 0
      %p276 = por %p274, %p275
      %p277 = scmp.ne.s32.totalorder %s266, %s269
      %p278 = scmp.eq.s32.totalorder %s25, 1
      %p279 = por %p277, %p278
      %p280 = scmp.ne.s32.totalorder %s269, %s270
      %p281 = scmp.eq.s32.totalorder %s25, 0
      %p282 = por %p280, %p281
      %p283 = scmp.ne.s32.totalorder %s269, %s270
      %p284 = scmp.eq.s32.totalorder %s26, 1
      %p285 = por %p283, %p284
      %p287 = scmp.ne.s32.totalorder %s270, %s286
      %p288 = scmp.eq.s32.totalorder %s26, 0
      %p289 = por %p287, %p288
      %p290 = scmp.le.s32.totalorder 1, %s20
      %p291 = scmp.lt.s32.totalorder %s20, 3
      %p292 = pnand %p290, %p291
      %p293 = pneg %p292
      // Predicated region
      $region9: #{actor_forward.1} parent=5 // pred_check
        _
      $region10: #{actor_forward.1} parent=5 // pred_check_branch
        %295 = sbr.rel (%p292) target = $region12
      $region11: #{actor_forward.1} parent=5 // pred_region
        %s296 = ssub.s32 %s20, 1
        // Predicated region
        $region13: #{actor_forward.1} parent=11 // pred_check
          %p297 = pneg %p67
        $region14: #{actor_forward.1} parent=11 // pred_check_branch
          %299 = sbr.rel (%p297) target = $region16
        $region15: #{actor_forward.1} parent=11 // pred_region
          _
        $region16: #{actor_forward.1} parent=11 // pred_fallthru
          _
        // Predicated region
        $region17: #{actor_forward.1} parent=11 // pred_check
          %p300 = pneg %p88
        $region18: #{actor_forward.1} parent=11 // pred_check_branch
          %302 = sbr.rel (%p300) target = $region20
        $region19: #{actor_forward.1} parent=11 // pred_region
          _
        $region20: #{actor_forward.1} parent=11 // pred_fallthru
          _
        // Predicated region
        $region21: #{actor_forward.1} parent=11 // pred_check
          %p303 = pneg %p109
        $region22: #{actor_forward.1} parent=11 // pred_check_branch
          %305 = sbr.rel (%p303) target = $region24
        $region23: #{actor_forward.1} parent=11 // pred_region
          _
        $region24: #{actor_forward.1} parent=11 // pred_fallthru
          _
        // Predicated region
        $region25: #{actor_forward.1} parent=11 // pred_check
          %p306 = pneg %p130
        $region26: #{actor_forward.1} parent=11 // pred_check_branch
          %308 = sbr.rel (%p306) target = $region28
        $region27: #{actor_forward.1} parent=11 // pred_region
          _
        $region28: #{actor_forward.1} parent=11 // pred_fallthru
          _
        // Predicated region
        $region29: #{actor_forward.1} parent=11 // pred_check
          %p309 = pneg %p151
        $region30: #{actor_forward.1} parent=11 // pred_check_branch
          %311 = sbr.rel (%p309) target = $region32
        $region31: #{actor_forward.1} parent=11 // pred_region
          _
        $region32: #{actor_forward.1} parent=11 // pred_fallthru
          _
        // Predicated region
        $region33: #{actor_forward.1} parent=11 // pred_check
          %p312 = pneg %p172
        $region34: #{actor_forward.1} parent=11 // pred_check_branch
          %314 = sbr.rel (%p312) target = $region36
        $region35: #{actor_forward.1} parent=11 // pred_region
          _
        $region36: #{actor_forward.1} parent=11 // pred_fallthru
          _
        // Predicated region
        $region37: #{actor_forward.1} parent=11 // pred_check
          %p315 = pneg %p193
        $region38: #{actor_forward.1} parent=11 // pred_check_branch
          %317 = sbr.rel (%p315) target = $region40
        $region39: #{actor_forward.1} parent=11 // pred_region
          _
        $region40: #{actor_forward.1} parent=11 // pred_fallthru
          _
        // Predicated region
        $region41: #{actor_forward.1} parent=11 // pred_check
          %p318 = pneg %p214
        $region42: #{actor_forward.1} parent=11 // pred_check_branch
          %320 = sbr.rel (%p318) target = $region44
        $region43: #{actor_forward.1} parent=11 // pred_region
          _
        $region44: #{actor_forward.1} parent=11 // pred_fallthru
          _
        // Predicated region
        $region45: #{actor_forward.1} parent=11 // pred_check
          %p321 = pneg %p235
        $region46: #{actor_forward.1} parent=11 // pred_check_branch
          %323 = sbr.rel (%p321) target = $region48
        $region47: #{actor_forward.1} parent=11 // pred_region
          _
        $region48: #{actor_forward.1} parent=11 // pred_fallthru
          _
        // Predicated region
        $region49: #{actor_forward.1} parent=11 // pred_check
          %p324 = pneg %p256
        $region50: #{actor_forward.1} parent=11 // pred_check_branch
          %326 = sbr.rel (%p324) target = $region52
        $region51: #{actor_forward.1} parent=11 // pred_region
          _
        $region52: #{actor_forward.1} parent=11 // pred_fallthru
          _
      $region12: #{actor_forward.1} parent=5 // pred_fallthru
        _
      %p327 = scmp.lt.s32.totalorder %s20, 2
      // Predicated region
      $region53: #{actor_forward.1} parent=5 // pred_check
        %p328 = pneg %p327
      $region54: #{actor_forward.1} parent=5 // pred_check_branch
        %330 = sbr.rel (%p328) target = $region56
      $region55: #{actor_forward.1} parent=5 // pred_region
        // Predicated region
        $region57: #{actor_forward.1} parent=55 // pred_check
          %p331 = pneg %p40
        $region58: #{actor_forward.1} parent=55 // pred_check_branch
          %333 = sbr.rel (%p331) target = $region60
        $region59: #{actor_forward.1} parent=55 // pred_region
          %p334 = scmp.lt.s32.totalorder %s20, 1
          %s335 = scalar_select %p334, %s20, 1
          %s336 = smul.addr %s335, 64
          %s337 = smul.addr %s336, 4
          %s338 = scalar_lea.vmem %s0, %s337
        $region60: #{actor_forward.1} parent=55 // pred_fallthru
          _
      $region56: #{actor_forward.1} parent=5 // pred_fallthru
        _
      %p339 = scmp.le.s32.totalorder 1, %s20
      %p340 = scmp.lt.s32.totalorder %s20, 3
      %p341 = pnand %p339, %p340
      %p342 = pneg %p341
      // Predicated region
      $region61: #{actor_forward.1} parent=5 // pred_check
        _
      $region62: #{actor_forward.1} parent=5 // pred_check_branch
        %344 = sbr.rel (%p341) target = $region64
      $region63: #{actor_forward.1} parent=5 // pred_region
        %s345 = ssub.s32 %s20, 1
        %p346 = scmp.lt.s32.totalorder %s25, 1
        %s347 = scalar_select %p346, %s25, 1
        %s348 = smul.addr %s347, 64
        %s349 = smul.addr %s348, 4
        %s350 = scalar_lea.vmem %s0, %s349
        %p351 = pneg %p46
        %p352 = pneg %p43
        %p353 = pneg %p67
        %p354 = pneg %p64
        %p355 = pneg %p88
        %p356 = pneg %p85
        %p357 = pneg %p109
        %p358 = pneg %p106
        %p359 = pneg %p130
        %p360 = pneg %p127
        %p361 = pneg %p151
        %p362 = pneg %p148
        %p363 = pneg %p172
        %p364 = pneg %p169
        %p365 = pneg %p193
        %p366 = pneg %p190
        %p367 = pneg %p214
        %p368 = pneg %p211
        %p369 = pneg %p235
        %p370 = pneg %p232
        %p371 = pneg %p256
        %p372 = pneg %p253
        %p373 = pneg %p282
        %p374 = pneg %p279
        %s375 = sand.u32 %s269, 1
        %s376 = scalar_lea.sflag [#allocation3], %s375
        %s377 = sand.u32 %s269, 1
        %s378 = scalar_lea.vmem [#allocation2], %s377
        %p379 = scmp.lt.s32.totalorder %s25, 1
        %s380 = scalar_select %p379, %s25, 1
        %s381 = smul.addr %s380, 64
        %s382 = smul.addr %s381, 4
        %s383 = scalar_lea.vmem %s0, %s382
        %v385 = vld [vmem:[%s383] sm:$0xff]
        %v386 = vld [vmem:[%s383 + $0x8] sm:$0xff]
        %v387 = vld [vmem:[%s383 + $0x10] sm:$0xff]
        %v388 = vld [vmem:[%s383 + $0x18] sm:$0xff]
        %v389 = vld [vmem:[%s383 + $0x20] sm:$0xff]
        %v390 = vld [vmem:[%s383 + $0x28] sm:$0xff]
        %v391 = vld [vmem:[%s383 + $0x30] sm:$0xff]
        %v392 = vld [vmem:[%s383 + $0x38] sm:$0xff]
        %v393 = vld [vmem:[%s383 + $0x40] sm:$0xff]
        %v394 = vld [vmem:[%s383 + $0x48] sm:$0xff]
        %v395 = vld [vmem:[%s383 + $0x50] sm:$0xff]
        %v396 = vld [vmem:[%s383 + $0x58] sm:$0xff]
        %v397 = vld [vmem:[%s383 + $0x60] sm:$0xff]
        %v398 = vld [vmem:[%s383 + $0x68] sm:$0xff]
        %v399 = vld [vmem:[%s383 + $0x70] sm:$0xff]
        %v400 = vld [vmem:[%s383 + $0x78] sm:$0xff]
        %v401 = vld [vmem:[%s383 + $0x80] sm:$0xff]
        %v402 = vld [vmem:[%s383 + $0x88] sm:$0xff]
        %v403 = vld [vmem:[%s383 + $0x90] sm:$0xff]
        %v404 = vld [vmem:[%s383 + $0x98] sm:$0xff]
        %v405 = vld [vmem:[%s383 + $0xa0] sm:$0xff]
        %v406 = vld [vmem:[%s383 + $0xa8] sm:$0xff]
        %v407 = vld [vmem:[%s383 + $0xb0] sm:$0xff]
        %v408 = vld [vmem:[%s383 + $0xb8] sm:$0xff]
        %v409 = vld [vmem:[%s383 + $0xc0] sm:$0xff]
        %v410 = vld [vmem:[%s383 + $0xc8] sm:$0xff]
        %v411 = vld [vmem:[%s383 + $0xd0] sm:$0xff]
        %v412 = vld [vmem:[%s383 + $0xd8] sm:$0xff]
        %v413 = vld [vmem:[%s383 + $0xe0] sm:$0xff]
        %v414 = vld [vmem:[%s383 + $0xe8] sm:$0xff]
        %v415 = vld [vmem:[%s383 + $0xf0] sm:$0xff]
        %v416 = vld [vmem:[%s383 + $0xf8] sm:$0xff]
        %v417 = vld [vmem:[%s1] sm:$0xf]
        %v418 = vld [vmem:[%s1 + $0x4] sm:$0xf]
        %v419 = vld [vmem:[%s1 + $0x8] sm:$0xf]
        %v420 = vld [vmem:[%s1 + $0xc] sm:$0xf]
        %v421 = vld [vmem:[%s1 + $0x10] sm:$0xf]
        %v422 = vld [vmem:[%s1 + $0x14] sm:$0xf]
        %v423 = vld [vmem:[%s1 + $0x18] sm:$0xf]
        %v424 = vld [vmem:[%s1 + $0x1c] sm:$0xf]
        %v425 = vld [vmem:[%s1 + $0x20] sm:$0xf]
        %v426 = vld [vmem:[%s1 + $0x24] sm:$0xf]
        %v427 = vld [vmem:[%s1 + $0x28] sm:$0xf]
        %v428 = vld [vmem:[%s1 + $0x2c] sm:$0xf]
        %v429 = vld [vmem:[%s1 + $0x30] sm:$0xf]
        %v430 = vld [vmem:[%s1 + $0x34] sm:$0xf]
        %v431 = vld [vmem:[%s1 + $0x38] sm:$0xf]
        %v432 = vld [vmem:[%s1 + $0x3c] sm:$0xf]
        %v433 = vld [vmem:[%s1 + $0x40] sm:$0xf]
        %v434 = vld [vmem:[%s1 + $0x44] sm:$0xf]
        %v435 = vld [vmem:[%s1 + $0x48] sm:$0xf]
        %v436 = vld [vmem:[%s1 + $0x4c] sm:$0xf]
        %v437 = vld [vmem:[%s1 + $0x50] sm:$0xf]
        %v438 = vld [vmem:[%s1 + $0x54] sm:$0xf]
        %v439 = vld [vmem:[%s1 + $0x58] sm:$0xf]
        %v440 = vld [vmem:[%s1 + $0x5c] sm:$0xf]
        %v441 = vld [vmem:[%s2] sm:$0x1]
        %v443 = vlaneseq
        %v444 = vshrl.u32 %v443, 7
        %v445 = vsub.s32 0, %v444
        %v446 = vrot.slane %v441, %v445
        %v480 = vunpack.c.l.b16 %v385
        %v481 = vunpack.c.h.b16 %v385
        %v482 = vunpack.c.l.b16 %v386
        %v483 = vunpack.c.h.b16 %v386
        %v484 = vunpack.c.l.b16 %v387
        %v485 = vunpack.c.h.b16 %v387
        %v486 = vunpack.c.l.b16 %v388
        %v487 = vunpack.c.h.b16 %v388
        %v488 = vunpack.c.l.b16 %v389
        %v489 = vunpack.c.h.b16 %v389
        %v490 = vunpack.c.l.b16 %v390
        %v491 = vunpack.c.h.b16 %v390
        %v492 = vunpack.c.l.b16 %v391
        %v493 = vunpack.c.h.b16 %v391
        %v494 = vunpack.c.l.b16 %v392
        %v495 = vunpack.c.h.b16 %v392
        %v496 = vunpack.c.l.b16 %v393
        %v497 = vunpack.c.h.b16 %v393
        %v498 = vunpack.c.l.b16 %v394
        %v499 = vunpack.c.h.b16 %v394
        %v500 = vunpack.c.l.b16 %v395
        %v501 = vunpack.c.h.b16 %v395
        %v502 = vunpack.c.l.b16 %v396
        %v503 = vunpack.c.h.b16 %v396
        %v504 = vunpack.c.l.b16 %v397
        %v505 = vunpack.c.h.b16 %v397
        %v506 = vunpack.c.l.b16 %v398
        %v507 = vunpack.c.h.b16 %v398
        %v508 = vunpack.c.l.b16 %v399
        %v509 = vunpack.c.h.b16 %v399
        %v510 = vunpack.c.l.b16 %v400
        %v511 = vunpack.c.h.b16 %v400
        %v512 = vunpack.c.l.b16 %v401
        %v513 = vunpack.c.h.b16 %v401
        %v514 = vunpack.c.l.b16 %v402
        %v515 = vunpack.c.h.b16 %v402
        %v516 = vunpack.c.l.b16 %v403
        %v517 = vunpack.c.h.b16 %v403
        %v518 = vunpack.c.l.b16 %v404
        %v519 = vunpack.c.h.b16 %v404
        %v520 = vunpack.c.l.b16 %v405
        %v521 = vunpack.c.h.b16 %v405
        %v522 = vunpack.c.l.b16 %v406
        %v523 = vunpack.c.h.b16 %v406
        %v524 = vunpack.c.l.b16 %v407
        %v525 = vunpack.c.h.b16 %v407
        %v526 = vunpack.c.l.b16 %v408
        %v527 = vunpack.c.h.b16 %v408
        %v528 = vunpack.c.l.b16 %v409
        %v529 = vunpack.c.h.b16 %v409
        %v530 = vunpack.c.l.b16 %v410
        %v531 = vunpack.c.h.b16 %v410
        %v532 = vunpack.c.l.b16 %v411
        %v533 = vunpack.c.h.b16 %v411
        %v534 = vunpack.c.l.b16 %v412
        %v535 = vunpack.c.h.b16 %v412
        %v536 = vunpack.c.l.b16 %v413
        %v537 = vunpack.c.h.b16 %v413
        %v538 = vunpack.c.l.b16 %v414
        %v539 = vunpack.c.h.b16 %v414
        %v540 = vunpack.c.l.b16 %v415
        %v541 = vunpack.c.h.b16 %v415
        %v542 = vunpack.c.l.b16 %v416
        %v543 = vunpack.c.h.b16 %v416
        %v544 = vpack.c.b16 %v482, %v480
        %v545 = vpack.c.b16 %v483, %v481
        %v546 = vpack.c.b16 %v486, %v484
        %v547 = vpack.c.b16 %v487, %v485
        %v548 = vpack.c.b16 %v490, %v488
        %v549 = vpack.c.b16 %v491, %v489
        %v550 = vpack.c.b16 %v494, %v492
        %v551 = vpack.c.b16 %v495, %v493
        %v552 = vpack.c.b16 %v498, %v496
        %v553 = vpack.c.b16 %v499, %v497
        %v554 = vpack.c.b16 %v502, %v500
        %v555 = vpack.c.b16 %v503, %v501
        %v556 = vpack.c.b16 %v506, %v504
        %v557 = vpack.c.b16 %v507, %v505
        %v558 = vpack.c.b16 %v510, %v508
        %v559 = vpack.c.b16 %v511, %v509
        %v560 = vpack.c.b16 %v514, %v512
        %v561 = vpack.c.b16 %v515, %v513
        %v562 = vpack.c.b16 %v518, %v516
        %v563 = vpack.c.b16 %v519, %v517
        %v564 = vpack.c.b16 %v522, %v520
        %v565 = vpack.c.b16 %v523, %v521
        %v566 = vpack.c.b16 %v526, %v524
        %v567 = vpack.c.b16 %v527, %v525
        %v568 = vpack.c.b16 %v530, %v528
        %v569 = vpack.c.b16 %v531, %v529
        %v570 = vpack.c.b16 %v534, %v532
        %v571 = vpack.c.b16 %v535, %v533
        %v572 = vpack.c.b16 %v538, %v536
        %v573 = vpack.c.b16 %v539, %v537
        %v574 = vpack.c.b16 %v542, %v540
        %v575 = vpack.c.b16 %v543, %v541
        %v616 = vunpack.c.l.b16 %v417
        %v617 = vunpack.c.l.b16 %v418
        %v618 = vunpack.c.l.b16 %v419
        %v619 = vunpack.c.l.b16 %v420
        %v620 = vunpack.c.l.b16 %v421
        %v621 = vunpack.c.l.b16 %v422
        %v622 = vunpack.c.l.b16 %v423
        %v623 = vunpack.c.l.b16 %v424
        %v624 = vunpack.c.l.b16 %v425
        %v625 = vunpack.c.l.b16 %v426
        %v626 = vunpack.c.l.b16 %v427
        %v627 = vunpack.c.l.b16 %v428
        %v628 = vunpack.c.l.b16 %v429
        %v629 = vunpack.c.l.b16 %v430
        %v630 = vunpack.c.l.b16 %v431
        %v631 = vunpack.c.l.b16 %v432
        %v632 = vunpack.c.l.b16 %v433
        %v633 = vunpack.c.l.b16 %v434
        %v634 = vunpack.c.l.b16 %v435
        %v635 = vunpack.c.l.b16 %v436
        %v636 = vunpack.c.l.b16 %v437
        %v637 = vunpack.c.l.b16 %v438
        %v638 = vunpack.c.l.b16 %v439
        %v639 = vunpack.c.l.b16 %v440
        %v640 = vpack.c.b16 %v617, %v616
        %v641 = vpack.c.b16 %v619, %v618
        %v642 = vpack.c.b16 %v621, %v620
        %v643 = vpack.c.b16 %v623, %v622
        %v644 = vpack.c.b16 %v625, %v624
        %v645 = vpack.c.b16 %v627, %v626
        %v646 = vpack.c.b16 %v629, %v628
        %v647 = vpack.c.b16 %v631, %v630
        %v648 = vpack.c.b16 %v633, %v632
        %v649 = vpack.c.b16 %v635, %v634
        %v650 = vpack.c.b16 %v637, %v636
        %v651 = vpack.c.b16 %v639, %v638
        %vm664 = vcmask 523264
        %v666 = vsel %vm664, %v545, 0
        %v669 = vsel %vm664, %v547, 0
        %v672 = vsel %vm664, %v549, 0
        %v675 = vsel %vm664, %v551, 0
        %v678 = vsel %vm664, %v553, 0
        %v681 = vsel %vm664, %v555, 0
        %v684 = vsel %vm664, %v557, 0
        %v687 = vsel %vm664, %v559, 0
        %v690 = vsel %vm664, %v561, 0
        %v693 = vsel %vm664, %v563, 0
        %v696 = vsel %vm664, %v565, 0
        %v699 = vsel %vm664, %v567, 0
        %v702 = vsel %vm664, %v569, 0
        %v705 = vsel %vm664, %v571, 0
        %v708 = vsel %vm664, %v573, 0
        %v711 = vsel %vm664, %v575, 0
        %713 = vmatprep.subr.bf16.mxu0 0
        %714 = vmatpush1.bf16.msra.mxu0 %v647
        %715 = vmatprep.subr.bf16.mxu0 0
        %716 = vmatpush1.bf16.msra.mxu0 %v646
        %717 = vmatprep.subr.bf16.mxu0 0
        %718 = vmatpush1.bf16.msra.mxu0 %v645
        %719 = vmatprep.subr.bf16.mxu0 0
        %720 = vmatpush1.bf16.msra.mxu0 %v644
        %721 = vmatprep.subr.bf16.mxu0 0
        %722 = vmatpush1.bf16.msra.mxu0 %v643
        %723 = vmatprep.subr.bf16.mxu0 0
        %724 = vmatpush1.bf16.msra.mxu0 %v642
        %725 = vmatprep.subr.bf16.mxu0 0
        %726 = vmatpush1.bf16.msra.mxu0 %v641
        %727 = vmatprep.subr.bf16.mxu0 0
        %728 = vmatpush1.bf16.msra.mxu0 %v640
        %729 = vmatprep.subr.bf16.mxu0 0
        %730 = vmatpush2.bf16.msra.mxu0 0
        %731 = vmatprep.subr.bf16.mxu0 0
        %732 = vmatpush2.bf16.msra.mxu0 0
        %733 = vmatprep.subr.bf16.mxu0 0
        %734 = vmatpush2.bf16.msra.mxu0 0
        %735 = vmatprep.subr.bf16.mxu0 0
        %736 = vmatpush2.bf16.msra.mxu0 0
        %737 = vmatprep.subr.bf16.mxu0 0
        %738 = vmatpush2.bf16.msra.mxu0 %v651
        %739 = vmatprep.subr.bf16.mxu0 0
        %740 = vmatpush2.bf16.msra.mxu0 %v650
        %741 = vmatprep.subr.bf16.mxu0 0
        %742 = vmatpush2.bf16.msra.mxu0 %v649
        %743 = vmatprep.subr.bf16.mxu0 0
        %744 = vmatpush2.bf16.msra.mxu0 %v648
        %745 = vmatprep.mubr.bf16.mxu0 %v666
        %746 = vmatmul.mubr.bf16.gmra.mxu0 %v544
        %v747 = vpop.f32.mrf.mxu0
        %v748 = vadd.f32 %v446, %v747
        %v749 = vpop.f32.mrf.mxu0
        %v750 = vpop.f32.mrf.mxu0
        %v751 = vadd.f32 %v446, %v750
        %v752 = vpop.f32.mrf.mxu0
        %753 = vmatprep.mubr.bf16.mxu0 %v669
        %754 = vmatmul.mubr.bf16.gmra.mxu0 %v546
        %v755 = vpop.f32.mrf.mxu0
        %v756 = vadd.f32 %v446, %v755
        %v757 = vpop.f32.mrf.mxu0
        %v758 = vpop.f32.mrf.mxu0
        %v759 = vadd.f32 %v446, %v758
        %v760 = vpop.f32.mrf.mxu0
        %761 = vmatprep.mubr.bf16.mxu0 %v672
        %762 = vmatmul.mubr.bf16.gmra.mxu0 %v548
        %v763 = vpop.f32.mrf.mxu0
        %v764 = vadd.f32 %v446, %v763
        %v765 = vpop.f32.mrf.mxu0
        %v766 = vpop.f32.mrf.mxu0
        %v767 = vadd.f32 %v446, %v766
        %v768 = vpop.f32.mrf.mxu0
        %769 = vmatprep.mubr.bf16.mxu0 %v675
        %770 = vmatmul.mubr.bf16.gmra.mxu0 %v550
        %v771 = vpop.f32.mrf.mxu0
        %v772 = vadd.f32 %v446, %v771
        %v773 = vpop.f32.mrf.mxu0
        %v774 = vpop.f32.mrf.mxu0
        %v775 = vadd.f32 %v446, %v774
        %v776 = vpop.f32.mrf.mxu0
        %777 = vmatprep.mubr.bf16.mxu0 %v678
        %778 = vmatmul.mubr.bf16.gmra.mxu0 %v552
        %v779 = vpop.f32.mrf.mxu0
        %v780 = vadd.f32 %v446, %v779
        %v781 = vpop.f32.mrf.mxu0
        %v782 = vpop.f32.mrf.mxu0
        %v783 = vadd.f32 %v446, %v782
        %v784 = vpop.f32.mrf.mxu0
        %785 = vmatprep.mubr.bf16.mxu0 %v681
        %786 = vmatmul.mubr.bf16.gmra.mxu0 %v554
        %v787 = vpop.f32.mrf.mxu0
        %v788 = vadd.f32 %v446, %v787
        %v789 = vpop.f32.mrf.mxu0
        %v790 = vpop.f32.mrf.mxu0
        %v791 = vadd.f32 %v446, %v790
        %v792 = vpop.f32.mrf.mxu0
        %793 = vmatprep.mubr.bf16.mxu0 %v684
        %794 = vmatmul.mubr.bf16.gmra.mxu0 %v556
        %v795 = vpop.f32.mrf.mxu0
        %v796 = vadd.f32 %v446, %v795
        %v797 = vpop.f32.mrf.mxu0
        %v798 = vpop.f32.mrf.mxu0
        %v799 = vadd.f32 %v446, %v798
        %v800 = vpop.f32.mrf.mxu0
        %801 = vmatprep.mubr.bf16.mxu0 %v687
        %802 = vmatmul.mubr.bf16.gmra.mxu0 %v558
        %v803 = vpop.f32.mrf.mxu0
        %v804 = vadd.f32 %v446, %v803
        %v805 = vpop.f32.mrf.mxu0
        %v806 = vpop.f32.mrf.mxu0
        %v807 = vadd.f32 %v446, %v806
        %v808 = vpop.f32.mrf.mxu0
        %809 = vmatprep.mubr.bf16.mxu0 %v690
        %810 = vmatmul.mubr.bf16.gmra.mxu0 %v560
        %v811 = vpop.f32.mrf.mxu0
        %v812 = vadd.f32 %v446, %v811
        %v813 = vpop.f32.mrf.mxu0
        %v814 = vpop.f32.mrf.mxu0
        %v815 = vadd.f32 %v446, %v814
        %v816 = vpop.f32.mrf.mxu0
        %817 = vmatprep.mubr.bf16.mxu0 %v693
        %818 = vmatmul.mubr.bf16.gmra.mxu0 %v562
        %v819 = vpop.f32.mrf.mxu0
        %v820 = vadd.f32 %v446, %v819
        %v821 = vpop.f32.mrf.mxu0
        %v822 = vpop.f32.mrf.mxu0
        %v823 = vadd.f32 %v446, %v822
        %v824 = vpop.f32.mrf.mxu0
        %825 = vmatprep.mubr.bf16.mxu0 %v696
        %826 = vmatmul.mubr.bf16.gmra.mxu0 %v564
        %v827 = vpop.f32.mrf.mxu0
        %v828 = vadd.f32 %v446, %v827
        %v829 = vpop.f32.mrf.mxu0
        %v830 = vpop.f32.mrf.mxu0
        %v831 = vadd.f32 %v446, %v830
        %v832 = vpop.f32.mrf.mxu0
        %833 = vmatprep.mubr.bf16.mxu0 %v699
        %834 = vmatmul.mubr.bf16.gmra.mxu0 %v566
        %v835 = vpop.f32.mrf.mxu0
        %v836 = vadd.f32 %v446, %v835
        %v837 = vpop.f32.mrf.mxu0
        %v838 = vpop.f32.mrf.mxu0
        %v839 = vadd.f32 %v446, %v838
        %v840 = vpop.f32.mrf.mxu0
        %841 = vmatprep.mubr.bf16.mxu0 %v702
        %842 = vmatmul.mubr.bf16.gmra.mxu0 %v568
        %v843 = vpop.f32.mrf.mxu0
        %v844 = vadd.f32 %v446, %v843
        %v845 = vpop.f32.mrf.mxu0
        %v846 = vpop.f32.mrf.mxu0
        %v847 = vadd.f32 %v446, %v846
        %v848 = vpop.f32.mrf.mxu0
        %849 = vmatprep.mubr.bf16.mxu0 %v705
        %850 = vmatmul.mubr.bf16.gmra.mxu0 %v570
        %v851 = vpop.f32.mrf.mxu0
        %v852 = vadd.f32 %v446, %v851
        %v853 = vpop.f32.mrf.mxu0
        %v854 = vpop.f32.mrf.mxu0
        %v855 = vadd.f32 %v446, %v854
        %v856 = vpop.f32.mrf.mxu0
        %857 = vmatprep.mubr.bf16.mxu0 %v708
        %858 = vmatmul.mubr.bf16.gmra.mxu0 %v572
        %v859 = vpop.f32.mrf.mxu0
        %v860 = vadd.f32 %v446, %v859
        %v861 = vpop.f32.mrf.mxu0
        %v862 = vpop.f32.mrf.mxu0
        %v863 = vadd.f32 %v446, %v862
        %v864 = vpop.f32.mrf.mxu0
        %865 = vmatprep.mubr.bf16.mxu0 %v711
        %866 = vmatmul.mubr.bf16.gmra.mxu0 %v574
        %v867 = vpop.f32.mrf.mxu0
        %v868 = vadd.f32 %v446, %v867
        %v869 = vpop.f32.mrf.mxu0
        %v870 = vpop.f32.mrf.mxu0
        %v871 = vadd.f32 %v446, %v870
        %v872 = vpop.f32.mrf.mxu0
        %873 = vdwg.mxu0
        %v874 = vmax.f32 %v748, 0.0
        %v875 = vmax.f32 %v751, 0.0
        %v876 = vmax.f32 %v756, 0.0
        %v877 = vmax.f32 %v759, 0.0
        %v878 = vmax.f32 %v764, 0.0
        %v879 = vmax.f32 %v767, 0.0
        %v880 = vmax.f32 %v772, 0.0
        %v881 = vmax.f32 %v775, 0.0
        %v882 = vmax.f32 %v780, 0.0
        %v883 = vmax.f32 %v783, 0.0
        %v884 = vmax.f32 %v788, 0.0
        %v885 = vmax.f32 %v791, 0.0
        %v886 = vmax.f32 %v796, 0.0
        %v887 = vmax.f32 %v799, 0.0
        %v888 = vmax.f32 %v804, 0.0
        %v889 = vmax.f32 %v807, 0.0
        %v890 = vmax.f32 %v812, 0.0
        %v891 = vmax.f32 %v815, 0.0
        %v892 = vmax.f32 %v820, 0.0
        %v893 = vmax.f32 %v823, 0.0
        %v894 = vmax.f32 %v828, 0.0
        %v895 = vmax.f32 %v831, 0.0
        %v896 = vmax.f32 %v836, 0.0
        %v897 = vmax.f32 %v839, 0.0
        %v898 = vmax.f32 %v844, 0.0
        %v899 = vmax.f32 %v847, 0.0
        %v900 = vmax.f32 %v852, 0.0
        %v901 = vmax.f32 %v855, 0.0
        %v902 = vmax.f32 %v860, 0.0
        %v903 = vmax.f32 %v863, 0.0
        %v904 = vmax.f32 %v868, 0.0
        %v905 = vmax.f32 %v871, 0.0
        %v906 = vpack.c.bf16 %v875, %v874
        %v907 = vpack.c.bf16 %v877, %v876
        %v908 = vpack.c.bf16 %v879, %v878
        %v909 = vpack.c.bf16 %v881, %v880
        %v910 = vpack.c.bf16 %v883, %v882
        %v911 = vpack.c.bf16 %v885, %v884
        %v912 = vpack.c.bf16 %v887, %v886
        %v913 = vpack.c.bf16 %v889, %v888
        %v914 = vpack.c.bf16 %v891, %v890
        %v915 = vpack.c.bf16 %v893, %v892
        %v916 = vpack.c.bf16 %v895, %v894
        %v917 = vpack.c.bf16 %v897, %v896
        %v918 = vpack.c.bf16 %v899, %v898
        %v919 = vpack.c.bf16 %v901, %v900
        %v920 = vpack.c.bf16 %v903, %v902
        %v921 = vpack.c.bf16 %v905, %v904
        %v922 = vld [vmem:[%s3] sm:$0xf]
        %v923 = vld [vmem:[%s3 + $0x4] sm:$0xf]
        %v924 = vld [vmem:[%s3 + $0x8] sm:$0xf]
        %v925 = vld [vmem:[%s3 + $0xc] sm:$0xf]
        %v926 = vld [vmem:[%s3 + $0x10] sm:$0xf]
        %v927 = vld [vmem:[%s3 + $0x14] sm:$0xf]
        %v928 = vld [vmem:[%s3 + $0x18] sm:$0xf]
        %v929 = vld [vmem:[%s3 + $0x1c] sm:$0xf]
        %v930 = vld [vmem:[%s3 + $0x20] sm:$0xf]
        %v931 = vld [vmem:[%s3 + $0x24] sm:$0xf]
        %v932 = vld [vmem:[%s3 + $0x28] sm:$0xf]
        %v933 = vld [vmem:[%s3 + $0x2c] sm:$0xf]
        %v934 = vld [vmem:[%s3 + $0x30] sm:$0xf]
        %v935 = vld [vmem:[%s3 + $0x34] sm:$0xf]
        %v936 = vld [vmem:[%s3 + $0x38] sm:$0xf]
        %v937 = vld [vmem:[%s3 + $0x3c] sm:$0xf]
        %v938 = vld [vmem:[%s3 + $0x40] sm:$0xf]
        %v939 = vld [vmem:[%s3 + $0x44] sm:$0xf]
        %v940 = vld [vmem:[%s3 + $0x48] sm:$0xf]
        %v941 = vld [vmem:[%s3 + $0x4c] sm:$0xf]
        %v942 = vld [vmem:[%s3 + $0x50] sm:$0xf]
        %v943 = vld [vmem:[%s3 + $0x54] sm:$0xf]
        %v944 = vld [vmem:[%s3 + $0x58] sm:$0xf]
        %v945 = vld [vmem:[%s3 + $0x5c] sm:$0xf]
        %v946 = vld [vmem:[%s3 + $0x60] sm:$0xf]
        %v947 = vld [vmem:[%s3 + $0x64] sm:$0xf]
        %v948 = vld [vmem:[%s3 + $0x68] sm:$0xf]
        %v949 = vld [vmem:[%s3 + $0x6c] sm:$0xf]
        %v950 = vld [vmem:[%s3 + $0x70] sm:$0xf]
        %v951 = vld [vmem:[%s3 + $0x74] sm:$0xf]
        %v952 = vld [vmem:[%s3 + $0x78] sm:$0xf]
        %v953 = vld [vmem:[%s3 + $0x7c] sm:$0xf]
        %v954 = vld [vmem:[%s3 + $0x80] sm:$0xf]
        %v955 = vld [vmem:[%s3 + $0x84] sm:$0xf]
        %v956 = vld [vmem:[%s3 + $0x88] sm:$0xf]
        %v957 = vld [vmem:[%s3 + $0x8c] sm:$0xf]
        %v958 = vld [vmem:[%s3 + $0x90] sm:$0xf]
        %v959 = vld [vmem:[%s3 + $0x94] sm:$0xf]
        %v960 = vld [vmem:[%s3 + $0x98] sm:$0xf]
        %v961 = vld [vmem:[%s3 + $0x9c] sm:$0xf]
        %v962 = vld [vmem:[%s3 + $0xa0] sm:$0xf]
        %v963 = vld [vmem:[%s3 + $0xa4] sm:$0xf]
        %v964 = vld [vmem:[%s3 + $0xa8] sm:$0xf]
        %v965 = vld [vmem:[%s3 + $0xac] sm:$0xf]
        %v966 = vld [vmem:[%s3 + $0xb0] sm:$0xf]
        %v967 = vld [vmem:[%s3 + $0xb4] sm:$0xf]
        %v968 = vld [vmem:[%s3 + $0xb8] sm:$0xf]
        %v969 = vld [vmem:[%s3 + $0xbc] sm:$0xf]
        %v970 = vld [vmem:[%s3 + $0xc0] sm:$0xf]
        %v971 = vld [vmem:[%s3 + $0xc4] sm:$0xf]
        %v972 = vld [vmem:[%s3 + $0xc8] sm:$0xf]
        %v973 = vld [vmem:[%s3 + $0xcc] sm:$0xf]
        %v974 = vld [vmem:[%s3 + $0xd0] sm:$0xf]
        %v975 = vld [vmem:[%s3 + $0xd4] sm:$0xf]
        %v976 = vld [vmem:[%s3 + $0xd8] sm:$0xf]
        %v977 = vld [vmem:[%s3 + $0xdc] sm:$0xf]
        %v978 = vld [vmem:[%s3 + $0xe0] sm:$0xf]
        %v979 = vld [vmem:[%s3 + $0xe4] sm:$0xf]
        %v980 = vld [vmem:[%s3 + $0xe8] sm:$0xf]
        %v981 = vld [vmem:[%s3 + $0xec] sm:$0xf]
        %v982 = vld [vmem:[%s3 + $0xf0] sm:$0xf]
        %v983 = vld [vmem:[%s3 + $0xf4] sm:$0xf]
        %v984 = vld [vmem:[%s3 + $0xf8] sm:$0xf]
        %v985 = vld [vmem:[%s3 + $0xfc] sm:$0xf]
        %v987 = vshrl.u32 %v906, 16
        %v989 = vshll.u32 %v906, 16
        %v991 = vrot.slane %v989, 1
        %v992 = vor.u32 %v987, %v991
        %993 = vrot.lane.b32.xlu0 %v992, 32
        %v994 = vpop.permute.xlu0 %993
        %v996 = vrot.slane %v906, 4
        %997 = vrot.lane.b32.xlu0 %v996, 64
        %v998 = vpop.permute.xlu0 %997
        %v999 = vrot.slane %v987, 4
        %v1000 = vrot.slane %v989, 5
        %v1001 = vor.u32 %v999, %v1000
        %1002 = vrot.lane.b32.xlu0 %v1001, 96
        %v1003 = vpop.permute.xlu0 %1002
        %v1005 = vshrl.u32 %v910, 16
        %v1007 = vshll.u32 %v910, 16
        %v1009 = vrot.slane %v1007, 1
        %v1010 = vor.u32 %v1005, %v1009
        %1011 = vrot.lane.b32.xlu0 %v1010, 32
        %v1012 = vpop.permute.xlu0 %1011
        %v1014 = vrot.slane %v910, 4
        %1015 = vrot.lane.b32.xlu0 %v1014, 64
        %v1016 = vpop.permute.xlu0 %1015
        %v1017 = vrot.slane %v1005, 4
        %v1018 = vrot.slane %v1007, 5
        %v1019 = vor.u32 %v1017, %v1018
        %1020 = vrot.lane.b32.xlu0 %v1019, 96
        %v1021 = vpop.permute.xlu0 %1020
        %v1023 = vshrl.u32 %v914, 16
        %v1025 = vshll.u32 %v914, 16
        %v1027 = vrot.slane %v1025, 1
        %v1028 = vor.u32 %v1023, %v1027
        %1029 = vrot.lane.b32.xlu0 %v1028, 32
        %v1030 = vpop.permute.xlu0 %1029
        %v1032 = vrot.slane %v914, 4
        %1033 = vrot.lane.b32.xlu0 %v1032, 64
        %v1034 = vpop.permute.xlu0 %1033
        %v1035 = vrot.slane %v1023, 4
        %v1036 = vrot.slane %v1025, 5
        %v1037 = vor.u32 %v1035, %v1036
        %1038 = vrot.lane.b32.xlu0 %v1037, 96
        %v1039 = vpop.permute.xlu0 %1038
        %v1041 = vshrl.u32 %v918, 16
        %v1043 = vshll.u32 %v918, 16
        %v1045 = vrot.slane %v1043, 1
        %v1046 = vor.u32 %v1041, %v1045
        %1047 = vrot.lane.b32.xlu0 %v1046, 32
        %v1048 = vpop.permute.xlu0 %1047
        %v1050 = vrot.slane %v918, 4
        %1051 = vrot.lane.b32.xlu0 %v1050, 64
        %v1052 = vpop.permute.xlu0 %1051
        %v1053 = vrot.slane %v1041, 4
        %v1054 = vrot.slane %v1043, 5
        %v1055 = vor.u32 %v1053, %v1054
        %1056 = vrot.lane.b32.xlu0 %v1055, 96
        %v1057 = vpop.permute.xlu0 %1056
        %vm1058 = vcmask 261120
        %v1060 = vsel %vm1058, %v906, %v994
        %v1062 = vsel %vm664, %v1060, %v998
        %vm1063 = vcmask 785408
        %v1065 = vsel %vm1063, %v1062, %v1003
        %v1068 = vsel %vm1058, %v910, %v1012
        %v1070 = vsel %vm664, %v1068, %v1016
        %v1072 = vsel %vm1063, %v1070, %v1021
        %v1075 = vsel %vm1058, %v914, %v1030
        %v1077 = vsel %vm664, %v1075, %v1034
        %v1079 = vsel %vm1063, %v1077, %v1039
        %v1082 = vsel %vm1058, %v918, %v1048
        %v1084 = vsel %vm664, %v1082, %v1052
        %v1086 = vsel %vm1063, %v1084, %v1057
        %v1088 = vld [vmem:[%s4] sm:$0x1]
        %v1090 = vlaneseq
        %v1091 = vshrl.u32 %v1090, 7
        %v1092 = vsub.s32 0, %v1091
        %v1093 = vrot.slane %v1088, %v1092
        %v1159 = vunpack.c.l.b16 %v922
        %v1160 = vunpack.c.l.b16 %v923
        %v1161 = vunpack.c.l.b16 %v924
        %v1162 = vunpack.c.l.b16 %v925
        %v1163 = vunpack.c.l.b16 %v926
        %v1164 = vunpack.c.l.b16 %v927
        %v1165 = vunpack.c.l.b16 %v928
        %v1166 = vunpack.c.l.b16 %v929
        %v1167 = vunpack.c.l.b16 %v930
        %v1168 = vunpack.c.l.b16 %v931
        %v1169 = vunpack.c.l.b16 %v932
        %v1170 = vunpack.c.l.b16 %v933
        %v1171 = vunpack.c.l.b16 %v934
        %v1172 = vunpack.c.l.b16 %v935
        %v1173 = vunpack.c.l.b16 %v936
        %v1174 = vunpack.c.l.b16 %v937
        %v1175 = vunpack.c.l.b16 %v938
        %v1176 = vunpack.c.l.b16 %v939
        %v1177 = vunpack.c.l.b16 %v940
        %v1178 = vunpack.c.l.b16 %v941
        %v1179 = vunpack.c.l.b16 %v942
        %v1180 = vunpack.c.l.b16 %v943
        %v1181 = vunpack.c.l.b16 %v944
        %v1182 = vunpack.c.l.b16 %v945
        %v1183 = vunpack.c.l.b16 %v946
        %v1184 = vunpack.c.l.b16 %v947
        %v1185 = vunpack.c.l.b16 %v948
        %v1186 = vunpack.c.l.b16 %v949
        %v1187 = vunpack.c.l.b16 %v950
        %v1188 = vunpack.c.l.b16 %v951
        %v1189 = vunpack.c.l.b16 %v952
        %v1190 = vunpack.c.l.b16 %v953
        %v1191 = vunpack.c.l.b16 %v954
        %v1192 = vunpack.c.l.b16 %v955
        %v1193 = vunpack.c.l.b16 %v956
        %v1194 = vunpack.c.l.b16 %v957
        %v1195 = vunpack.c.l.b16 %v958
        %v1196 = vunpack.c.l.b16 %v959
        %v1197 = vunpack.c.l.b16 %v960
        %v1198 = vunpack.c.l.b16 %v961
        %v1199 = vunpack.c.l.b16 %v962
        %v1200 = vunpack.c.l.b16 %v963
        %v1201 = vunpack.c.l.b16 %v964
        %v1202 = vunpack.c.l.b16 %v965
        %v1203 = vunpack.c.l.b16 %v966
        %v1204 = vunpack.c.l.b16 %v967
        %v1205 = vunpack.c.l.b16 %v968
        %v1206 = vunpack.c.l.b16 %v969
        %v1207 = vunpack.c.l.b16 %v970
        %v1208 = vunpack.c.l.b16 %v971
        %v1209 = vunpack.c.l.b16 %v972
        %v1210 = vunpack.c.l.b16 %v973
        %v1211 = vunpack.c.l.b16 %v974
        %v1212 = vunpack.c.l.b16 %v975
        %v1213 = vunpack.c.l.b16 %v976
        %v1214 = vunpack.c.l.b16 %v977
        %v1215 = vunpack.c.l.b16 %v978
        %v1216 = vunpack.c.l.b16 %v979
        %v1217 = vunpack.c.l.b16 %v980
        %v1218 = vunpack.c.l.b16 %v981
        %v1219 = vunpack.c.l.b16 %v982
        %v1220 = vunpack.c.l.b16 %v983
        %v1221 = vunpack.c.l.b16 %v984
        %v1222 = vunpack.c.l.b16 %v985
        %v1223 = vpack.c.b16 %v1160, %v1159
        %v1224 = vpack.c.b16 %v1162, %v1161
        %v1225 = vpack.c.b16 %v1164, %v1163
        %v1226 = vpack.c.b16 %v1166, %v1165
        %v1227 = vpack.c.b16 %v1168, %v1167
        %v1228 = vpack.c.b16 %v1170, %v1169
        %v1229 = vpack.c.b16 %v1172, %v1171
        %v1230 = vpack.c.b16 %v1174, %v1173
        %v1231 = vpack.c.b16 %v1176, %v1175
        %v1232 = vpack.c.b16 %v1178, %v1177
        %v1233 = vpack.c.b16 %v1180, %v1179
        %v1234 = vpack.c.b16 %v1182, %v1181
        %v1235 = vpack.c.b16 %v1184, %v1183
        %v1236 = vpack.c.b16 %v1186, %v1185
        %v1237 = vpack.c.b16 %v1188, %v1187
        %v1238 = vpack.c.b16 %v1190, %v1189
        %v1239 = vpack.c.b16 %v1192, %v1191
        %v1240 = vpack.c.b16 %v1194, %v1193
        %v1241 = vpack.c.b16 %v1196, %v1195
        %v1242 = vpack.c.b16 %v1198, %v1197
        %v1243 = vpack.c.b16 %v1200, %v1199
        %v1244 = vpack.c.b16 %v1202, %v1201
        %v1245 = vpack.c.b16 %v1204, %v1203
        %v1246 = vpack.c.b16 %v1206, %v1205
        %v1247 = vpack.c.b16 %v1208, %v1207
        %v1248 = vpack.c.b16 %v1210, %v1209
        %v1249 = vpack.c.b16 %v1212, %v1211
        %v1250 = vpack.c.b16 %v1214, %v1213
        %v1251 = vpack.c.b16 %v1216, %v1215
        %v1252 = vpack.c.b16 %v1218, %v1217
        %v1253 = vpack.c.b16 %v1220, %v1219
        %v1254 = vpack.c.b16 %v1222, %v1221
        %1287 = vmatprep.subr.bf16.mxu0 0
        %1288 = vmatpush1.bf16.msra.mxu0 %v1230
        %1289 = vmatprep.subr.bf16.mxu0 0
        %1290 = vmatpush1.bf16.msra.mxu0 %v1229
        %1291 = vmatprep.subr.bf16.mxu0 0
        %1292 = vmatpush1.bf16.msra.mxu0 %v1228
        %1293 = vmatprep.subr.bf16.mxu0 0
        %1294 = vmatpush1.bf16.msra.mxu0 %v1227
        %1295 = vmatprep.subr.bf16.mxu0 0
        %1296 = vmatpush1.bf16.msra.mxu0 %v1226
        %1297 = vmatprep.subr.bf16.mxu0 0
        %1298 = vmatpush1.bf16.msra.mxu0 %v1225
        %1299 = vmatprep.subr.bf16.mxu0 0
        %1300 = vmatpush1.bf16.msra.mxu0 %v1224
        %1301 = vmatprep.subr.bf16.mxu0 0
        %1302 = vmatpush1.bf16.msra.mxu0 %v1223
        %1303 = vmatprep.subr.bf16.mxu0 0
        %1304 = vmatpush2.bf16.msra.mxu0 %v1238
        %1305 = vmatprep.subr.bf16.mxu0 0
        %1306 = vmatpush2.bf16.msra.mxu0 %v1237
        %1307 = vmatprep.subr.bf16.mxu0 0
        %1308 = vmatpush2.bf16.msra.mxu0 %v1236
        %1309 = vmatprep.subr.bf16.mxu0 0
        %1310 = vmatpush2.bf16.msra.mxu0 %v1235
        %1311 = vmatprep.subr.bf16.mxu0 0
        %1312 = vmatpush2.bf16.msra.mxu0 %v1234
        %1313 = vmatprep.subr.bf16.mxu0 0
        %1314 = vmatpush2.bf16.msra.mxu0 %v1233
        %1315 = vmatprep.subr.bf16.mxu0 0
        %1316 = vmatpush2.bf16.msra.mxu0 %v1232
        %1317 = vmatprep.subr.bf16.mxu0 0
        %1318 = vmatpush2.bf16.msra.mxu0 %v1231
        %1319 = vmatprep.mubr.bf16.mxu0 %v1072
        %1320 = vmatmul.mubr.bf16.gmra.mxu0 %v1065
        %v1321 = vpop.f32.mrf.mxu0
        %v1322 = vadd.f32 %v1093, %v1321
        %v1323 = vpop.f32.mrf.mxu0
        %v1324 = vpop.f32.mrf.mxu0
        %v1325 = vpop.f32.mrf.mxu0
        %1326 = vdwg.mxu0
        %1327 = vmatprep.subr.bf16.mxu0 0
        %1328 = vmatpush1.bf16.msra.mxu0 %v1246
        %1329 = vmatprep.subr.bf16.mxu0 0
        %1330 = vmatpush1.bf16.msra.mxu0 %v1245
        %1331 = vmatprep.subr.bf16.mxu0 0
        %1332 = vmatpush1.bf16.msra.mxu0 %v1244
        %1333 = vmatprep.subr.bf16.mxu0 0
        %1334 = vmatpush1.bf16.msra.mxu0 %v1243
        %1335 = vmatprep.subr.bf16.mxu0 0
        %1336 = vmatpush1.bf16.msra.mxu0 %v1242
        %1337 = vmatprep.subr.bf16.mxu0 0
        %1338 = vmatpush1.bf16.msra.mxu0 %v1241
        %1339 = vmatprep.subr.bf16.mxu0 0
        %1340 = vmatpush1.bf16.msra.mxu0 %v1240
        %1341 = vmatprep.subr.bf16.mxu0 0
        %1342 = vmatpush1.bf16.msra.mxu0 %v1239
        %1343 = vmatprep.subr.bf16.mxu0 0
        %1344 = vmatpush2.bf16.msra.mxu0 %v1254
        %1345 = vmatprep.subr.bf16.mxu0 0
        %1346 = vmatpush2.bf16.msra.mxu0 %v1253
        %1347 = vmatprep.subr.bf16.mxu0 0
        %1348 = vmatpush2.bf16.msra.mxu0 %v1252
        %1349 = vmatprep.subr.bf16.mxu0 0
        %1350 = vmatpush2.bf16.msra.mxu0 %v1251
        %1351 = vmatprep.subr.bf16.mxu0 0
        %1352 = vmatpush2.bf16.msra.mxu0 %v1250
        %1353 = vmatprep.subr.bf16.mxu0 0
        %1354 = vmatpush2.bf16.msra.mxu0 %v1249
        %1355 = vmatprep.subr.bf16.mxu0 0
        %1356 = vmatpush2.bf16.msra.mxu0 %v1248
        %1357 = vmatprep.subr.bf16.mxu0 0
        %1358 = vmatpush2.bf16.msra.mxu0 %v1247
        %1359 = vmatprep.mubr.bf16.mxu0 %v1086
        %1360 = vmatmul.mubr.bf16.gmra.mxu0 %v1079
        %v1361 = vpop.f32.mrf.mxu0
        %v1362 = vadd.f32 %v1322, %v1361
        %v1363 = vpop.f32.mrf.mxu0
        %v1364 = vpop.f32.mrf.mxu0
        %v1365 = vpop.f32.mrf.mxu0
        %1366 = vdwg.mxu0
        %v1367 = vmax.f32 %v1362, 0.0
        %v1368 = vpack.c.bf16 %v1367, %v1367
        %v1370 = vrot.slane %v907, 4
        %1371 = vrot.lane.b32.xlu0 %v1370, 64
        %v1372 = vpop.permute.xlu0 %1371
        %v1374 = vshrl.u32 %v907, 16
        %v1376 = vrot.slane %v1374, 4
        %v1377 = vshll.u32 %v907, 16
        %v1379 = vrot.slane %v1377, 5
        %v1380 = vor.u32 %v1376, %v1379
        %1381 = vrot.lane.b32.xlu0 %v1380, 96
        %v1382 = vpop.permute.xlu0 %1381
        %v1384 = vrot.slane %v911, 4
        %1385 = vrot.lane.b32.xlu0 %v1384, 64
        %v1386 = vpop.permute.xlu0 %1385
        %v1388 = vshrl.u32 %v911, 16
        %v1390 = vrot.slane %v1388, 4
        %v1391 = vshll.u32 %v911, 16
        %v1393 = vrot.slane %v1391, 5
        %v1394 = vor.u32 %v1390, %v1393
        %1395 = vrot.lane.b32.xlu0 %v1394, 96
        %v1396 = vpop.permute.xlu0 %1395
        %v1398 = vrot.slane %v915, 4
        %1399 = vrot.lane.b32.xlu0 %v1398, 64
        %v1400 = vpop.permute.xlu0 %1399
        %v1402 = vshrl.u32 %v915, 16
        %v1404 = vrot.slane %v1402, 4
        %v1405 = vshll.u32 %v915, 16
        %v1407 = vrot.slane %v1405, 5
        %v1408 = vor.u32 %v1404, %v1407
        %1409 = vrot.lane.b32.xlu0 %v1408, 96
        %v1410 = vpop.permute.xlu0 %1409
        %v1412 = vrot.slane %v919, 4
        %1413 = vrot.lane.b32.xlu0 %v1412, 64
        %v1414 = vpop.permute.xlu0 %1413
        %v1416 = vshrl.u32 %v919, 16
        %v1418 = vrot.slane %v1416, 4
        %v1419 = vshll.u32 %v919, 16
        %v1421 = vrot.slane %v1419, 5
        %v1422 = vor.u32 %v1418, %v1421
        %1423 = vrot.lane.b32.xlu0 %v1422, 96
        %v1424 = vpop.permute.xlu0 %1423
        %v1426 = vsel %vm664, %v1060, %v1372
        %v1428 = vsel %vm1063, %v1426, %v1382
        %v1430 = vsel %vm664, %v1068, %v1386
        %v1432 = vsel %vm1063, %v1430, %v1396
        %v1434 = vsel %vm664, %v1075, %v1400
        %v1436 = vsel %vm1063, %v1434, %v1410
        %v1438 = vsel %vm664, %v1082, %v1414
        %v1440 = vsel %vm1063, %v1438, %v1424
        %v1445 = vrot.slane %v1428, 4
        %v1446 = vrot.slane %v1432, 4
        %v1447 = vrot.slane %v1436, 4
        %v1448 = vrot.slane %v1440, 4
        %1453 = vmatprep.subr.bf16.mxu0 0
        %1454 = vmatpush1.bf16.msra.mxu0 %v1230
        %1455 = vmatprep.subr.bf16.mxu0 0
        %1456 = vmatpush1.bf16.msra.mxu0 %v1229
        %1457 = vmatprep.subr.bf16.mxu0 0
        %1458 = vmatpush1.bf16.msra.mxu0 %v1228
        %1459 = vmatprep.subr.bf16.mxu0 0
        %1460 = vmatpush1.bf16.msra.mxu0 %v1227
        %1461 = vmatprep.subr.bf16.mxu0 0
        %1462 = vmatpush1.bf16.msra.mxu0 %v1226
        %1463 = vmatprep.subr.bf16.mxu0 0
        %1464 = vmatpush1.bf16.msra.mxu0 %v1225
        %1465 = vmatprep.subr.bf16.mxu0 0
        %1466 = vmatpush1.bf16.msra.mxu0 %v1224
        %1467 = vmatprep.subr.bf16.mxu0 0
        %1468 = vmatpush1.bf16.msra.mxu0 %v1223
        %1469 = vmatprep.subr.bf16.mxu0 0
        %1470 = vmatpush2.bf16.msra.mxu0 %v1238
        %1471 = vmatprep.subr.bf16.mxu0 0
        %1472 = vmatpush2.bf16.msra.mxu0 %v1237
        %1473 = vmatprep.subr.bf16.mxu0 0
        %1474 = vmatpush2.bf16.msra.mxu0 %v1236
        %1475 = vmatprep.subr.bf16.mxu0 0
        %1476 = vmatpush2.bf16.msra.mxu0 %v1235
        %1477 = vmatprep.subr.bf16.mxu0 0
        %1478 = vmatpush2.bf16.msra.mxu0 %v1234
        %1479 = vmatprep.subr.bf16.mxu0 0
        %1480 = vmatpush2.bf16.msra.mxu0 %v1233
        %1481 = vmatprep.subr.bf16.mxu0 0
        %1482 = vmatpush2.bf16.msra.mxu0 %v1232
        %1483 = vmatprep.subr.bf16.mxu0 0
        %1484 = vmatpush2.bf16.msra.mxu0 %v1231
        %1485 = vmatprep.mubr.bf16.mxu0 %v1446
        %1486 = vmatmul.mubr.bf16.gmra.mxu0 %v1445
        %v1487 = vpop.f32.mrf.mxu0
        %v1488 = vadd.f32 %v1093, %v1487
        %v1489 = vpop.f32.mrf.mxu0
        %v1490 = vpop.f32.mrf.mxu0
        %v1491 = vpop.f32.mrf.mxu0
        %1492 = vdwg.mxu0
        %1493 = vmatprep.subr.bf16.mxu0 0
        %1494 = vmatpush1.bf16.msra.mxu0 %v1246
        %1495 = vmatprep.subr.bf16.mxu0 0
        %1496 = vmatpush1.bf16.msra.mxu0 %v1245
        %1497 = vmatprep.subr.bf16.mxu0 0
        %1498 = vmatpush1.bf16.msra.mxu0 %v1244
        %1499 = vmatprep.subr.bf16.mxu0 0
        %1500 = vmatpush1.bf16.msra.mxu0 %v1243
        %1501 = vmatprep.subr.bf16.mxu0 0
        %1502 = vmatpush1.bf16.msra.mxu0 %v1242
        %1503 = vmatprep.subr.bf16.mxu0 0
        %1504 = vmatpush1.bf16.msra.mxu0 %v1241
        %1505 = vmatprep.subr.bf16.mxu0 0
        %1506 = vmatpush1.bf16.msra.mxu0 %v1240
        %1507 = vmatprep.subr.bf16.mxu0 0
        %1508 = vmatpush1.bf16.msra.mxu0 %v1239
        %1509 = vmatprep.subr.bf16.mxu0 0
        %1510 = vmatpush2.bf16.msra.mxu0 %v1254
        %1511 = vmatprep.subr.bf16.mxu0 0
        %1512 = vmatpush2.bf16.msra.mxu0 %v1253
        %1513 = vmatprep.subr.bf16.mxu0 0
        %1514 = vmatpush2.bf16.msra.mxu0 %v1252
        %1515 = vmatprep.subr.bf16.mxu0 0
        %1516 = vmatpush2.bf16.msra.mxu0 %v1251
        %1517 = vmatprep.subr.bf16.mxu0 0
        %1518 = vmatpush2.bf16.msra.mxu0 %v1250
        %1519 = vmatprep.subr.bf16.mxu0 0
        %1520 = vmatpush2.bf16.msra.mxu0 %v1249
        %1521 = vmatprep.subr.bf16.mxu0 0
        %1522 = vmatpush2.bf16.msra.mxu0 %v1248
        %1523 = vmatprep.subr.bf16.mxu0 0
        %1524 = vmatpush2.bf16.msra.mxu0 %v1247
        %1525 = vmatprep.mubr.bf16.mxu0 %v1448
        %1526 = vmatmul.mubr.bf16.gmra.mxu0 %v1447
        %v1527 = vpop.f32.mrf.mxu0
        %v1528 = vadd.f32 %v1488, %v1527
        %v1529 = vpop.f32.mrf.mxu0
        %v1530 = vpop.f32.mrf.mxu0
        %v1531 = vpop.f32.mrf.mxu0
        %1532 = vdwg.mxu0
        %v1533 = vmax.f32 %v1528, 0.0
        %v1534 = vpack.c.bf16 %v1533, %v1533
        %v1535 = vrot.slane %v1377, 1
        %v1536 = vor.u32 %v1374, %v1535
        %1537 = vrot.lane.b32.xlu0 %v1536, 32
        %v1538 = vpop.permute.xlu0 %1537
        %v1539 = vrot.slane %v1391, 1
        %v1540 = vor.u32 %v1388, %v1539
        %1541 = vrot.lane.b32.xlu0 %v1540, 32
        %v1542 = vpop.permute.xlu0 %1541
        %v1543 = vrot.slane %v1405, 1
        %v1544 = vor.u32 %v1402, %v1543
        %1545 = vrot.lane.b32.xlu0 %v1544, 32
        %v1546 = vpop.permute.xlu0 %1545
        %v1547 = vrot.slane %v1419, 1
        %v1548 = vor.u32 %v1416, %v1547
        %1549 = vrot.lane.b32.xlu0 %v1548, 32
        %v1550 = vpop.permute.xlu0 %1549
        %v1552 = vsel %vm1058, %v907, %v1538
        %v1553 = vsel %vm664, %v1552, %v1372
        %v1554 = vsel %vm1063, %v1553, %v1382
        %v1557 = vsel %vm1058, %v911, %v1542
        %v1558 = vsel %vm664, %v1557, %v1386
        %v1559 = vsel %vm1063, %v1558, %v1396
        %v1562 = vsel %vm1058, %v915, %v1546
        %v1563 = vsel %vm664, %v1562, %v1400
        %v1564 = vsel %vm1063, %v1563, %v1410
        %v1567 = vsel %vm1058, %v919, %v1550
        %v1568 = vsel %vm664, %v1567, %v1414
        %v1569 = vsel %vm1063, %v1568, %v1424
        %1571 = vmatprep.subr.bf16.mxu0 0
        %1572 = vmatpush1.bf16.msra.mxu0 %v1230
        %1573 = vmatprep.subr.bf16.mxu0 0
        %1574 = vmatpush1.bf16.msra.mxu0 %v1229
        %1575 = vmatprep.subr.bf16.mxu0 0
        %1576 = vmatpush1.bf16.msra.mxu0 %v1228
        %1577 = vmatprep.subr.bf16.mxu0 0
        %1578 = vmatpush1.bf16.msra.mxu0 %v1227
        %1579 = vmatprep.subr.bf16.mxu0 0
        %1580 = vmatpush1.bf16.msra.mxu0 %v1226
        %1581 = vmatprep.subr.bf16.mxu0 0
        %1582 = vmatpush1.bf16.msra.mxu0 %v1225
        %1583 = vmatprep.subr.bf16.mxu0 0
        %1584 = vmatpush1.bf16.msra.mxu0 %v1224
        %1585 = vmatprep.subr.bf16.mxu0 0
        %1586 = vmatpush1.bf16.msra.mxu0 %v1223
        %1587 = vmatprep.subr.bf16.mxu0 0
        %1588 = vmatpush2.bf16.msra.mxu0 %v1238
        %1589 = vmatprep.subr.bf16.mxu0 0
        %1590 = vmatpush2.bf16.msra.mxu0 %v1237
        %1591 = vmatprep.subr.bf16.mxu0 0
        %1592 = vmatpush2.bf16.msra.mxu0 %v1236
        %1593 = vmatprep.subr.bf16.mxu0 0
        %1594 = vmatpush2.bf16.msra.mxu0 %v1235
        %1595 = vmatprep.subr.bf16.mxu0 0
        %1596 = vmatpush2.bf16.msra.mxu0 %v1234
        %1597 = vmatprep.subr.bf16.mxu0 0
        %1598 = vmatpush2.bf16.msra.mxu0 %v1233
        %1599 = vmatprep.subr.bf16.mxu0 0
        %1600 = vmatpush2.bf16.msra.mxu0 %v1232
        %1601 = vmatprep.subr.bf16.mxu0 0
        %1602 = vmatpush2.bf16.msra.mxu0 %v1231
        %1603 = vmatprep.mubr.bf16.mxu0 %v1559
        %1604 = vmatmul.mubr.bf16.gmra.mxu0 %v1554
        %v1605 = vpop.f32.mrf.mxu0
        %v1606 = vadd.f32 %v1093, %v1605
        %v1607 = vpop.f32.mrf.mxu0
        %v1608 = vpop.f32.mrf.mxu0
        %v1609 = vpop.f32.mrf.mxu0
        %1610 = vdwg.mxu0
        %1611 = vmatprep.subr.bf16.mxu0 0
        %1612 = vmatpush1.bf16.msra.mxu0 %v1246
        %1613 = vmatprep.subr.bf16.mxu0 0
        %1614 = vmatpush1.bf16.msra.mxu0 %v1245
        %1615 = vmatprep.subr.bf16.mxu0 0
        %1616 = vmatpush1.bf16.msra.mxu0 %v1244
        %1617 = vmatprep.subr.bf16.mxu0 0
        %1618 = vmatpush1.bf16.msra.mxu0 %v1243
        %1619 = vmatprep.subr.bf16.mxu0 0
        %1620 = vmatpush1.bf16.msra.mxu0 %v1242
        %1621 = vmatprep.subr.bf16.mxu0 0
        %1622 = vmatpush1.bf16.msra.mxu0 %v1241
        %1623 = vmatprep.subr.bf16.mxu0 0
        %1624 = vmatpush1.bf16.msra.mxu0 %v1240
        %1625 = vmatprep.subr.bf16.mxu0 0
        %1626 = vmatpush1.bf16.msra.mxu0 %v1239
        %1627 = vmatprep.subr.bf16.mxu0 0
        %1628 = vmatpush2.bf16.msra.mxu0 %v1254
        %1629 = vmatprep.subr.bf16.mxu0 0
        %1630 = vmatpush2.bf16.msra.mxu0 %v1253
        %1631 = vmatprep.subr.bf16.mxu0 0
        %1632 = vmatpush2.bf16.msra.mxu0 %v1252
        %1633 = vmatprep.subr.bf16.mxu0 0
        %1634 = vmatpush2.bf16.msra.mxu0 %v1251
        %1635 = vmatprep.subr.bf16.mxu0 0
        %1636 = vmatpush2.bf16.msra.mxu0 %v1250
        %1637 = vmatprep.subr.bf16.mxu0 0
        %1638 = vmatpush2.bf16.msra.mxu0 %v1249
        %1639 = vmatprep.subr.bf16.mxu0 0
        %1640 = vmatpush2.bf16.msra.mxu0 %v1248
        %1641 = vmatprep.subr.bf16.mxu0 0
        %1642 = vmatpush2.bf16.msra.mxu0 %v1247
        %1643 = vmatprep.mubr.bf16.mxu0 %v1569
        %1644 = vmatmul.mubr.bf16.gmra.mxu0 %v1564
        %v1645 = vpop.f32.mrf.mxu0
        %v1646 = vadd.f32 %v1606, %v1645
        %v1647 = vpop.f32.mrf.mxu0
        %v1648 = vpop.f32.mrf.mxu0
        %v1649 = vpop.f32.mrf.mxu0
        %1650 = vdwg.mxu0
        %v1651 = vmax.f32 %v1646, 0.0
        %v1652 = vpack.c.bf16 %v1651, %v1651
        %v1654 = vrot.slane %v908, 4
        %1655 = vrot.lane.b32.xlu0 %v1654, 64
        %v1656 = vpop.permute.xlu0 %1655
        %v1658 = vshrl.u32 %v908, 16
        %v1660 = vrot.slane %v1658, 4
        %v1661 = vshll.u32 %v908, 16
        %v1663 = vrot.slane %v1661, 5
        %v1664 = vor.u32 %v1660, %v1663
        %1665 = vrot.lane.b32.xlu0 %v1664, 96
        %v1666 = vpop.permute.xlu0 %1665
        %v1668 = vrot.slane %v912, 4
        %1669 = vrot.lane.b32.xlu0 %v1668, 64
        %v1670 = vpop.permute.xlu0 %1669
        %v1672 = vshrl.u32 %v912, 16
        %v1674 = vrot.slane %v1672, 4
        %v1675 = vshll.u32 %v912, 16
        %v1677 = vrot.slane %v1675, 5
        %v1678 = vor.u32 %v1674, %v1677
        %1679 = vrot.lane.b32.xlu0 %v1678, 96
        %v1680 = vpop.permute.xlu0 %1679
        %v1682 = vrot.slane %v916, 4
        %1683 = vrot.lane.b32.xlu0 %v1682, 64
        %v1684 = vpop.permute.xlu0 %1683
        %v1686 = vshrl.u32 %v916, 16
        %v1688 = vrot.slane %v1686, 4
        %v1689 = vshll.u32 %v916, 16
        %v1691 = vrot.slane %v1689, 5
        %v1692 = vor.u32 %v1688, %v1691
        %1693 = vrot.lane.b32.xlu0 %v1692, 96
        %v1694 = vpop.permute.xlu0 %1693
        %v1696 = vrot.slane %v920, 4
        %1697 = vrot.lane.b32.xlu0 %v1696, 64
        %v1698 = vpop.permute.xlu0 %1697
        %v1700 = vshrl.u32 %v920, 16
        %v1702 = vrot.slane %v1700, 4
        %v1703 = vshll.u32 %v920, 16
        %v1705 = vrot.slane %v1703, 5
        %v1706 = vor.u32 %v1702, %v1705
        %1707 = vrot.lane.b32.xlu0 %v1706, 96
        %v1708 = vpop.permute.xlu0 %1707
        %v1710 = vsel %vm664, %v1552, %v1656
        %v1712 = vsel %vm1063, %v1710, %v1666
        %v1714 = vsel %vm664, %v1557, %v1670
        %v1716 = vsel %vm1063, %v1714, %v1680
        %v1718 = vsel %vm664, %v1562, %v1684
        %v1720 = vsel %vm1063, %v1718, %v1694
        %v1722 = vsel %vm664, %v1567, %v1698
        %v1724 = vsel %vm1063, %v1722, %v1708
        %v1729 = vrot.slane %v1712, 4
        %v1730 = vrot.slane %v1716, 4
        %v1731 = vrot.slane %v1720, 4
        %v1732 = vrot.slane %v1724, 4
        %1737 = vmatprep.subr.bf16.mxu0 0
        %1738 = vmatpush1.bf16.msra.mxu0 %v1230
        %1739 = vmatprep.subr.bf16.mxu0 0
        %1740 = vmatpush1.bf16.msra.mxu0 %v1229
        %1741 = vmatprep.subr.bf16.mxu0 0
        %1742 = vmatpush1.bf16.msra.mxu0 %v1228
        %1743 = vmatprep.subr.bf16.mxu0 0
        %1744 = vmatpush1.bf16.msra.mxu0 %v1227
        %1745 = vmatprep.subr.bf16.mxu0 0
        %1746 = vmatpush1.bf16.msra.mxu0 %v1226
        %1747 = vmatprep.subr.bf16.mxu0 0
        %1748 = vmatpush1.bf16.msra.mxu0 %v1225
        %1749 = vmatprep.subr.bf16.mxu0 0
        %1750 = vmatpush1.bf16.msra.mxu0 %v1224
        %1751 = vmatprep.subr.bf16.mxu0 0
        %1752 = vmatpush1.bf16.msra.mxu0 %v1223
        %1753 = vmatprep.subr.bf16.mxu0 0
        %1754 = vmatpush2.bf16.msra.mxu0 %v1238
        %1755 = vmatprep.subr.bf16.mxu0 0
        %1756 = vmatpush2.bf16.msra.mxu0 %v1237
        %1757 = vmatprep.subr.bf16.mxu0 0
        %1758 = vmatpush2.bf16.msra.mxu0 %v1236
        %1759 = vmatprep.subr.bf16.mxu0 0
        %1760 = vmatpush2.bf16.msra.mxu0 %v1235
        %1761 = vmatprep.subr.bf16.mxu0 0
        %1762 = vmatpush2.bf16.msra.mxu0 %v1234
        %1763 = vmatprep.subr.bf16.mxu0 0
        %1764 = vmatpush2.bf16.msra.mxu0 %v1233
        %1765 = vmatprep.subr.bf16.mxu0 0
        %1766 = vmatpush2.bf16.msra.mxu0 %v1232
        %1767 = vmatprep.subr.bf16.mxu0 0
        %1768 = vmatpush2.bf16.msra.mxu0 %v1231
        %1769 = vmatprep.mubr.bf16.mxu0 %v1730
        %1770 = vmatmul.mubr.bf16.gmra.mxu0 %v1729
        %v1771 = vpop.f32.mrf.mxu0
        %v1772 = vadd.f32 %v1093, %v1771
        %v1773 = vpop.f32.mrf.mxu0
        %v1774 = vpop.f32.mrf.mxu0
        %v1775 = vpop.f32.mrf.mxu0
        %1776 = vdwg.mxu0
        %1777 = vmatprep.subr.bf16.mxu0 0
        %1778 = vmatpush1.bf16.msra.mxu0 %v1246
        %1779 = vmatprep.subr.bf16.mxu0 0
        %1780 = vmatpush1.bf16.msra.mxu0 %v1245
        %1781 = vmatprep.subr.bf16.mxu0 0
        %1782 = vmatpush1.bf16.msra.mxu0 %v1244
        %1783 = vmatprep.subr.bf16.mxu0 0
        %1784 = vmatpush1.bf16.msra.mxu0 %v1243
        %1785 = vmatprep.subr.bf16.mxu0 0
        %1786 = vmatpush1.bf16.msra.mxu0 %v1242
        %1787 = vmatprep.subr.bf16.mxu0 0
        %1788 = vmatpush1.bf16.msra.mxu0 %v1241
        %1789 = vmatprep.subr.bf16.mxu0 0
        %1790 = vmatpush1.bf16.msra.mxu0 %v1240
        %1791 = vmatprep.subr.bf16.mxu0 0
        %1792 = vmatpush1.bf16.msra.mxu0 %v1239
        %1793 = vmatprep.subr.bf16.mxu0 0
        %1794 = vmatpush2.bf16.msra.mxu0 %v1254
        %1795 = vmatprep.subr.bf16.mxu0 0
        %1796 = vmatpush2.bf16.msra.mxu0 %v1253
        %1797 = vmatprep.subr.bf16.mxu0 0
        %1798 = vmatpush2.bf16.msra.mxu0 %v1252
        %1799 = vmatprep.subr.bf16.mxu0 0
        %1800 = vmatpush2.bf16.msra.mxu0 %v1251
        %1801 = vmatprep.subr.bf16.mxu0 0
        %1802 = vmatpush2.bf16.msra.mxu0 %v1250
        %1803 = vmatprep.subr.bf16.mxu0 0
        %1804 = vmatpush2.bf16.msra.mxu0 %v1249
        %1805 = vmatprep.subr.bf16.mxu0 0
        %1806 = vmatpush2.bf16.msra.mxu0 %v1248
        %1807 = vmatprep.subr.bf16.mxu0 0
        %1808 = vmatpush2.bf16.msra.mxu0 %v1247
        %1809 = vmatprep.mubr.bf16.mxu0 %v1732
        %1810 = vmatmul.mubr.bf16.gmra.mxu0 %v1731
        %v1811 = vpop.f32.mrf.mxu0
        %v1812 = vadd.f32 %v1772, %v1811
        %v1813 = vpop.f32.mrf.mxu0
        %v1814 = vpop.f32.mrf.mxu0
        %v1815 = vpop.f32.mrf.mxu0
        %1816 = vdwg.mxu0
        %v1817 = vmax.f32 %v1812, 0.0
        %v1818 = vpack.c.bf16 %v1817, %v1817
        %v1819 = vrot.slane %v1661, 1
        %v1820 = vor.u32 %v1658, %v1819
        %1821 = vrot.lane.b32.xlu0 %v1820, 32
        %v1822 = vpop.permute.xlu0 %1821
        %v1823 = vrot.slane %v1675, 1
        %v1824 = vor.u32 %v1672, %v1823
        %1825 = vrot.lane.b32.xlu0 %v1824, 32
        %v1826 = vpop.permute.xlu0 %1825
        %v1827 = vrot.slane %v1689, 1
        %v1828 = vor.u32 %v1686, %v1827
        %1829 = vrot.lane.b32.xlu0 %v1828, 32
        %v1830 = vpop.permute.xlu0 %1829
        %v1831 = vrot.slane %v1703, 1
        %v1832 = vor.u32 %v1700, %v1831
        %1833 = vrot.lane.b32.xlu0 %v1832, 32
        %v1834 = vpop.permute.xlu0 %1833
        %v1836 = vsel %vm1058, %v908, %v1822
        %v1837 = vsel %vm664, %v1836, %v1656
        %v1838 = vsel %vm1063, %v1837, %v1666
        %v1841 = vsel %vm1058, %v912, %v1826
        %v1842 = vsel %vm664, %v1841, %v1670
        %v1843 = vsel %vm1063, %v1842, %v1680
        %v1846 = vsel %vm1058, %v916, %v1830
        %v1847 = vsel %vm664, %v1846, %v1684
        %v1848 = vsel %vm1063, %v1847, %v1694
        %v1851 = vsel %vm1058, %v920, %v1834
        %v1852 = vsel %vm664, %v1851, %v1698
        %v1853 = vsel %vm1063, %v1852, %v1708
        %1855 = vmatprep.subr.bf16.mxu0 0
        %1856 = vmatpush1.bf16.msra.mxu0 %v1230
        %1857 = vmatprep.subr.bf16.mxu0 0
        %1858 = vmatpush1.bf16.msra.mxu0 %v1229
        %1859 = vmatprep.subr.bf16.mxu0 0
        %1860 = vmatpush1.bf16.msra.mxu0 %v1228
        %1861 = vmatprep.subr.bf16.mxu0 0
        %1862 = vmatpush1.bf16.msra.mxu0 %v1227
        %1863 = vmatprep.subr.bf16.mxu0 0
        %1864 = vmatpush1.bf16.msra.mxu0 %v1226
        %1865 = vmatprep.subr.bf16.mxu0 0
        %1866 = vmatpush1.bf16.msra.mxu0 %v1225
        %1867 = vmatprep.subr.bf16.mxu0 0
        %1868 = vmatpush1.bf16.msra.mxu0 %v1224
        %1869 = vmatprep.subr.bf16.mxu0 0
        %1870 = vmatpush1.bf16.msra.mxu0 %v1223
        %1871 = vmatprep.subr.bf16.mxu0 0
        %1872 = vmatpush2.bf16.msra.mxu0 %v1238
        %1873 = vmatprep.subr.bf16.mxu0 0
        %1874 = vmatpush2.bf16.msra.mxu0 %v1237
        %1875 = vmatprep.subr.bf16.mxu0 0
        %1876 = vmatpush2.bf16.msra.mxu0 %v1236
        %1877 = vmatprep.subr.bf16.mxu0 0
        %1878 = vmatpush2.bf16.msra.mxu0 %v1235
        %1879 = vmatprep.subr.bf16.mxu0 0
        %1880 = vmatpush2.bf16.msra.mxu0 %v1234
        %1881 = vmatprep.subr.bf16.mxu0 0
        %1882 = vmatpush2.bf16.msra.mxu0 %v1233
        %1883 = vmatprep.subr.bf16.mxu0 0
        %1884 = vmatpush2.bf16.msra.mxu0 %v1232
        %1885 = vmatprep.subr.bf16.mxu0 0
        %1886 = vmatpush2.bf16.msra.mxu0 %v1231
        %1887 = vmatprep.mubr.bf16.mxu0 %v1843
        %1888 = vmatmul.mubr.bf16.gmra.mxu0 %v1838
        %v1889 = vpop.f32.mrf.mxu0
        %v1890 = vadd.f32 %v1093, %v1889
        %v1891 = vpop.f32.mrf.mxu0
        %v1892 = vpop.f32.mrf.mxu0
        %v1893 = vpop.f32.mrf.mxu0
        %1894 = vdwg.mxu0
        %1895 = vmatprep.subr.bf16.mxu0 0
        %1896 = vmatpush1.bf16.msra.mxu0 %v1246
        %1897 = vmatprep.subr.bf16.mxu0 0
        %1898 = vmatpush1.bf16.msra.mxu0 %v1245
        %1899 = vmatprep.subr.bf16.mxu0 0
        %1900 = vmatpush1.bf16.msra.mxu0 %v1244
        %1901 = vmatprep.subr.bf16.mxu0 0
        %1902 = vmatpush1.bf16.msra.mxu0 %v1243
        %1903 = vmatprep.subr.bf16.mxu0 0
        %1904 = vmatpush1.bf16.msra.mxu0 %v1242
        %1905 = vmatprep.subr.bf16.mxu0 0
        %1906 = vmatpush1.bf16.msra.mxu0 %v1241
        %1907 = vmatprep.subr.bf16.mxu0 0
        %1908 = vmatpush1.bf16.msra.mxu0 %v1240
        %1909 = vmatprep.subr.bf16.mxu0 0
        %1910 = vmatpush1.bf16.msra.mxu0 %v1239
        %1911 = vmatprep.subr.bf16.mxu0 0
        %1912 = vmatpush2.bf16.msra.mxu0 %v1254
        %1913 = vmatprep.subr.bf16.mxu0 0
        %1914 = vmatpush2.bf16.msra.mxu0 %v1253
        %1915 = vmatprep.subr.bf16.mxu0 0
        %1916 = vmatpush2.bf16.msra.mxu0 %v1252
        %1917 = vmatprep.subr.bf16.mxu0 0
        %1918 = vmatpush2.bf16.msra.mxu0 %v1251
        %1919 = vmatprep.subr.bf16.mxu0 0
        %1920 = vmatpush2.bf16.msra.mxu0 %v1250
        %1921 = vmatprep.subr.bf16.mxu0 0
        %1922 = vmatpush2.bf16.msra.mxu0 %v1249
        %1923 = vmatprep.subr.bf16.mxu0 0
        %1924 = vmatpush2.bf16.msra.mxu0 %v1248
        %1925 = vmatprep.subr.bf16.mxu0 0
        %1926 = vmatpush2.bf16.msra.mxu0 %v1247
        %1927 = vmatprep.mubr.bf16.mxu0 %v1853
        %1928 = vmatmul.mubr.bf16.gmra.mxu0 %v1848
        %v1929 = vpop.f32.mrf.mxu0
        %v1930 = vadd.f32 %v1890, %v1929
        %v1931 = vpop.f32.mrf.mxu0
        %v1932 = vpop.f32.mrf.mxu0
        %v1933 = vpop.f32.mrf.mxu0
        %1934 = vdwg.mxu0
        %v1935 = vmax.f32 %v1930, 0.0
        %v1936 = vpack.c.bf16 %v1935, %v1935
        %v1938 = vrot.slane %v909, 4
        %1939 = vrot.lane.b32.xlu0 %v1938, 64
        %v1940 = vpop.permute.xlu0 %1939
        %v1942 = vshrl.u32 %v909, 16
        %v1944 = vrot.slane %v1942, 4
        %v1945 = vshll.u32 %v909, 16
        %v1947 = vrot.slane %v1945, 5
        %v1948 = vor.u32 %v1944, %v1947
        %1949 = vrot.lane.b32.xlu0 %v1948, 96
        %v1950 = vpop.permute.xlu0 %1949
        %v1952 = vrot.slane %v913, 4
        %1953 = vrot.lane.b32.xlu0 %v1952, 64
        %v1954 = vpop.permute.xlu0 %1953
        %v1956 = vshrl.u32 %v913, 16
        %v1958 = vrot.slane %v1956, 4
        %v1959 = vshll.u32 %v913, 16
        %v1961 = vrot.slane %v1959, 5
        %v1962 = vor.u32 %v1958, %v1961
        %1963 = vrot.lane.b32.xlu0 %v1962, 96
        %v1964 = vpop.permute.xlu0 %1963
        %v1966 = vrot.slane %v917, 4
        %1967 = vrot.lane.b32.xlu0 %v1966, 64
        %v1968 = vpop.permute.xlu0 %1967
        %v1970 = vshrl.u32 %v917, 16
        %v1972 = vrot.slane %v1970, 4
        %v1973 = vshll.u32 %v917, 16
        %v1975 = vrot.slane %v1973, 5
        %v1976 = vor.u32 %v1972, %v1975
        %1977 = vrot.lane.b32.xlu0 %v1976, 96
        %v1978 = vpop.permute.xlu0 %1977
        %v1980 = vrot.slane %v921, 4
        %1981 = vrot.lane.b32.xlu0 %v1980, 64
        %v1982 = vpop.permute.xlu0 %1981
        %v1984 = vshrl.u32 %v921, 16
        %v1986 = vrot.slane %v1984, 4
        %v1987 = vshll.u32 %v921, 16
        %v1989 = vrot.slane %v1987, 5
        %v1990 = vor.u32 %v1986, %v1989
        %1991 = vrot.lane.b32.xlu0 %v1990, 96
        %v1992 = vpop.permute.xlu0 %1991
        %v1994 = vsel %vm664, %v1836, %v1940
        %v1996 = vsel %vm1063, %v1994, %v1950
        %v1998 = vsel %vm664, %v1841, %v1954
        %v2000 = vsel %vm1063, %v1998, %v1964
        %v2002 = vsel %vm664, %v1846, %v1968
        %v2004 = vsel %vm1063, %v2002, %v1978
        %v2006 = vsel %vm664, %v1851, %v1982
        %v2008 = vsel %vm1063, %v2006, %v1992
        %v2013 = vrot.slane %v1996, 4
        %v2014 = vrot.slane %v2000, 4
        %v2015 = vrot.slane %v2004, 4
        %v2016 = vrot.slane %v2008, 4
        %2021 = vmatprep.subr.bf16.mxu0 0
        %2022 = vmatpush1.bf16.msra.mxu0 %v1230
        %2023 = vmatprep.subr.bf16.mxu0 0
        %2024 = vmatpush1.bf16.msra.mxu0 %v1229
        %2025 = vmatprep.subr.bf16.mxu0 0
        %2026 = vmatpush1.bf16.msra.mxu0 %v1228
        %2027 = vmatprep.subr.bf16.mxu0 0
        %2028 = vmatpush1.bf16.msra.mxu0 %v1227
        %2029 = vmatprep.subr.bf16.mxu0 0
        %2030 = vmatpush1.bf16.msra.mxu0 %v1226
        %2031 = vmatprep.subr.bf16.mxu0 0
        %2032 = vmatpush1.bf16.msra.mxu0 %v1225
        %2033 = vmatprep.subr.bf16.mxu0 0
        %2034 = vmatpush1.bf16.msra.mxu0 %v1224
        %2035 = vmatprep.subr.bf16.mxu0 0
        %2036 = vmatpush1.bf16.msra.mxu0 %v1223
        %2037 = vmatprep.subr.bf16.mxu0 0
        %2038 = vmatpush2.bf16.msra.mxu0 %v1238
        %2039 = vmatprep.subr.bf16.mxu0 0
        %2040 = vmatpush2.bf16.msra.mxu0 %v1237
        %2041 = vmatprep.subr.bf16.mxu0 0
        %2042 = vmatpush2.bf16.msra.mxu0 %v1236
        %2043 = vmatprep.subr.bf16.mxu0 0
        %2044 = vmatpush2.bf16.msra.mxu0 %v1235
        %2045 = vmatprep.subr.bf16.mxu0 0
        %2046 = vmatpush2.bf16.msra.mxu0 %v1234
        %2047 = vmatprep.subr.bf16.mxu0 0
        %2048 = vmatpush2.bf16.msra.mxu0 %v1233
        %2049 = vmatprep.subr.bf16.mxu0 0
        %2050 = vmatpush2.bf16.msra.mxu0 %v1232
        %2051 = vmatprep.subr.bf16.mxu0 0
        %2052 = vmatpush2.bf16.msra.mxu0 %v1231
        %2053 = vmatprep.mubr.bf16.mxu0 %v2014
        %2054 = vmatmul.mubr.bf16.gmra.mxu0 %v2013
        %v2055 = vpop.f32.mrf.mxu0
        %v2056 = vadd.f32 %v1093, %v2055
        %v2057 = vpop.f32.mrf.mxu0
        %v2058 = vpop.f32.mrf.mxu0
        %v2059 = vpop.f32.mrf.mxu0
        %2060 = vdwg.mxu0
        %2061 = vmatprep.subr.bf16.mxu0 0
        %2062 = vmatpush1.bf16.msra.mxu0 %v1246
        %2063 = vmatprep.subr.bf16.mxu0 0
        %2064 = vmatpush1.bf16.msra.mxu0 %v1245
        %2065 = vmatprep.subr.bf16.mxu0 0
        %2066 = vmatpush1.bf16.msra.mxu0 %v1244
        %2067 = vmatprep.subr.bf16.mxu0 0
        %2068 = vmatpush1.bf16.msra.mxu0 %v1243
        %2069 = vmatprep.subr.bf16.mxu0 0
        %2070 = vmatpush1.bf16.msra.mxu0 %v1242
        %2071 = vmatprep.subr.bf16.mxu0 0
        %2072 = vmatpush1.bf16.msra.mxu0 %v1241
        %2073 = vmatprep.subr.bf16.mxu0 0
        %2074 = vmatpush1.bf16.msra.mxu0 %v1240
        %2075 = vmatprep.subr.bf16.mxu0 0
        %2076 = vmatpush1.bf16.msra.mxu0 %v1239
        %2077 = vmatprep.subr.bf16.mxu0 0
        %2078 = vmatpush2.bf16.msra.mxu0 %v1254
        %2079 = vmatprep.subr.bf16.mxu0 0
        %2080 = vmatpush2.bf16.msra.mxu0 %v1253
        %2081 = vmatprep.subr.bf16.mxu0 0
        %2082 = vmatpush2.bf16.msra.mxu0 %v1252
        %2083 = vmatprep.subr.bf16.mxu0 0
        %2084 = vmatpush2.bf16.msra.mxu0 %v1251
        %2085 = vmatprep.subr.bf16.mxu0 0
        %2086 = vmatpush2.bf16.msra.mxu0 %v1250
        %2087 = vmatprep.subr.bf16.mxu0 0
        %2088 = vmatpush2.bf16.msra.mxu0 %v1249
        %2089 = vmatprep.subr.bf16.mxu0 0
        %2090 = vmatpush2.bf16.msra.mxu0 %v1248
        %2091 = vmatprep.subr.bf16.mxu0 0
        %2092 = vmatpush2.bf16.msra.mxu0 %v1247
        %2093 = vmatprep.mubr.bf16.mxu0 %v2016
        %2094 = vmatmul.mubr.bf16.gmra.mxu0 %v2015
        %v2095 = vpop.f32.mrf.mxu0
        %v2096 = vadd.f32 %v2056, %v2095
        %v2097 = vpop.f32.mrf.mxu0
        %v2098 = vpop.f32.mrf.mxu0
        %v2099 = vpop.f32.mrf.mxu0
        %2100 = vdwg.mxu0
        %v2101 = vmax.f32 %v2096, 0.0
        %v2102 = vpack.c.bf16 %v2101, %v2101
        %v2103 = vld [vmem:[%s5] sm:$0xf]
        %v2104 = vld [vmem:[%s5 + $0x4] sm:$0xf]
        %v2105 = vld [vmem:[%s5 + $0x8] sm:$0xf]
        %v2106 = vld [vmem:[%s5 + $0xc] sm:$0xf]
        %v2107 = vld [vmem:[%s5 + $0x10] sm:$0xf]
        %v2108 = vld [vmem:[%s5 + $0x14] sm:$0xf]
        %v2109 = vld [vmem:[%s5 + $0x18] sm:$0xf]
        %v2110 = vld [vmem:[%s5 + $0x1c] sm:$0xf]
        %v2111 = vld [vmem:[%s5 + $0x20] sm:$0xf]
        %v2112 = vld [vmem:[%s5 + $0x24] sm:$0xf]
        %v2113 = vld [vmem:[%s5 + $0x28] sm:$0xf]
        %v2114 = vld [vmem:[%s5 + $0x2c] sm:$0xf]
        %v2115 = vld [vmem:[%s5 + $0x30] sm:$0xf]
        %v2116 = vld [vmem:[%s5 + $0x34] sm:$0xf]
        %v2117 = vld [vmem:[%s5 + $0x38] sm:$0xf]
        %v2118 = vld [vmem:[%s5 + $0x3c] sm:$0xf]
        %v2119 = vld [vmem:[%s5 + $0x40] sm:$0xf]
        %v2120 = vld [vmem:[%s5 + $0x44] sm:$0xf]
        %v2121 = vld [vmem:[%s5 + $0x48] sm:$0xf]
        %v2122 = vld [vmem:[%s5 + $0x4c] sm:$0xf]
        %v2123 = vld [vmem:[%s5 + $0x50] sm:$0xf]
        %v2124 = vld [vmem:[%s5 + $0x54] sm:$0xf]
        %v2125 = vld [vmem:[%s5 + $0x58] sm:$0xf]
        %v2126 = vld [vmem:[%s5 + $0x5c] sm:$0xf]
        %v2127 = vld [vmem:[%s5 + $0x60] sm:$0xf]
        %v2128 = vld [vmem:[%s5 + $0x64] sm:$0xf]
        %v2129 = vld [vmem:[%s5 + $0x68] sm:$0xf]
        %v2130 = vld [vmem:[%s5 + $0x6c] sm:$0xf]
        %v2131 = vld [vmem:[%s5 + $0x70] sm:$0xf]
        %v2132 = vld [vmem:[%s5 + $0x74] sm:$0xf]
        %v2133 = vld [vmem:[%s5 + $0x78] sm:$0xf]
        %v2134 = vld [vmem:[%s5 + $0x7c] sm:$0xf]
        %v2135 = vld [vmem:[%s5 + $0x80] sm:$0xf]
        %v2136 = vld [vmem:[%s5 + $0x84] sm:$0xf]
        %v2137 = vld [vmem:[%s5 + $0x88] sm:$0xf]
        %v2138 = vld [vmem:[%s5 + $0x8c] sm:$0xf]
        %v2139 = vld [vmem:[%s5 + $0x90] sm:$0xf]
        %v2140 = vld [vmem:[%s5 + $0x94] sm:$0xf]
        %v2141 = vld [vmem:[%s5 + $0x98] sm:$0xf]
        %v2142 = vld [vmem:[%s5 + $0x9c] sm:$0xf]
        %v2143 = vld [vmem:[%s5 + $0xa0] sm:$0xf]
        %v2144 = vld [vmem:[%s5 + $0xa4] sm:$0xf]
        %v2145 = vld [vmem:[%s5 + $0xa8] sm:$0xf]
        %v2146 = vld [vmem:[%s5 + $0xac] sm:$0xf]
        %v2147 = vld [vmem:[%s5 + $0xb0] sm:$0xf]
        %v2148 = vld [vmem:[%s5 + $0xb4] sm:$0xf]
        %v2149 = vld [vmem:[%s5 + $0xb8] sm:$0xf]
        %v2150 = vld [vmem:[%s5 + $0xbc] sm:$0xf]
        %v2151 = vld [vmem:[%s5 + $0xc0] sm:$0xf]
        %v2152 = vld [vmem:[%s5 + $0xc4] sm:$0xf]
        %v2153 = vld [vmem:[%s5 + $0xc8] sm:$0xf]
        %v2154 = vld [vmem:[%s5 + $0xcc] sm:$0xf]
        %v2155 = vld [vmem:[%s5 + $0xd0] sm:$0xf]
        %v2156 = vld [vmem:[%s5 + $0xd4] sm:$0xf]
        %v2157 = vld [vmem:[%s5 + $0xd8] sm:$0xf]
        %v2158 = vld [vmem:[%s5 + $0xdc] sm:$0xf]
        %v2159 = vld [vmem:[%s5 + $0xe0] sm:$0xf]
        %v2160 = vld [vmem:[%s5 + $0xe4] sm:$0xf]
        %v2161 = vld [vmem:[%s5 + $0xe8] sm:$0xf]
        %v2162 = vld [vmem:[%s5 + $0xec] sm:$0xf]
        %v2163 = vld [vmem:[%s5 + $0xf0] sm:$0xf]
        %v2164 = vld [vmem:[%s5 + $0xf4] sm:$0xf]
        %v2165 = vld [vmem:[%s5 + $0xf8] sm:$0xf]
        %v2166 = vld [vmem:[%s5 + $0xfc] sm:$0xf]
        %v2167 = vld [vmem:[%s5 + $0x100] sm:$0xf]
        %v2168 = vld [vmem:[%s5 + $0x104] sm:$0xf]
        %v2169 = vld [vmem:[%s5 + $0x108] sm:$0xf]
        %v2170 = vld [vmem:[%s5 + $0x10c] sm:$0xf]
        %v2171 = vld [vmem:[%s5 + $0x110] sm:$0xf]
        %v2172 = vld [vmem:[%s5 + $0x114] sm:$0xf]
        %v2173 = vld [vmem:[%s5 + $0x118] sm:$0xf]
        %v2174 = vld [vmem:[%s5 + $0x11c] sm:$0xf]
        %v2176 = vshrl.u32 %v1368, 16
        %v2178 = vshll.u32 %v1368, 16
        %v2180 = vrot.slane %v2178, 1
        %v2181 = vor.u32 %v2176, %v2180
        %2182 = vrot.lane.b32.xlu0 %v2181, 64
        %v2183 = vpop.permute.xlu0 %2182
        %v2185 = vrot.slane %v1368, 1
        %2187 = vrot.lane.b32.xlu0 %v1534, 64
        %v2188 = vpop.permute.xlu0 %2187
        %v2190 = vshrl.u32 %v1534, 16
        %v2192 = vshll.u32 %v1534, 16
        %v2194 = vrot.slane %v2192, 1
        %v2195 = vor.u32 %v2190, %v2194
        %v2196 = vrot.slane %v1534, 1
        %2197 = vrot.lane.b32.xlu0 %v2196, 64
        %v2198 = vpop.permute.xlu0 %2197
        %v2200 = vshrl.u32 %v1652, 16
        %v2202 = vshll.u32 %v1652, 16
        %v2204 = vrot.slane %v2202, 1
        %v2205 = vor.u32 %v2200, %v2204
        %2206 = vrot.lane.b32.xlu0 %v2205, 64
        %v2207 = vpop.permute.xlu0 %2206
        %v2209 = vrot.slane %v1652, 1
        %v2211 = vsel %vm664, %v1368, %v2183
        %v2215 = vsel %vm664, %v2185, %v2188
        %v2219 = vsel %vm664, %v2195, %v2198
        %v2222 = vsel %vm664, %v1652, %v2207
        %v2224 = vld [vmem:[%s6] sm:$0x1]
        %v2226 = vlaneseq
        %v2227 = vshrl.u32 %v2226, 7
        %v2228 = vsub.s32 0, %v2227
        %v2229 = vrot.slane %v2224, %v2228
        %v2303 = vunpack.c.l.b16 %v2103
        %v2304 = vunpack.c.l.b16 %v2104
        %v2305 = vunpack.c.l.b16 %v2105
        %v2306 = vunpack.c.l.b16 %v2106
        %v2307 = vunpack.c.l.b16 %v2107
        %v2308 = vunpack.c.l.b16 %v2108
        %v2309 = vunpack.c.l.b16 %v2109
        %v2310 = vunpack.c.l.b16 %v2110
        %v2311 = vunpack.c.l.b16 %v2111
        %v2312 = vunpack.c.l.b16 %v2112
        %v2313 = vunpack.c.l.b16 %v2113
        %v2314 = vunpack.c.l.b16 %v2114
        %v2315 = vunpack.c.l.b16 %v2115
        %v2316 = vunpack.c.l.b16 %v2116
        %v2317 = vunpack.c.l.b16 %v2117
        %v2318 = vunpack.c.l.b16 %v2118
        %v2319 = vunpack.c.l.b16 %v2119
        %v2320 = vunpack.c.l.b16 %v2120
        %v2321 = vunpack.c.l.b16 %v2121
        %v2322 = vunpack.c.l.b16 %v2122
        %v2323 = vunpack.c.l.b16 %v2123
        %v2324 = vunpack.c.l.b16 %v2124
        %v2325 = vunpack.c.l.b16 %v2125
        %v2326 = vunpack.c.l.b16 %v2126
        %v2327 = vunpack.c.l.b16 %v2127
        %v2328 = vunpack.c.l.b16 %v2128
        %v2329 = vunpack.c.l.b16 %v2129
        %v2330 = vunpack.c.l.b16 %v2130
        %v2331 = vunpack.c.l.b16 %v2131
        %v2332 = vunpack.c.l.b16 %v2132
        %v2333 = vunpack.c.l.b16 %v2133
        %v2334 = vunpack.c.l.b16 %v2134
        %v2335 = vunpack.c.l.b16 %v2135
        %v2336 = vunpack.c.l.b16 %v2136
        %v2337 = vunpack.c.l.b16 %v2137
        %v2338 = vunpack.c.l.b16 %v2138
        %v2339 = vunpack.c.l.b16 %v2139
        %v2340 = vunpack.c.l.b16 %v2140
        %v2341 = vunpack.c.l.b16 %v2141
        %v2342 = vunpack.c.l.b16 %v2142
        %v2343 = vunpack.c.l.b16 %v2143
        %v2344 = vunpack.c.l.b16 %v2144
        %v2345 = vunpack.c.l.b16 %v2145
        %v2346 = vunpack.c.l.b16 %v2146
        %v2347 = vunpack.c.l.b16 %v2147
        %v2348 = vunpack.c.l.b16 %v2148
        %v2349 = vunpack.c.l.b16 %v2149
        %v2350 = vunpack.c.l.b16 %v2150
        %v2351 = vunpack.c.l.b16 %v2151
        %v2352 = vunpack.c.l.b16 %v2152
        %v2353 = vunpack.c.l.b16 %v2153
        %v2354 = vunpack.c.l.b16 %v2154
        %v2355 = vunpack.c.l.b16 %v2155
        %v2356 = vunpack.c.l.b16 %v2156
        %v2357 = vunpack.c.l.b16 %v2157
        %v2358 = vunpack.c.l.b16 %v2158
        %v2359 = vunpack.c.l.b16 %v2159
        %v2360 = vunpack.c.l.b16 %v2160
        %v2361 = vunpack.c.l.b16 %v2161
        %v2362 = vunpack.c.l.b16 %v2162
        %v2363 = vunpack.c.l.b16 %v2163
        %v2364 = vunpack.c.l.b16 %v2164
        %v2365 = vunpack.c.l.b16 %v2165
        %v2366 = vunpack.c.l.b16 %v2166
        %v2367 = vunpack.c.l.b16 %v2167
        %v2368 = vunpack.c.l.b16 %v2168
        %v2369 = vunpack.c.l.b16 %v2169
        %v2370 = vunpack.c.l.b16 %v2170
        %v2371 = vunpack.c.l.b16 %v2171
        %v2372 = vunpack.c.l.b16 %v2172
        %v2373 = vunpack.c.l.b16 %v2173
        %v2374 = vunpack.c.l.b16 %v2174
        %v2375 = vpack.c.b16 %v2304, %v2303
        %v2376 = vpack.c.b16 %v2306, %v2305
        %v2377 = vpack.c.b16 %v2308, %v2307
        %v2378 = vpack.c.b16 %v2310, %v2309
        %v2379 = vpack.c.b16 %v2312, %v2311
        %v2380 = vpack.c.b16 %v2314, %v2313
        %v2381 = vpack.c.b16 %v2316, %v2315
        %v2382 = vpack.c.b16 %v2318, %v2317
        %v2383 = vpack.c.b16 %v2320, %v2319
        %v2384 = vpack.c.b16 %v2322, %v2321
        %v2385 = vpack.c.b16 %v2324, %v2323
        %v2386 = vpack.c.b16 %v2326, %v2325
        %v2387 = vpack.c.b16 %v2328, %v2327
        %v2388 = vpack.c.b16 %v2330, %v2329
        %v2389 = vpack.c.b16 %v2332, %v2331
        %v2390 = vpack.c.b16 %v2334, %v2333
        %v2391 = vpack.c.b16 %v2336, %v2335
        %v2392 = vpack.c.b16 %v2338, %v2337
        %v2393 = vpack.c.b16 %v2340, %v2339
        %v2394 = vpack.c.b16 %v2342, %v2341
        %v2395 = vpack.c.b16 %v2344, %v2343
        %v2396 = vpack.c.b16 %v2346, %v2345
        %v2397 = vpack.c.b16 %v2348, %v2347
        %v2398 = vpack.c.b16 %v2350, %v2349
        %v2399 = vpack.c.b16 %v2352, %v2351
        %v2400 = vpack.c.b16 %v2354, %v2353
        %v2401 = vpack.c.b16 %v2356, %v2355
        %v2402 = vpack.c.b16 %v2358, %v2357
        %v2403 = vpack.c.b16 %v2360, %v2359
        %v2404 = vpack.c.b16 %v2362, %v2361
        %v2405 = vpack.c.b16 %v2364, %v2363
        %v2406 = vpack.c.b16 %v2366, %v2365
        %v2407 = vpack.c.b16 %v2368, %v2367
        %v2408 = vpack.c.b16 %v2370, %v2369
        %v2409 = vpack.c.b16 %v2372, %v2371
        %v2410 = vpack.c.b16 %v2374, %v2373
        %v2448 = vsel %vm664, %v2209, 0
        %2450 = vmatprep.subr.bf16.mxu0 0
        %2451 = vmatpush1.bf16.msra.mxu0 %v2382
        %2452 = vmatprep.subr.bf16.mxu0 0
        %2453 = vmatpush1.bf16.msra.mxu0 %v2381
        %2454 = vmatprep.subr.bf16.mxu0 0
        %2455 = vmatpush1.bf16.msra.mxu0 %v2380
        %2456 = vmatprep.subr.bf16.mxu0 0
        %2457 = vmatpush1.bf16.msra.mxu0 %v2379
        %2458 = vmatprep.subr.bf16.mxu0 0
        %2459 = vmatpush1.bf16.msra.mxu0 %v2378
        %2460 = vmatprep.subr.bf16.mxu0 0
        %2461 = vmatpush1.bf16.msra.mxu0 %v2377
        %2462 = vmatprep.subr.bf16.mxu0 0
        %2463 = vmatpush1.bf16.msra.mxu0 %v2376
        %2464 = vmatprep.subr.bf16.mxu0 0
        %2465 = vmatpush1.bf16.msra.mxu0 %v2375
        %2466 = vmatprep.subr.bf16.mxu0 0
        %2467 = vmatpush2.bf16.msra.mxu0 %v2390
        %2468 = vmatprep.subr.bf16.mxu0 0
        %2469 = vmatpush2.bf16.msra.mxu0 %v2389
        %2470 = vmatprep.subr.bf16.mxu0 0
        %2471 = vmatpush2.bf16.msra.mxu0 %v2388
        %2472 = vmatprep.subr.bf16.mxu0 0
        %2473 = vmatpush2.bf16.msra.mxu0 %v2387
        %2474 = vmatprep.subr.bf16.mxu0 0
        %2475 = vmatpush2.bf16.msra.mxu0 %v2386
        %2476 = vmatprep.subr.bf16.mxu0 0
        %2477 = vmatpush2.bf16.msra.mxu0 %v2385
        %2478 = vmatprep.subr.bf16.mxu0 0
        %2479 = vmatpush2.bf16.msra.mxu0 %v2384
        %2480 = vmatprep.subr.bf16.mxu0 0
        %2481 = vmatpush2.bf16.msra.mxu0 %v2383
        %2482 = vmatprep.mubr.bf16.mxu0 %v2215
        %2483 = vmatmul.mubr.bf16.gmra.mxu0 %v2211
        %v2484 = vpop.f32.mrf.mxu0
        %v2485 = vadd.f32 %v2229, %v2484
        %v2486 = vpop.f32.mrf.mxu0
        %v2487 = vpop.f32.mrf.mxu0
        %v2488 = vpop.f32.mrf.mxu0
        %2489 = vdwg.mxu0
        %2490 = vmatprep.subr.bf16.mxu0 0
        %2491 = vmatpush1.bf16.msra.mxu0 %v2398
        %2492 = vmatprep.subr.bf16.mxu0 0
        %2493 = vmatpush1.bf16.msra.mxu0 %v2397
        %2494 = vmatprep.subr.bf16.mxu0 0
        %2495 = vmatpush1.bf16.msra.mxu0 %v2396
        %2496 = vmatprep.subr.bf16.mxu0 0
        %2497 = vmatpush1.bf16.msra.mxu0 %v2395
        %2498 = vmatprep.subr.bf16.mxu0 0
        %2499 = vmatpush1.bf16.msra.mxu0 %v2394
        %2500 = vmatprep.subr.bf16.mxu0 0
        %2501 = vmatpush1.bf16.msra.mxu0 %v2393
        %2502 = vmatprep.subr.bf16.mxu0 0
        %2503 = vmatpush1.bf16.msra.mxu0 %v2392
        %2504 = vmatprep.subr.bf16.mxu0 0
        %2505 = vmatpush1.bf16.msra.mxu0 %v2391
        %2506 = vmatprep.subr.bf16.mxu0 0
        %2507 = vmatpush2.bf16.msra.mxu0 %v2406
        %2508 = vmatprep.subr.bf16.mxu0 0
        %2509 = vmatpush2.bf16.msra.mxu0 %v2405
        %2510 = vmatprep.subr.bf16.mxu0 0
        %2511 = vmatpush2.bf16.msra.mxu0 %v2404
        %2512 = vmatprep.subr.bf16.mxu0 0
        %2513 = vmatpush2.bf16.msra.mxu0 %v2403
        %2514 = vmatprep.subr.bf16.mxu0 0
        %2515 = vmatpush2.bf16.msra.mxu0 %v2402
        %2516 = vmatprep.subr.bf16.mxu0 0
        %2517 = vmatpush2.bf16.msra.mxu0 %v2401
        %2518 = vmatprep.subr.bf16.mxu0 0
        %2519 = vmatpush2.bf16.msra.mxu0 %v2400
        %2520 = vmatprep.subr.bf16.mxu0 0
        %2521 = vmatpush2.bf16.msra.mxu0 %v2399
        %2522 = vmatprep.mubr.bf16.mxu0 %v2222
        %2523 = vmatmul.mubr.bf16.gmra.mxu0 %v2219
        %v2524 = vpop.f32.mrf.mxu0
        %v2525 = vadd.f32 %v2485, %v2524
        %v2526 = vpop.f32.mrf.mxu0
        %v2527 = vpop.f32.mrf.mxu0
        %v2528 = vpop.f32.mrf.mxu0
        %2529 = vdwg.mxu0
        %2530 = vmatprep.subr.bf16.mxu0 0
        %2531 = vmatpush1.bf16.msra.mxu0 0
        %2532 = vmatprep.subr.bf16.mxu0 0
        %2533 = vmatpush1.bf16.msra.mxu0 0
        %2534 = vmatprep.subr.bf16.mxu0 0
        %2535 = vmatpush1.bf16.msra.mxu0 0
        %2536 = vmatprep.subr.bf16.mxu0 0
        %2537 = vmatpush1.bf16.msra.mxu0 0
        %2538 = vmatprep.subr.bf16.mxu0 0
        %2539 = vmatpush1.bf16.msra.mxu0 %v2410
        %2540 = vmatprep.subr.bf16.mxu0 0
        %2541 = vmatpush1.bf16.msra.mxu0 %v2409
        %2542 = vmatprep.subr.bf16.mxu0 0
        %2543 = vmatpush1.bf16.msra.mxu0 %v2408
        %2544 = vmatprep.subr.bf16.mxu0 0
        %2545 = vmatpush1.bf16.msra.mxu0 %v2407
        %2546 = vmatprep.subr.bf16.mxu0 0
        %2547 = vmatpush2.bf16.msra.mxu0 0
        %2548 = vmatprep.subr.bf16.mxu0 0
        %2549 = vmatpush2.bf16.msra.mxu0 0
        %2550 = vmatprep.subr.bf16.mxu0 0
        %2551 = vmatpush2.bf16.msra.mxu0 0
        %2552 = vmatprep.subr.bf16.mxu0 0
        %2553 = vmatpush2.bf16.msra.mxu0 0
        %2554 = vmatprep.subr.bf16.mxu0 0
        %2555 = vmatpush2.bf16.msra.mxu0 0
        %2556 = vmatprep.subr.bf16.mxu0 0
        %2557 = vmatpush2.bf16.msra.mxu0 0
        %2558 = vmatprep.subr.bf16.mxu0 0
        %2559 = vmatpush2.bf16.msra.mxu0 0
        %2560 = vmatprep.subr.bf16.mxu0 0
        %2561 = vmatpush2.bf16.msra.mxu0 0
        %2562 = vmatprep.mubr.bf16.mxu0 0
        %2563 = vmatmul.mubr.bf16.gmra.mxu0 %v2448
        %v2564 = vpop.f32.mrf.mxu0
        %v2565 = vadd.f32 %v2525, %v2564
        %v2566 = vpop.f32.mrf.mxu0
        %v2567 = vpop.f32.mrf.mxu0
        %v2568 = vpop.f32.mrf.mxu0
        %2569 = vdwg.mxu0
        %v2570 = vmax.f32 %v2565, 0.0
        %v2571 = vpack.c.bf16 %v2570, %v2570
        %2572 = vrot.lane.b32.xlu0 %v2195, 64
        %v2573 = vpop.permute.xlu0 %2572
        %2574 = vrot.lane.b32.xlu0 %v1652, 64
        %v2575 = vpop.permute.xlu0 %2574
        %2576 = vrot.lane.b32.xlu0 %v2209, 64
        %v2577 = vpop.permute.xlu0 %2576
        %v2579 = vshrl.u32 %v1818, 16
        %v2581 = vshll.u32 %v1818, 16
        %v2583 = vrot.slane %v2581, 1
        %v2584 = vor.u32 %v2579, %v2583
        %2585 = vrot.lane.b32.xlu0 %v2584, 64
        %v2586 = vpop.permute.xlu0 %2585
        %v2588 = vrot.slane %v1818, 1
        %v2590 = vsel %vm664, %v1534, %v2573
        %v2594 = vsel %vm664, %v2196, %v2575
        %v2598 = vsel %vm664, %v2205, %v2577
        %v2601 = vsel %vm664, %v1818, %v2586
        %v2604 = vsel %vm664, %v2588, 0
        %2606 = vmatprep.subr.bf16.mxu0 0
        %2607 = vmatpush1.bf16.msra.mxu0 %v2382
        %2608 = vmatprep.subr.bf16.mxu0 0
        %2609 = vmatpush1.bf16.msra.mxu0 %v2381
        %2610 = vmatprep.subr.bf16.mxu0 0
        %2611 = vmatpush1.bf16.msra.mxu0 %v2380
        %2612 = vmatprep.subr.bf16.mxu0 0
        %2613 = vmatpush1.bf16.msra.mxu0 %v2379
        %2614 = vmatprep.subr.bf16.mxu0 0
        %2615 = vmatpush1.bf16.msra.mxu0 %v2378
        %2616 = vmatprep.subr.bf16.mxu0 0
        %2617 = vmatpush1.bf16.msra.mxu0 %v2377
        %2618 = vmatprep.subr.bf16.mxu0 0
        %2619 = vmatpush1.bf16.msra.mxu0 %v2376
        %2620 = vmatprep.subr.bf16.mxu0 0
        %2621 = vmatpush1.bf16.msra.mxu0 %v2375
        %2622 = vmatprep.subr.bf16.mxu0 0
        %2623 = vmatpush2.bf16.msra.mxu0 %v2390
        %2624 = vmatprep.subr.bf16.mxu0 0
        %2625 = vmatpush2.bf16.msra.mxu0 %v2389
        %2626 = vmatprep.subr.bf16.mxu0 0
        %2627 = vmatpush2.bf16.msra.mxu0 %v2388
        %2628 = vmatprep.subr.bf16.mxu0 0
        %2629 = vmatpush2.bf16.msra.mxu0 %v2387
        %2630 = vmatprep.subr.bf16.mxu0 0
        %2631 = vmatpush2.bf16.msra.mxu0 %v2386
        %2632 = vmatprep.subr.bf16.mxu0 0
        %2633 = vmatpush2.bf16.msra.mxu0 %v2385
        %2634 = vmatprep.subr.bf16.mxu0 0
        %2635 = vmatpush2.bf16.msra.mxu0 %v2384
        %2636 = vmatprep.subr.bf16.mxu0 0
        %2637 = vmatpush2.bf16.msra.mxu0 %v2383
        %2638 = vmatprep.mubr.bf16.mxu0 %v2594
        %2639 = vmatmul.mubr.bf16.gmra.mxu0 %v2590
        %v2640 = vpop.f32.mrf.mxu0
        %v2641 = vadd.f32 %v2229, %v2640
        %v2642 = vpop.f32.mrf.mxu0
        %v2643 = vpop.f32.mrf.mxu0
        %v2644 = vpop.f32.mrf.mxu0
        %2645 = vdwg.mxu0
        %2646 = vmatprep.subr.bf16.mxu0 0
        %2647 = vmatpush1.bf16.msra.mxu0 %v2398
        %2648 = vmatprep.subr.bf16.mxu0 0
        %2649 = vmatpush1.bf16.msra.mxu0 %v2397
        %2650 = vmatprep.subr.bf16.mxu0 0
        %2651 = vmatpush1.bf16.msra.mxu0 %v2396
        %2652 = vmatprep.subr.bf16.mxu0 0
        %2653 = vmatpush1.bf16.msra.mxu0 %v2395
        %2654 = vmatprep.subr.bf16.mxu0 0
        %2655 = vmatpush1.bf16.msra.mxu0 %v2394
        %2656 = vmatprep.subr.bf16.mxu0 0
        %2657 = vmatpush1.bf16.msra.mxu0 %v2393
        %2658 = vmatprep.subr.bf16.mxu0 0
        %2659 = vmatpush1.bf16.msra.mxu0 %v2392
        %2660 = vmatprep.subr.bf16.mxu0 0
        %2661 = vmatpush1.bf16.msra.mxu0 %v2391
        %2662 = vmatprep.subr.bf16.mxu0 0
        %2663 = vmatpush2.bf16.msra.mxu0 %v2406
        %2664 = vmatprep.subr.bf16.mxu0 0
        %2665 = vmatpush2.bf16.msra.mxu0 %v2405
        %2666 = vmatprep.subr.bf16.mxu0 0
        %2667 = vmatpush2.bf16.msra.mxu0 %v2404
        %2668 = vmatprep.subr.bf16.mxu0 0
        %2669 = vmatpush2.bf16.msra.mxu0 %v2403
        %2670 = vmatprep.subr.bf16.mxu0 0
        %2671 = vmatpush2.bf16.msra.mxu0 %v2402
        %2672 = vmatprep.subr.bf16.mxu0 0
        %2673 = vmatpush2.bf16.msra.mxu0 %v2401
        %2674 = vmatprep.subr.bf16.mxu0 0
        %2675 = vmatpush2.bf16.msra.mxu0 %v2400
        %2676 = vmatprep.subr.bf16.mxu0 0
        %2677 = vmatpush2.bf16.msra.mxu0 %v2399
        %2678 = vmatprep.mubr.bf16.mxu0 %v2601
        %2679 = vmatmul.mubr.bf16.gmra.mxu0 %v2598
        %v2680 = vpop.f32.mrf.mxu0
        %v2681 = vadd.f32 %v2641, %v2680
        %v2682 = vpop.f32.mrf.mxu0
        %v2683 = vpop.f32.mrf.mxu0
        %v2684 = vpop.f32.mrf.mxu0
        %2685 = vdwg.mxu0
        %2686 = vmatprep.subr.bf16.mxu0 0
        %2687 = vmatpush1.bf16.msra.mxu0 0
        %2688 = vmatprep.subr.bf16.mxu0 0
        %2689 = vmatpush1.bf16.msra.mxu0 0
        %2690 = vmatprep.subr.bf16.mxu0 0
        %2691 = vmatpush1.bf16.msra.mxu0 0
        %2692 = vmatprep.subr.bf16.mxu0 0
        %2693 = vmatpush1.bf16.msra.mxu0 0
        %2694 = vmatprep.subr.bf16.mxu0 0
        %2695 = vmatpush1.bf16.msra.mxu0 %v2410
        %2696 = vmatprep.subr.bf16.mxu0 0
        %2697 = vmatpush1.bf16.msra.mxu0 %v2409
        %2698 = vmatprep.subr.bf16.mxu0 0
        %2699 = vmatpush1.bf16.msra.mxu0 %v2408
        %2700 = vmatprep.subr.bf16.mxu0 0
        %2701 = vmatpush1.bf16.msra.mxu0 %v2407
        %2702 = vmatprep.subr.bf16.mxu0 0
        %2703 = vmatpush2.bf16.msra.mxu0 0
        %2704 = vmatprep.subr.bf16.mxu0 0
        %2705 = vmatpush2.bf16.msra.mxu0 0
        %2706 = vmatprep.subr.bf16.mxu0 0
        %2707 = vmatpush2.bf16.msra.mxu0 0
        %2708 = vmatprep.subr.bf16.mxu0 0
        %2709 = vmatpush2.bf16.msra.mxu0 0
        %2710 = vmatprep.subr.bf16.mxu0 0
        %2711 = vmatpush2.bf16.msra.mxu0 0
        %2712 = vmatprep.subr.bf16.mxu0 0
        %2713 = vmatpush2.bf16.msra.mxu0 0
        %2714 = vmatprep.subr.bf16.mxu0 0
        %2715 = vmatpush2.bf16.msra.mxu0 0
        %2716 = vmatprep.subr.bf16.mxu0 0
        %2717 = vmatpush2.bf16.msra.mxu0 0
        %2718 = vmatprep.mubr.bf16.mxu0 0
        %2719 = vmatmul.mubr.bf16.gmra.mxu0 %v2604
        %v2720 = vpop.f32.mrf.mxu0
        %v2721 = vadd.f32 %v2681, %v2720
        %v2722 = vpop.f32.mrf.mxu0
        %v2723 = vpop.f32.mrf.mxu0
        %v2724 = vpop.f32.mrf.mxu0
        %2725 = vdwg.mxu0
        %v2726 = vmax.f32 %v2721, 0.0
        %v2727 = vpack.c.bf16 %v2726, %v2726
        %2728 = vrot.lane.b32.xlu0 %v1818, 64
        %v2729 = vpop.permute.xlu0 %2728
        %2730 = vrot.lane.b32.xlu0 %v2588, 64
        %v2731 = vpop.permute.xlu0 %2730
        %v2733 = vshrl.u32 %v1936, 16
        %v2735 = vshll.u32 %v1936, 16
        %v2737 = vrot.slane %v2735, 1
        %v2738 = vor.u32 %v2733, %v2737
        %2739 = vrot.lane.b32.xlu0 %v2738, 64
        %v2740 = vpop.permute.xlu0 %2739
        %v2742 = vrot.slane %v1936, 1
        %v2744 = vsel %vm664, %v2209, %v2729
        %v2748 = vsel %vm664, %v2584, %v2731
        %v2751 = vsel %vm664, %v1936, %v2740
        %v2754 = vsel %vm664, %v2742, 0
        %2756 = vmatprep.subr.bf16.mxu0 0
        %2757 = vmatpush1.bf16.msra.mxu0 %v2382
        %2758 = vmatprep.subr.bf16.mxu0 0
        %2759 = vmatpush1.bf16.msra.mxu0 %v2381
        %2760 = vmatprep.subr.bf16.mxu0 0
        %2761 = vmatpush1.bf16.msra.mxu0 %v2380
        %2762 = vmatprep.subr.bf16.mxu0 0
        %2763 = vmatpush1.bf16.msra.mxu0 %v2379
        %2764 = vmatprep.subr.bf16.mxu0 0
        %2765 = vmatpush1.bf16.msra.mxu0 %v2378
        %2766 = vmatprep.subr.bf16.mxu0 0
        %2767 = vmatpush1.bf16.msra.mxu0 %v2377
        %2768 = vmatprep.subr.bf16.mxu0 0
        %2769 = vmatpush1.bf16.msra.mxu0 %v2376
        %2770 = vmatprep.subr.bf16.mxu0 0
        %2771 = vmatpush1.bf16.msra.mxu0 %v2375
        %2772 = vmatprep.subr.bf16.mxu0 0
        %2773 = vmatpush2.bf16.msra.mxu0 %v2390
        %2774 = vmatprep.subr.bf16.mxu0 0
        %2775 = vmatpush2.bf16.msra.mxu0 %v2389
        %2776 = vmatprep.subr.bf16.mxu0 0
        %2777 = vmatpush2.bf16.msra.mxu0 %v2388
        %2778 = vmatprep.subr.bf16.mxu0 0
        %2779 = vmatpush2.bf16.msra.mxu0 %v2387
        %2780 = vmatprep.subr.bf16.mxu0 0
        %2781 = vmatpush2.bf16.msra.mxu0 %v2386
        %2782 = vmatprep.subr.bf16.mxu0 0
        %2783 = vmatpush2.bf16.msra.mxu0 %v2385
        %2784 = vmatprep.subr.bf16.mxu0 0
        %2785 = vmatpush2.bf16.msra.mxu0 %v2384
        %2786 = vmatprep.subr.bf16.mxu0 0
        %2787 = vmatpush2.bf16.msra.mxu0 %v2383
        %2788 = vmatprep.mubr.bf16.mxu0 %v2744
        %2789 = vmatmul.mubr.bf16.gmra.mxu0 %v2222
        %v2790 = vpop.f32.mrf.mxu0
        %v2791 = vadd.f32 %v2229, %v2790
        %v2792 = vpop.f32.mrf.mxu0
        %v2793 = vpop.f32.mrf.mxu0
        %v2794 = vpop.f32.mrf.mxu0
        %2795 = vdwg.mxu0
        %2796 = vmatprep.subr.bf16.mxu0 0
        %2797 = vmatpush1.bf16.msra.mxu0 %v2398
        %2798 = vmatprep.subr.bf16.mxu0 0
        %2799 = vmatpush1.bf16.msra.mxu0 %v2397
        %2800 = vmatprep.subr.bf16.mxu0 0
        %2801 = vmatpush1.bf16.msra.mxu0 %v2396
        %2802 = vmatprep.subr.bf16.mxu0 0
        %2803 = vmatpush1.bf16.msra.mxu0 %v2395
        %2804 = vmatprep.subr.bf16.mxu0 0
        %2805 = vmatpush1.bf16.msra.mxu0 %v2394
        %2806 = vmatprep.subr.bf16.mxu0 0
        %2807 = vmatpush1.bf16.msra.mxu0 %v2393
        %2808 = vmatprep.subr.bf16.mxu0 0
        %2809 = vmatpush1.bf16.msra.mxu0 %v2392
        %2810 = vmatprep.subr.bf16.mxu0 0
        %2811 = vmatpush1.bf16.msra.mxu0 %v2391
        %2812 = vmatprep.subr.bf16.mxu0 0
        %2813 = vmatpush2.bf16.msra.mxu0 %v2406
        %2814 = vmatprep.subr.bf16.mxu0 0
        %2815 = vmatpush2.bf16.msra.mxu0 %v2405
        %2816 = vmatprep.subr.bf16.mxu0 0
        %2817 = vmatpush2.bf16.msra.mxu0 %v2404
        %2818 = vmatprep.subr.bf16.mxu0 0
        %2819 = vmatpush2.bf16.msra.mxu0 %v2403
        %2820 = vmatprep.subr.bf16.mxu0 0
        %2821 = vmatpush2.bf16.msra.mxu0 %v2402
        %2822 = vmatprep.subr.bf16.mxu0 0
        %2823 = vmatpush2.bf16.msra.mxu0 %v2401
        %2824 = vmatprep.subr.bf16.mxu0 0
        %2825 = vmatpush2.bf16.msra.mxu0 %v2400
        %2826 = vmatprep.subr.bf16.mxu0 0
        %2827 = vmatpush2.bf16.msra.mxu0 %v2399
        %2828 = vmatprep.mubr.bf16.mxu0 %v2751
        %2829 = vmatmul.mubr.bf16.gmra.mxu0 %v2748
        %v2830 = vpop.f32.mrf.mxu0
        %v2831 = vadd.f32 %v2791, %v2830
        %v2832 = vpop.f32.mrf.mxu0
        %v2833 = vpop.f32.mrf.mxu0
        %v2834 = vpop.f32.mrf.mxu0
        %2835 = vdwg.mxu0
        %2836 = vmatprep.subr.bf16.mxu0 0
        %2837 = vmatpush1.bf16.msra.mxu0 0
        %2838 = vmatprep.subr.bf16.mxu0 0
        %2839 = vmatpush1.bf16.msra.mxu0 0
        %2840 = vmatprep.subr.bf16.mxu0 0
        %2841 = vmatpush1.bf16.msra.mxu0 0
        %2842 = vmatprep.subr.bf16.mxu0 0
        %2843 = vmatpush1.bf16.msra.mxu0 0
        %2844 = vmatprep.subr.bf16.mxu0 0
        %2845 = vmatpush1.bf16.msra.mxu0 %v2410
        %2846 = vmatprep.subr.bf16.mxu0 0
        %2847 = vmatpush1.bf16.msra.mxu0 %v2409
        %2848 = vmatprep.subr.bf16.mxu0 0
        %2849 = vmatpush1.bf16.msra.mxu0 %v2408
        %2850 = vmatprep.subr.bf16.mxu0 0
        %2851 = vmatpush1.bf16.msra.mxu0 %v2407
        %2852 = vmatprep.subr.bf16.mxu0 0
        %2853 = vmatpush2.bf16.msra.mxu0 0
        %2854 = vmatprep.subr.bf16.mxu0 0
        %2855 = vmatpush2.bf16.msra.mxu0 0
        %2856 = vmatprep.subr.bf16.mxu0 0
        %2857 = vmatpush2.bf16.msra.mxu0 0
        %2858 = vmatprep.subr.bf16.mxu0 0
        %2859 = vmatpush2.bf16.msra.mxu0 0
        %2860 = vmatprep.subr.bf16.mxu0 0
        %2861 = vmatpush2.bf16.msra.mxu0 0
        %2862 = vmatprep.subr.bf16.mxu0 0
        %2863 = vmatpush2.bf16.msra.mxu0 0
        %2864 = vmatprep.subr.bf16.mxu0 0
        %2865 = vmatpush2.bf16.msra.mxu0 0
        %2866 = vmatprep.subr.bf16.mxu0 0
        %2867 = vmatpush2.bf16.msra.mxu0 0
        %2868 = vmatprep.mubr.bf16.mxu0 0
        %2869 = vmatmul.mubr.bf16.gmra.mxu0 %v2754
        %v2870 = vpop.f32.mrf.mxu0
        %v2871 = vadd.f32 %v2831, %v2870
        %v2872 = vpop.f32.mrf.mxu0
        %v2873 = vpop.f32.mrf.mxu0
        %v2874 = vpop.f32.mrf.mxu0
        %2875 = vdwg.mxu0
        %v2876 = vmax.f32 %v2871, 0.0
        %v2877 = vpack.c.bf16 %v2876, %v2876
        %2878 = vrot.lane.b32.xlu0 %v1936, 64
        %v2879 = vpop.permute.xlu0 %2878
        %2880 = vrot.lane.b32.xlu0 %v2742, 64
        %v2881 = vpop.permute.xlu0 %2880
        %v2883 = vshrl.u32 %v2102, 16
        %v2885 = vshll.u32 %v2102, 16
        %v2887 = vrot.slane %v2885, 1
        %v2888 = vor.u32 %v2883, %v2887
        %2889 = vrot.lane.b32.xlu0 %v2888, 64
        %v2890 = vpop.permute.xlu0 %2889
        %v2892 = vrot.slane %v2102, 1
        %v2894 = vsel %vm664, %v2588, %v2879
        %v2898 = vsel %vm664, %v2738, %v2881
        %v2901 = vsel %vm664, %v2102, %v2890
        %v2904 = vsel %vm664, %v2892, 0
        %2906 = vmatprep.subr.bf16.mxu0 0
        %2907 = vmatpush1.bf16.msra.mxu0 %v2382
        %2908 = vmatprep.subr.bf16.mxu0 0
        %2909 = vmatpush1.bf16.msra.mxu0 %v2381
        %2910 = vmatprep.subr.bf16.mxu0 0
        %2911 = vmatpush1.bf16.msra.mxu0 %v2380
        %2912 = vmatprep.subr.bf16.mxu0 0
        %2913 = vmatpush1.bf16.msra.mxu0 %v2379
        %2914 = vmatprep.subr.bf16.mxu0 0
        %2915 = vmatpush1.bf16.msra.mxu0 %v2378
        %2916 = vmatprep.subr.bf16.mxu0 0
        %2917 = vmatpush1.bf16.msra.mxu0 %v2377
        %2918 = vmatprep.subr.bf16.mxu0 0
        %2919 = vmatpush1.bf16.msra.mxu0 %v2376
        %2920 = vmatprep.subr.bf16.mxu0 0
        %2921 = vmatpush1.bf16.msra.mxu0 %v2375
        %2922 = vmatprep.subr.bf16.mxu0 0
        %2923 = vmatpush2.bf16.msra.mxu0 %v2390
        %2924 = vmatprep.subr.bf16.mxu0 0
        %2925 = vmatpush2.bf16.msra.mxu0 %v2389
        %2926 = vmatprep.subr.bf16.mxu0 0
        %2927 = vmatpush2.bf16.msra.mxu0 %v2388
        %2928 = vmatprep.subr.bf16.mxu0 0
        %2929 = vmatpush2.bf16.msra.mxu0 %v2387
        %2930 = vmatprep.subr.bf16.mxu0 0
        %2931 = vmatpush2.bf16.msra.mxu0 %v2386
        %2932 = vmatprep.subr.bf16.mxu0 0
        %2933 = vmatpush2.bf16.msra.mxu0 %v2385
        %2934 = vmatprep.subr.bf16.mxu0 0
        %2935 = vmatpush2.bf16.msra.mxu0 %v2384
        %2936 = vmatprep.subr.bf16.mxu0 0
        %2937 = vmatpush2.bf16.msra.mxu0 %v2383
        %2938 = vmatprep.mubr.bf16.mxu0 %v2894
        %2939 = vmatmul.mubr.bf16.gmra.mxu0 %v2601
        %v2940 = vpop.f32.mrf.mxu0
        %v2941 = vadd.f32 %v2229, %v2940
        %v2942 = vpop.f32.mrf.mxu0
        %v2943 = vpop.f32.mrf.mxu0
        %v2944 = vpop.f32.mrf.mxu0
        %2945 = vdwg.mxu0
        %2946 = vmatprep.subr.bf16.mxu0 0
        %2947 = vmatpush1.bf16.msra.mxu0 %v2398
        %2948 = vmatprep.subr.bf16.mxu0 0
        %2949 = vmatpush1.bf16.msra.mxu0 %v2397
        %2950 = vmatprep.subr.bf16.mxu0 0
        %2951 = vmatpush1.bf16.msra.mxu0 %v2396
        %2952 = vmatprep.subr.bf16.mxu0 0
        %2953 = vmatpush1.bf16.msra.mxu0 %v2395
        %2954 = vmatprep.subr.bf16.mxu0 0
        %2955 = vmatpush1.bf16.msra.mxu0 %v2394
        %2956 = vmatprep.subr.bf16.mxu0 0
        %2957 = vmatpush1.bf16.msra.mxu0 %v2393
        %2958 = vmatprep.subr.bf16.mxu0 0
        %2959 = vmatpush1.bf16.msra.mxu0 %v2392
        %2960 = vmatprep.subr.bf16.mxu0 0
        %2961 = vmatpush1.bf16.msra.mxu0 %v2391
        %2962 = vmatprep.subr.bf16.mxu0 0
        %2963 = vmatpush2.bf16.msra.mxu0 %v2406
        %2964 = vmatprep.subr.bf16.mxu0 0
        %2965 = vmatpush2.bf16.msra.mxu0 %v2405
        %2966 = vmatprep.subr.bf16.mxu0 0
        %2967 = vmatpush2.bf16.msra.mxu0 %v2404
        %2968 = vmatprep.subr.bf16.mxu0 0
        %2969 = vmatpush2.bf16.msra.mxu0 %v2403
        %2970 = vmatprep.subr.bf16.mxu0 0
        %2971 = vmatpush2.bf16.msra.mxu0 %v2402
        %2972 = vmatprep.subr.bf16.mxu0 0
        %2973 = vmatpush2.bf16.msra.mxu0 %v2401
        %2974 = vmatprep.subr.bf16.mxu0 0
        %2975 = vmatpush2.bf16.msra.mxu0 %v2400
        %2976 = vmatprep.subr.bf16.mxu0 0
        %2977 = vmatpush2.bf16.msra.mxu0 %v2399
        %2978 = vmatprep.mubr.bf16.mxu0 %v2901
        %2979 = vmatmul.mubr.bf16.gmra.mxu0 %v2898
        %v2980 = vpop.f32.mrf.mxu0
        %v2981 = vadd.f32 %v2941, %v2980
        %v2982 = vpop.f32.mrf.mxu0
        %v2983 = vpop.f32.mrf.mxu0
        %v2984 = vpop.f32.mrf.mxu0
        %2985 = vdwg.mxu0
        %2986 = vmatprep.subr.bf16.mxu0 0
        %2987 = vmatpush1.bf16.msra.mxu0 0
        %2988 = vmatprep.subr.bf16.mxu0 0
        %2989 = vmatpush1.bf16.msra.mxu0 0
        %2990 = vmatprep.subr.bf16.mxu0 0
        %2991 = vmatpush1.bf16.msra.mxu0 0
        %2992 = vmatprep.subr.bf16.mxu0 0
        %2993 = vmatpush1.bf16.msra.mxu0 0
        %2994 = vmatprep.subr.bf16.mxu0 0
        %2995 = vmatpush1.bf16.msra.mxu0 %v2410
        %2996 = vmatprep.subr.bf16.mxu0 0
        %2997 = vmatpush1.bf16.msra.mxu0 %v2409
        %2998 = vmatprep.subr.bf16.mxu0 0
        %2999 = vmatpush1.bf16.msra.mxu0 %v2408
        %3000 = vmatprep.subr.bf16.mxu0 0
        %3001 = vmatpush1.bf16.msra.mxu0 %v2407
        %3002 = vmatprep.subr.bf16.mxu0 0
        %3003 = vmatpush2.bf16.msra.mxu0 0
        %3004 = vmatprep.subr.bf16.mxu0 0
        %3005 = vmatpush2.bf16.msra.mxu0 0
        %3006 = vmatprep.subr.bf16.mxu0 0
        %3007 = vmatpush2.bf16.msra.mxu0 0
        %3008 = vmatprep.subr.bf16.mxu0 0
        %3009 = vmatpush2.bf16.msra.mxu0 0
        %3010 = vmatprep.subr.bf16.mxu0 0
        %3011 = vmatpush2.bf16.msra.mxu0 0
        %3012 = vmatprep.subr.bf16.mxu0 0
        %3013 = vmatpush2.bf16.msra.mxu0 0
        %3014 = vmatprep.subr.bf16.mxu0 0
        %3015 = vmatpush2.bf16.msra.mxu0 0
        %3016 = vmatprep.subr.bf16.mxu0 0
        %3017 = vmatpush2.bf16.msra.mxu0 0
        %3018 = vmatprep.mubr.bf16.mxu0 0
        %3019 = vmatmul.mubr.bf16.gmra.mxu0 %v2904
        %v3020 = vpop.f32.mrf.mxu0
        %v3021 = vadd.f32 %v2981, %v3020
        %v3022 = vpop.f32.mrf.mxu0
        %v3023 = vpop.f32.mrf.mxu0
        %v3024 = vpop.f32.mrf.mxu0
        %3025 = vdwg.mxu0
        %v3026 = vmax.f32 %v3021, 0.0
        %v3027 = vpack.c.bf16 %v3026, %v3026
        %v3028 = vld [vmem:[%s7] sm:$0xf]
        %v3029 = vld [vmem:[%s7 + $0x4] sm:$0xf]
        %v3030 = vld [vmem:[%s7 + $0x8] sm:$0xf]
        %v3031 = vld [vmem:[%s7 + $0xc] sm:$0xf]
        %v3032 = vld [vmem:[%s7 + $0x10] sm:$0xf]
        %v3033 = vld [vmem:[%s7 + $0x14] sm:$0xf]
        %v3034 = vld [vmem:[%s7 + $0x18] sm:$0xf]
        %v3035 = vld [vmem:[%s7 + $0x1c] sm:$0xf]
        %v3036 = vld [vmem:[%s7 + $0x20] sm:$0xf]
        %v3037 = vld [vmem:[%s7 + $0x24] sm:$0xf]
        %v3038 = vld [vmem:[%s7 + $0x28] sm:$0xf]
        %v3039 = vld [vmem:[%s7 + $0x2c] sm:$0xf]
        %v3040 = vld [vmem:[%s7 + $0x30] sm:$0xf]
        %v3041 = vld [vmem:[%s7 + $0x34] sm:$0xf]
        %v3042 = vld [vmem:[%s7 + $0x38] sm:$0xf]
        %v3043 = vld [vmem:[%s7 + $0x3c] sm:$0xf]
        %v3044 = vld [vmem:[%s7 + $0x40] sm:$0xf]
        %v3045 = vld [vmem:[%s7 + $0x44] sm:$0xf]
        %v3046 = vld [vmem:[%s7 + $0x48] sm:$0xf]
        %v3047 = vld [vmem:[%s7 + $0x4c] sm:$0xf]
        %v3048 = vld [vmem:[%s7 + $0x50] sm:$0xf]
        %v3049 = vld [vmem:[%s7 + $0x54] sm:$0xf]
        %v3050 = vld [vmem:[%s7 + $0x58] sm:$0xf]
        %v3051 = vld [vmem:[%s7 + $0x5c] sm:$0xf]
        %v3052 = vld [vmem:[%s7 + $0x60] sm:$0xf]
        %v3053 = vld [vmem:[%s7 + $0x64] sm:$0xf]
        %v3054 = vld [vmem:[%s7 + $0x68] sm:$0xf]
        %v3055 = vld [vmem:[%s7 + $0x6c] sm:$0xf]
        %v3056 = vld [vmem:[%s7 + $0x70] sm:$0xf]
        %v3057 = vld [vmem:[%s7 + $0x74] sm:$0xf]
        %v3058 = vld [vmem:[%s7 + $0x78] sm:$0xf]
        %v3059 = vld [vmem:[%s7 + $0x7c] sm:$0xf]
        %v3060 = vld [vmem:[%s7 + $0x80] sm:$0xf]
        %v3061 = vld [vmem:[%s7 + $0x84] sm:$0xf]
        %v3062 = vld [vmem:[%s7 + $0x88] sm:$0xf]
        %v3063 = vld [vmem:[%s7 + $0x8c] sm:$0xf]
        %v3064 = vld [vmem:[%s7 + $0x90] sm:$0xf]
        %v3065 = vld [vmem:[%s7 + $0x94] sm:$0xf]
        %v3066 = vld [vmem:[%s7 + $0x98] sm:$0xf]
        %v3067 = vld [vmem:[%s7 + $0x9c] sm:$0xf]
        %v3068 = vld [vmem:[%s7 + $0xa0] sm:$0xf]
        %v3069 = vld [vmem:[%s7 + $0xa4] sm:$0xf]
        %v3070 = vld [vmem:[%s7 + $0xa8] sm:$0xf]
        %v3071 = vld [vmem:[%s7 + $0xac] sm:$0xf]
        %v3072 = vld [vmem:[%s7 + $0xb0] sm:$0xf]
        %v3073 = vld [vmem:[%s7 + $0xb4] sm:$0xf]
        %v3074 = vld [vmem:[%s7 + $0xb8] sm:$0xf]
        %v3075 = vld [vmem:[%s7 + $0xbc] sm:$0xf]
        %v3076 = vld [vmem:[%s7 + $0xc0] sm:$0xf]
        %v3077 = vld [vmem:[%s7 + $0xc4] sm:$0xf]
        %v3078 = vld [vmem:[%s7 + $0xc8] sm:$0xf]
        %v3079 = vld [vmem:[%s7 + $0xcc] sm:$0xf]
        %v3080 = vld [vmem:[%s7 + $0xd0] sm:$0xf]
        %v3081 = vld [vmem:[%s7 + $0xd4] sm:$0xf]
        %v3082 = vld [vmem:[%s7 + $0xd8] sm:$0xf]
        %v3083 = vld [vmem:[%s7 + $0xdc] sm:$0xf]
        %v3084 = vld [vmem:[%s7 + $0xe0] sm:$0xf]
        %v3085 = vld [vmem:[%s7 + $0xe4] sm:$0xf]
        %v3086 = vld [vmem:[%s7 + $0xe8] sm:$0xf]
        %v3087 = vld [vmem:[%s7 + $0xec] sm:$0xf]
        %v3088 = vld [vmem:[%s7 + $0xf0] sm:$0xf]
        %v3089 = vld [vmem:[%s7 + $0xf4] sm:$0xf]
        %v3090 = vld [vmem:[%s7 + $0xf8] sm:$0xf]
        %v3091 = vld [vmem:[%s7 + $0xfc] sm:$0xf]
        %v3092 = vld [vmem:[%s7 + $0x100] sm:$0xf]
        %v3093 = vld [vmem:[%s7 + $0x104] sm:$0xf]
        %v3094 = vld [vmem:[%s7 + $0x108] sm:$0xf]
        %v3095 = vld [vmem:[%s7 + $0x10c] sm:$0xf]
        %v3096 = vld [vmem:[%s7 + $0x110] sm:$0xf]
        %v3097 = vld [vmem:[%s7 + $0x114] sm:$0xf]
        %v3098 = vld [vmem:[%s7 + $0x118] sm:$0xf]
        %v3099 = vld [vmem:[%s7 + $0x11c] sm:$0xf]
        %v3100 = vld [vmem:[%s7 + $0x120] sm:$0xf]
        %v3101 = vld [vmem:[%s7 + $0x124] sm:$0xf]
        %v3102 = vld [vmem:[%s7 + $0x128] sm:$0xf]
        %v3103 = vld [vmem:[%s7 + $0x12c] sm:$0xf]
        %v3104 = vld [vmem:[%s7 + $0x130] sm:$0xf]
        %v3105 = vld [vmem:[%s7 + $0x134] sm:$0xf]
        %v3106 = vld [vmem:[%s7 + $0x138] sm:$0xf]
        %v3107 = vld [vmem:[%s7 + $0x13c] sm:$0xf]
        %v3108 = vld [vmem:[%s7 + $0x140] sm:$0xf]
        %v3109 = vld [vmem:[%s7 + $0x144] sm:$0xf]
        %v3110 = vld [vmem:[%s7 + $0x148] sm:$0xf]
        %v3111 = vld [vmem:[%s7 + $0x14c] sm:$0xf]
        %v3112 = vld [vmem:[%s7 + $0x150] sm:$0xf]
        %v3113 = vld [vmem:[%s7 + $0x154] sm:$0xf]
        %v3114 = vld [vmem:[%s7 + $0x158] sm:$0xf]
        %v3115 = vld [vmem:[%s7 + $0x15c] sm:$0xf]
        %v3116 = vld [vmem:[%s7 + $0x160] sm:$0xf]
        %v3117 = vld [vmem:[%s7 + $0x164] sm:$0xf]
        %v3118 = vld [vmem:[%s7 + $0x168] sm:$0xf]
        %v3119 = vld [vmem:[%s7 + $0x16c] sm:$0xf]
        %v3120 = vld [vmem:[%s7 + $0x170] sm:$0xf]
        %v3121 = vld [vmem:[%s7 + $0x174] sm:$0xf]
        %v3122 = vld [vmem:[%s7 + $0x178] sm:$0xf]
        %v3123 = vld [vmem:[%s7 + $0x17c] sm:$0xf]
        %v3124 = vld [vmem:[%s7 + $0x180] sm:$0xf]
        %v3125 = vld [vmem:[%s7 + $0x184] sm:$0xf]
        %v3126 = vld [vmem:[%s7 + $0x188] sm:$0xf]
        %v3127 = vld [vmem:[%s7 + $0x18c] sm:$0xf]
        %v3128 = vld [vmem:[%s7 + $0x190] sm:$0xf]
        %v3129 = vld [vmem:[%s7 + $0x194] sm:$0xf]
        %v3130 = vld [vmem:[%s7 + $0x198] sm:$0xf]
        %v3131 = vld [vmem:[%s7 + $0x19c] sm:$0xf]
        %v3132 = vld [vmem:[%s7 + $0x1a0] sm:$0xf]
        %v3133 = vld [vmem:[%s7 + $0x1a4] sm:$0xf]
        %v3134 = vld [vmem:[%s7 + $0x1a8] sm:$0xf]
        %v3135 = vld [vmem:[%s7 + $0x1ac] sm:$0xf]
        %v3136 = vld [vmem:[%s7 + $0x1b0] sm:$0xf]
        %v3137 = vld [vmem:[%s7 + $0x1b4] sm:$0xf]
        %v3138 = vld [vmem:[%s7 + $0x1b8] sm:$0xf]
        %v3139 = vld [vmem:[%s7 + $0x1bc] sm:$0xf]
        %v3140 = vld [vmem:[%s7 + $0x1c0] sm:$0xf]
        %v3141 = vld [vmem:[%s7 + $0x1c4] sm:$0xf]
        %v3142 = vld [vmem:[%s7 + $0x1c8] sm:$0xf]
        %v3143 = vld [vmem:[%s7 + $0x1cc] sm:$0xf]
        %v3144 = vld [vmem:[%s7 + $0x1d0] sm:$0xf]
        %v3145 = vld [vmem:[%s7 + $0x1d4] sm:$0xf]
        %v3146 = vld [vmem:[%s7 + $0x1d8] sm:$0xf]
        %v3147 = vld [vmem:[%s7 + $0x1dc] sm:$0xf]
        %v3148 = vld [vmem:[%s7 + $0x1e0] sm:$0xf]
        %v3149 = vld [vmem:[%s7 + $0x1e4] sm:$0xf]
        %v3150 = vld [vmem:[%s7 + $0x1e8] sm:$0xf]
        %v3151 = vld [vmem:[%s7 + $0x1ec] sm:$0xf]
        %v3152 = vld [vmem:[%s7 + $0x1f0] sm:$0xf]
        %v3153 = vld [vmem:[%s7 + $0x1f4] sm:$0xf]
        %v3154 = vld [vmem:[%s7 + $0x1f8] sm:$0xf]
        %v3155 = vld [vmem:[%s7 + $0x1fc] sm:$0xf]
        %v3157 = vshrl.u32 %v2571, 16
        %v3167 = vunpack.c.l.b16 %v3036
        %v3168 = vunpack.c.l.b16 %v3037
        %v3169 = vunpack.c.l.b16 %v3038
        %v3170 = vunpack.c.l.b16 %v3039
        %v3171 = vunpack.c.l.b16 %v3040
        %v3172 = vunpack.c.l.b16 %v3041
        %v3173 = vunpack.c.l.b16 %v3042
        %v3174 = vunpack.c.l.b16 %v3043
        %v3175 = vpack.c.b16 %v3168, %v3167
        %v3176 = vpack.c.b16 %v3170, %v3169
        %v3177 = vpack.c.b16 %v3172, %v3171
        %v3178 = vpack.c.b16 %v3174, %v3173
        %v3184 = vsel %vm664, %v3157, 0
        %3186 = vmatprep.subr.bf16.mxu0 0
        %3187 = vmatpush1.bf16.msra.mxu0 0
        %3188 = vmatprep.subr.bf16.mxu0 0
        %3189 = vmatpush1.bf16.msra.mxu0 0
        %3190 = vmatprep.subr.bf16.mxu0 0
        %3191 = vmatpush1.bf16.msra.mxu0 0
        %3192 = vmatprep.subr.bf16.mxu0 0
        %3193 = vmatpush1.bf16.msra.mxu0 0
        %3194 = vmatprep.subr.bf16.mxu0 0
        %3195 = vmatpush1.bf16.msra.mxu0 %v3178
        %3196 = vmatprep.subr.bf16.mxu0 0
        %3197 = vmatpush1.bf16.msra.mxu0 %v3177
        %3198 = vmatprep.subr.bf16.mxu0 0
        %3199 = vmatpush1.bf16.msra.mxu0 %v3176
        %3200 = vmatprep.subr.bf16.mxu0 0
        %3201 = vmatpush1.bf16.msra.mxu0 %v3175
        %3202 = vmatprep.subr.bf16.mxu0 0
        %3203 = vmatpush2.bf16.msra.mxu0 0
        %3204 = vmatprep.subr.bf16.mxu0 0
        %3205 = vmatpush2.bf16.msra.mxu0 0
        %3206 = vmatprep.subr.bf16.mxu0 0
        %3207 = vmatpush2.bf16.msra.mxu0 0
        %3208 = vmatprep.subr.bf16.mxu0 0
        %3209 = vmatpush2.bf16.msra.mxu0 0
        %3210 = vmatprep.subr.bf16.mxu0 0
        %3211 = vmatpush2.bf16.msra.mxu0 0
        %3212 = vmatprep.subr.bf16.mxu0 0
        %3213 = vmatpush2.bf16.msra.mxu0 0
        %3214 = vmatprep.subr.bf16.mxu0 0
        %3215 = vmatpush2.bf16.msra.mxu0 0
        %3216 = vmatprep.subr.bf16.mxu0 0
        %3217 = vmatpush2.bf16.msra.mxu0 0
        %3218 = vmatprep.mubr.bf16.mxu0 0
        %3219 = vmatmul.mubr.bf16.gmra.mxu0 %v3184
        %v3220 = vpop.f32.mrf.mxu0
        %v3221 = vadd.f32 0.0, %v3220
        %v3222 = vpop.f32.mrf.mxu0
        %v3223 = vpop.f32.mrf.mxu0
        %v3224 = vpop.f32.mrf.mxu0
        %3225 = vdwg.mxu0
        %v3234 = vunpack.c.l.b16 %v3028
        %v3235 = vunpack.c.l.b16 %v3029
        %v3236 = vunpack.c.l.b16 %v3030
        %v3237 = vunpack.c.l.b16 %v3031
        %v3238 = vunpack.c.l.b16 %v3032
        %v3239 = vunpack.c.l.b16 %v3033
        %v3240 = vunpack.c.l.b16 %v3034
        %v3241 = vunpack.c.l.b16 %v3035
        %v3242 = vpack.c.b16 %v3235, %v3234
        %v3243 = vpack.c.b16 %v3237, %v3236
        %v3244 = vpack.c.b16 %v3239, %v3238
        %v3245 = vpack.c.b16 %v3241, %v3240
        %v3250 = vsel %vm664, %v2571, 0
        %3252 = vmatprep.subr.bf16.mxu0 0
        %3253 = vmatpush1.bf16.msra.mxu0 0
        %3254 = vmatprep.subr.bf16.mxu0 0
        %3255 = vmatpush1.bf16.msra.mxu0 0
        %3256 = vmatprep.subr.bf16.mxu0 0
        %3257 = vmatpush1.bf16.msra.mxu0 0
        %3258 = vmatprep.subr.bf16.mxu0 0
        %3259 = vmatpush1.bf16.msra.mxu0 0
        %3260 = vmatprep.subr.bf16.mxu0 0
        %3261 = vmatpush1.bf16.msra.mxu0 %v3245
        %3262 = vmatprep.subr.bf16.mxu0 0
        %3263 = vmatpush1.bf16.msra.mxu0 %v3244
        %3264 = vmatprep.subr.bf16.mxu0 0
        %3265 = vmatpush1.bf16.msra.mxu0 %v3243
        %3266 = vmatprep.subr.bf16.mxu0 0
        %3267 = vmatpush1.bf16.msra.mxu0 %v3242
        %3268 = vmatprep.subr.bf16.mxu0 0
        %3269 = vmatpush2.bf16.msra.mxu0 0
        %3270 = vmatprep.subr.bf16.mxu0 0
        %3271 = vmatpush2.bf16.msra.mxu0 0
        %3272 = vmatprep.subr.bf16.mxu0 0
        %3273 = vmatpush2.bf16.msra.mxu0 0
        %3274 = vmatprep.subr.bf16.mxu0 0
        %3275 = vmatpush2.bf16.msra.mxu0 0
        %3276 = vmatprep.subr.bf16.mxu0 0
        %3277 = vmatpush2.bf16.msra.mxu0 0
        %3278 = vmatprep.subr.bf16.mxu0 0
        %3279 = vmatpush2.bf16.msra.mxu0 0
        %3280 = vmatprep.subr.bf16.mxu0 0
        %3281 = vmatpush2.bf16.msra.mxu0 0
        %3282 = vmatprep.subr.bf16.mxu0 0
        %3283 = vmatpush2.bf16.msra.mxu0 0
        %3284 = vmatprep.mubr.bf16.mxu0 0
        %3285 = vmatmul.mubr.bf16.gmra.mxu0 %v3250
        %v3286 = vpop.f32.mrf.mxu0
        %v3287 = vadd.f32 %v3221, %v3286
        %v3288 = vpop.f32.mrf.mxu0
        %v3289 = vpop.f32.mrf.mxu0
        %v3290 = vpop.f32.mrf.mxu0
        %3291 = vdwg.mxu0
        %v3293 = vrot.slane %v2571, 1
        %v3302 = vunpack.c.l.b16 %v3044
        %v3303 = vunpack.c.l.b16 %v3045
        %v3304 = vunpack.c.l.b16 %v3046
        %v3305 = vunpack.c.l.b16 %v3047
        %v3306 = vunpack.c.l.b16 %v3048
        %v3307 = vunpack.c.l.b16 %v3049
        %v3308 = vunpack.c.l.b16 %v3050
        %v3309 = vunpack.c.l.b16 %v3051
        %v3310 = vpack.c.b16 %v3303, %v3302
        %v3311 = vpack.c.b16 %v3305, %v3304
        %v3312 = vpack.c.b16 %v3307, %v3306
        %v3313 = vpack.c.b16 %v3309, %v3308
        %v3319 = vsel %vm664, %v3293, 0
        %3321 = vmatprep.subr.bf16.mxu0 0
        %3322 = vmatpush1.bf16.msra.mxu0 0
        %3323 = vmatprep.subr.bf16.mxu0 0
        %3324 = vmatpush1.bf16.msra.mxu0 0
        %3325 = vmatprep.subr.bf16.mxu0 0
        %3326 = vmatpush1.bf16.msra.mxu0 0
        %3327 = vmatprep.subr.bf16.mxu0 0
        %3328 = vmatpush1.bf16.msra.mxu0 0
        %3329 = vmatprep.subr.bf16.mxu0 0
        %3330 = vmatpush1.bf16.msra.mxu0 %v3313
        %3331 = vmatprep.subr.bf16.mxu0 0
        %3332 = vmatpush1.bf16.msra.mxu0 %v3312
        %3333 = vmatprep.subr.bf16.mxu0 0
        %3334 = vmatpush1.bf16.msra.mxu0 %v3311
        %3335 = vmatprep.subr.bf16.mxu0 0
        %3336 = vmatpush1.bf16.msra.mxu0 %v3310
        %3337 = vmatprep.subr.bf16.mxu0 0
        %3338 = vmatpush2.bf16.msra.mxu0 0
        %3339 = vmatprep.subr.bf16.mxu0 0
        %3340 = vmatpush2.bf16.msra.mxu0 0
        %3341 = vmatprep.subr.bf16.mxu0 0
        %3342 = vmatpush2.bf16.msra.mxu0 0
        %3343 = vmatprep.subr.bf16.mxu0 0
        %3344 = vmatpush2.bf16.msra.mxu0 0
        %3345 = vmatprep.subr.bf16.mxu0 0
        %3346 = vmatpush2.bf16.msra.mxu0 0
        %3347 = vmatprep.subr.bf16.mxu0 0
        %3348 = vmatpush2.bf16.msra.mxu0 0
        %3349 = vmatprep.subr.bf16.mxu0 0
        %3350 = vmatpush2.bf16.msra.mxu0 0
        %3351 = vmatprep.subr.bf16.mxu0 0
        %3352 = vmatpush2.bf16.msra.mxu0 0
        %3353 = vmatprep.mubr.bf16.mxu0 0
        %3354 = vmatmul.mubr.bf16.gmra.mxu0 %v3319
        %v3355 = vpop.f32.mrf.mxu0
        %v3356 = vadd.f32 0.0, %v3355
        %v3357 = vpop.f32.mrf.mxu0
        %v3358 = vpop.f32.mrf.mxu0
        %v3359 = vpop.f32.mrf.mxu0
        %3360 = vdwg.mxu0
        %v3361 = vadd.f32 %v3287, %v3356
        %v3362 = vrot.slane %v3157, 1
        %v3371 = vunpack.c.l.b16 %v3052
        %v3372 = vunpack.c.l.b16 %v3053
        %v3373 = vunpack.c.l.b16 %v3054
        %v3374 = vunpack.c.l.b16 %v3055
        %v3375 = vunpack.c.l.b16 %v3056
        %v3376 = vunpack.c.l.b16 %v3057
        %v3377 = vunpack.c.l.b16 %v3058
        %v3378 = vunpack.c.l.b16 %v3059
        %v3379 = vpack.c.b16 %v3372, %v3371
        %v3380 = vpack.c.b16 %v3374, %v3373
        %v3381 = vpack.c.b16 %v3376, %v3375
        %v3382 = vpack.c.b16 %v3378, %v3377
        %v3388 = vsel %vm664, %v3362, 0
        %3390 = vmatprep.subr.bf16.mxu0 0
        %3391 = vmatpush1.bf16.msra.mxu0 0
        %3392 = vmatprep.subr.bf16.mxu0 0
        %3393 = vmatpush1.bf16.msra.mxu0 0
        %3394 = vmatprep.subr.bf16.mxu0 0
        %3395 = vmatpush1.bf16.msra.mxu0 0
        %3396 = vmatprep.subr.bf16.mxu0 0
        %3397 = vmatpush1.bf16.msra.mxu0 0
        %3398 = vmatprep.subr.bf16.mxu0 0
        %3399 = vmatpush1.bf16.msra.mxu0 %v3382
        %3400 = vmatprep.subr.bf16.mxu0 0
        %3401 = vmatpush1.bf16.msra.mxu0 %v3381
        %3402 = vmatprep.subr.bf16.mxu0 0
        %3403 = vmatpush1.bf16.msra.mxu0 %v3380
        %3404 = vmatprep.subr.bf16.mxu0 0
        %3405 = vmatpush1.bf16.msra.mxu0 %v3379
        %3406 = vmatprep.subr.bf16.mxu0 0
        %3407 = vmatpush2.bf16.msra.mxu0 0
        %3408 = vmatprep.subr.bf16.mxu0 0
        %3409 = vmatpush2.bf16.msra.mxu0 0
        %3410 = vmatprep.subr.bf16.mxu0 0
        %3411 = vmatpush2.bf16.msra.mxu0 0
        %3412 = vmatprep.subr.bf16.mxu0 0
        %3413 = vmatpush2.bf16.msra.mxu0 0
        %3414 = vmatprep.subr.bf16.mxu0 0
        %3415 = vmatpush2.bf16.msra.mxu0 0
        %3416 = vmatprep.subr.bf16.mxu0 0
        %3417 = vmatpush2.bf16.msra.mxu0 0
        %3418 = vmatprep.subr.bf16.mxu0 0
        %3419 = vmatpush2.bf16.msra.mxu0 0
        %3420 = vmatprep.subr.bf16.mxu0 0
        %3421 = vmatpush2.bf16.msra.mxu0 0
        %3422 = vmatprep.mubr.bf16.mxu0 0
        %3423 = vmatmul.mubr.bf16.gmra.mxu0 %v3388
        %v3424 = vpop.f32.mrf.mxu0
        %v3425 = vadd.f32 0.0, %v3424
        %v3426 = vpop.f32.mrf.mxu0
        %v3427 = vpop.f32.mrf.mxu0
        %v3428 = vpop.f32.mrf.mxu0
        %3429 = vdwg.mxu0
        %v3430 = vadd.f32 %v3361, %v3425
        %v3439 = vunpack.c.l.b16 %v3060
        %v3440 = vunpack.c.l.b16 %v3061
        %v3441 = vunpack.c.l.b16 %v3062
        %v3442 = vunpack.c.l.b16 %v3063
        %v3443 = vunpack.c.l.b16 %v3064
        %v3444 = vunpack.c.l.b16 %v3065
        %v3445 = vunpack.c.l.b16 %v3066
        %v3446 = vunpack.c.l.b16 %v3067
        %v3447 = vpack.c.b16 %v3440, %v3439
        %v3448 = vpack.c.b16 %v3442, %v3441
        %v3449 = vpack.c.b16 %v3444, %v3443
        %v3450 = vpack.c.b16 %v3446, %v3445
        %v3456 = vsel %vm664, %v2727, 0
        %3458 = vmatprep.subr.bf16.mxu0 0
        %3459 = vmatpush1.bf16.msra.mxu0 0
        %3460 = vmatprep.subr.bf16.mxu0 0
        %3461 = vmatpush1.bf16.msra.mxu0 0
        %3462 = vmatprep.subr.bf16.mxu0 0
        %3463 = vmatpush1.bf16.msra.mxu0 0
        %3464 = vmatprep.subr.bf16.mxu0 0
        %3465 = vmatpush1.bf16.msra.mxu0 0
        %3466 = vmatprep.subr.bf16.mxu0 0
        %3467 = vmatpush1.bf16.msra.mxu0 %v3450
        %3468 = vmatprep.subr.bf16.mxu0 0
        %3469 = vmatpush1.bf16.msra.mxu0 %v3449
        %3470 = vmatprep.subr.bf16.mxu0 0
        %3471 = vmatpush1.bf16.msra.mxu0 %v3448
        %3472 = vmatprep.subr.bf16.mxu0 0
        %3473 = vmatpush1.bf16.msra.mxu0 %v3447
        %3474 = vmatprep.subr.bf16.mxu0 0
        %3475 = vmatpush2.bf16.msra.mxu0 0
        %3476 = vmatprep.subr.bf16.mxu0 0
        %3477 = vmatpush2.bf16.msra.mxu0 0
        %3478 = vmatprep.subr.bf16.mxu0 0
        %3479 = vmatpush2.bf16.msra.mxu0 0
        %3480 = vmatprep.subr.bf16.mxu0 0
        %3481 = vmatpush2.bf16.msra.mxu0 0
        %3482 = vmatprep.subr.bf16.mxu0 0
        %3483 = vmatpush2.bf16.msra.mxu0 0
        %3484 = vmatprep.subr.bf16.mxu0 0
        %3485 = vmatpush2.bf16.msra.mxu0 0
        %3486 = vmatprep.subr.bf16.mxu0 0
        %3487 = vmatpush2.bf16.msra.mxu0 0
        %3488 = vmatprep.subr.bf16.mxu0 0
        %3489 = vmatpush2.bf16.msra.mxu0 0
        %3490 = vmatprep.mubr.bf16.mxu0 0
        %3491 = vmatmul.mubr.bf16.gmra.mxu0 %v3456
        %v3492 = vpop.f32.mrf.mxu0
        %v3493 = vadd.f32 0.0, %v3492
        %v3494 = vpop.f32.mrf.mxu0
        %v3495 = vpop.f32.mrf.mxu0
        %v3496 = vpop.f32.mrf.mxu0
        %3497 = vdwg.mxu0
        %v3498 = vadd.f32 %v3430, %v3493
        %v3499 = vshrl.u32 %v2727, 16
        %v3509 = vunpack.c.l.b16 %v3068
        %v3510 = vunpack.c.l.b16 %v3069
        %v3511 = vunpack.c.l.b16 %v3070
        %v3512 = vunpack.c.l.b16 %v3071
        %v3513 = vunpack.c.l.b16 %v3072
        %v3514 = vunpack.c.l.b16 %v3073
        %v3515 = vunpack.c.l.b16 %v3074
        %v3516 = vunpack.c.l.b16 %v3075
        %v3517 = vpack.c.b16 %v3510, %v3509
        %v3518 = vpack.c.b16 %v3512, %v3511
        %v3519 = vpack.c.b16 %v3514, %v3513
        %v3520 = vpack.c.b16 %v3516, %v3515
        %v3526 = vsel %vm664, %v3499, 0
        %3528 = vmatprep.subr.bf16.mxu0 0
        %3529 = vmatpush1.bf16.msra.mxu0 0
        %3530 = vmatprep.subr.bf16.mxu0 0
        %3531 = vmatpush1.bf16.msra.mxu0 0
        %3532 = vmatprep.subr.bf16.mxu0 0
        %3533 = vmatpush1.bf16.msra.mxu0 0
        %3534 = vmatprep.subr.bf16.mxu0 0
        %3535 = vmatpush1.bf16.msra.mxu0 0
        %3536 = vmatprep.subr.bf16.mxu0 0
        %3537 = vmatpush1.bf16.msra.mxu0 %v3520
        %3538 = vmatprep.subr.bf16.mxu0 0
        %3539 = vmatpush1.bf16.msra.mxu0 %v3519
        %3540 = vmatprep.subr.bf16.mxu0 0
        %3541 = vmatpush1.bf16.msra.mxu0 %v3518
        %3542 = vmatprep.subr.bf16.mxu0 0
        %3543 = vmatpush1.bf16.msra.mxu0 %v3517
        %3544 = vmatprep.subr.bf16.mxu0 0
        %3545 = vmatpush2.bf16.msra.mxu0 0
        %3546 = vmatprep.subr.bf16.mxu0 0
        %3547 = vmatpush2.bf16.msra.mxu0 0
        %3548 = vmatprep.subr.bf16.mxu0 0
        %3549 = vmatpush2.bf16.msra.mxu0 0
        %3550 = vmatprep.subr.bf16.mxu0 0
        %3551 = vmatpush2.bf16.msra.mxu0 0
        %3552 = vmatprep.subr.bf16.mxu0 0
        %3553 = vmatpush2.bf16.msra.mxu0 0
        %3554 = vmatprep.subr.bf16.mxu0 0
        %3555 = vmatpush2.bf16.msra.mxu0 0
        %3556 = vmatprep.subr.bf16.mxu0 0
        %3557 = vmatpush2.bf16.msra.mxu0 0
        %3558 = vmatprep.subr.bf16.mxu0 0
        %3559 = vmatpush2.bf16.msra.mxu0 0
        %3560 = vmatprep.mubr.bf16.mxu0 0
        %3561 = vmatmul.mubr.bf16.gmra.mxu0 %v3526
        %v3562 = vpop.f32.mrf.mxu0
        %v3563 = vadd.f32 0.0, %v3562
        %v3564 = vpop.f32.mrf.mxu0
        %v3565 = vpop.f32.mrf.mxu0
        %v3566 = vpop.f32.mrf.mxu0
        %3567 = vdwg.mxu0
        %v3568 = vadd.f32 %v3498, %v3563
        %v3570 = vrot.slane %v2727, 1
        %v3579 = vunpack.c.l.b16 %v3076
        %v3580 = vunpack.c.l.b16 %v3077
        %v3581 = vunpack.c.l.b16 %v3078
        %v3582 = vunpack.c.l.b16 %v3079
        %v3583 = vunpack.c.l.b16 %v3080
        %v3584 = vunpack.c.l.b16 %v3081
        %v3585 = vunpack.c.l.b16 %v3082
        %v3586 = vunpack.c.l.b16 %v3083
        %v3587 = vpack.c.b16 %v3580, %v3579
        %v3588 = vpack.c.b16 %v3582, %v3581
        %v3589 = vpack.c.b16 %v3584, %v3583
        %v3590 = vpack.c.b16 %v3586, %v3585
        %v3596 = vsel %vm664, %v3570, 0
        %3598 = vmatprep.subr.bf16.mxu0 0
        %3599 = vmatpush1.bf16.msra.mxu0 0
        %3600 = vmatprep.subr.bf16.mxu0 0
        %3601 = vmatpush1.bf16.msra.mxu0 0
        %3602 = vmatprep.subr.bf16.mxu0 0
        %3603 = vmatpush1.bf16.msra.mxu0 0
        %3604 = vmatprep.subr.bf16.mxu0 0
        %3605 = vmatpush1.bf16.msra.mxu0 0
        %3606 = vmatprep.subr.bf16.mxu0 0
        %3607 = vmatpush1.bf16.msra.mxu0 %v3590
        %3608 = vmatprep.subr.bf16.mxu0 0
        %3609 = vmatpush1.bf16.msra.mxu0 %v3589
        %3610 = vmatprep.subr.bf16.mxu0 0
        %3611 = vmatpush1.bf16.msra.mxu0 %v3588
        %3612 = vmatprep.subr.bf16.mxu0 0
        %3613 = vmatpush1.bf16.msra.mxu0 %v3587
        %3614 = vmatprep.subr.bf16.mxu0 0
        %3615 = vmatpush2.bf16.msra.mxu0 0
        %3616 = vmatprep.subr.bf16.mxu0 0
        %3617 = vmatpush2.bf16.msra.mxu0 0
        %3618 = vmatprep.subr.bf16.mxu0 0
        %3619 = vmatpush2.bf16.msra.mxu0 0
        %3620 = vmatprep.subr.bf16.mxu0 0
        %3621 = vmatpush2.bf16.msra.mxu0 0
        %3622 = vmatprep.subr.bf16.mxu0 0
        %3623 = vmatpush2.bf16.msra.mxu0 0
        %3624 = vmatprep.subr.bf16.mxu0 0
        %3625 = vmatpush2.bf16.msra.mxu0 0
        %3626 = vmatprep.subr.bf16.mxu0 0
        %3627 = vmatpush2.bf16.msra.mxu0 0
        %3628 = vmatprep.subr.bf16.mxu0 0
        %3629 = vmatpush2.bf16.msra.mxu0 0
        %3630 = vmatprep.mubr.bf16.mxu0 0
        %3631 = vmatmul.mubr.bf16.gmra.mxu0 %v3596
        %v3632 = vpop.f32.mrf.mxu0
        %v3633 = vadd.f32 0.0, %v3632
        %v3634 = vpop.f32.mrf.mxu0
        %v3635 = vpop.f32.mrf.mxu0
        %v3636 = vpop.f32.mrf.mxu0
        %3637 = vdwg.mxu0
        %v3638 = vadd.f32 %v3568, %v3633
        %v3639 = vrot.slane %v3499, 1
        %v3648 = vunpack.c.l.b16 %v3084
        %v3649 = vunpack.c.l.b16 %v3085
        %v3650 = vunpack.c.l.b16 %v3086
        %v3651 = vunpack.c.l.b16 %v3087
        %v3652 = vunpack.c.l.b16 %v3088
        %v3653 = vunpack.c.l.b16 %v3089
        %v3654 = vunpack.c.l.b16 %v3090
        %v3655 = vunpack.c.l.b16 %v3091
        %v3656 = vpack.c.b16 %v3649, %v3648
        %v3657 = vpack.c.b16 %v3651, %v3650
        %v3658 = vpack.c.b16 %v3653, %v3652
        %v3659 = vpack.c.b16 %v3655, %v3654
        %v3665 = vsel %vm664, %v3639, 0
        %3667 = vmatprep.subr.bf16.mxu0 0
        %3668 = vmatpush1.bf16.msra.mxu0 0
        %3669 = vmatprep.subr.bf16.mxu0 0
        %3670 = vmatpush1.bf16.msra.mxu0 0
        %3671 = vmatprep.subr.bf16.mxu0 0
        %3672 = vmatpush1.bf16.msra.mxu0 0
        %3673 = vmatprep.subr.bf16.mxu0 0
        %3674 = vmatpush1.bf16.msra.mxu0 0
        %3675 = vmatprep.subr.bf16.mxu0 0
        %3676 = vmatpush1.bf16.msra.mxu0 %v3659
        %3677 = vmatprep.subr.bf16.mxu0 0
        %3678 = vmatpush1.bf16.msra.mxu0 %v3658
        %3679 = vmatprep.subr.bf16.mxu0 0
        %3680 = vmatpush1.bf16.msra.mxu0 %v3657
        %3681 = vmatprep.subr.bf16.mxu0 0
        %3682 = vmatpush1.bf16.msra.mxu0 %v3656
        %3683 = vmatprep.subr.bf16.mxu0 0
        %3684 = vmatpush2.bf16.msra.mxu0 0
        %3685 = vmatprep.subr.bf16.mxu0 0
        %3686 = vmatpush2.bf16.msra.mxu0 0
        %3687 = vmatprep.subr.bf16.mxu0 0
        %3688 = vmatpush2.bf16.msra.mxu0 0
        %3689 = vmatprep.subr.bf16.mxu0 0
        %3690 = vmatpush2.bf16.msra.mxu0 0
        %3691 = vmatprep.subr.bf16.mxu0 0
        %3692 = vmatpush2.bf16.msra.mxu0 0
        %3693 = vmatprep.subr.bf16.mxu0 0
        %3694 = vmatpush2.bf16.msra.mxu0 0
        %3695 = vmatprep.subr.bf16.mxu0 0
        %3696 = vmatpush2.bf16.msra.mxu0 0
        %3697 = vmatprep.subr.bf16.mxu0 0
        %3698 = vmatpush2.bf16.msra.mxu0 0
        %3699 = vmatprep.mubr.bf16.mxu0 0
        %3700 = vmatmul.mubr.bf16.gmra.mxu0 %v3665
        %v3701 = vpop.f32.mrf.mxu0
        %v3702 = vadd.f32 0.0, %v3701
        %v3703 = vpop.f32.mrf.mxu0
        %v3704 = vpop.f32.mrf.mxu0
        %v3705 = vpop.f32.mrf.mxu0
        %3706 = vdwg.mxu0
        %v3707 = vadd.f32 %v3638, %v3702
        %v3716 = vunpack.c.l.b16 %v3092
        %v3717 = vunpack.c.l.b16 %v3093
        %v3718 = vunpack.c.l.b16 %v3094
        %v3719 = vunpack.c.l.b16 %v3095
        %v3720 = vunpack.c.l.b16 %v3096
        %v3721 = vunpack.c.l.b16 %v3097
        %v3722 = vunpack.c.l.b16 %v3098
        %v3723 = vunpack.c.l.b16 %v3099
        %v3724 = vpack.c.b16 %v3717, %v3716
        %v3725 = vpack.c.b16 %v3719, %v3718
        %v3726 = vpack.c.b16 %v3721, %v3720
        %v3727 = vpack.c.b16 %v3723, %v3722
        %v3733 = vsel %vm664, %v2877, 0
        %3735 = vmatprep.subr.bf16.mxu0 0
        %3736 = vmatpush1.bf16.msra.mxu0 0
        %3737 = vmatprep.subr.bf16.mxu0 0
        %3738 = vmatpush1.bf16.msra.mxu0 0
        %3739 = vmatprep.subr.bf16.mxu0 0
        %3740 = vmatpush1.bf16.msra.mxu0 0
        %3741 = vmatprep.subr.bf16.mxu0 0
        %3742 = vmatpush1.bf16.msra.mxu0 0
        %3743 = vmatprep.subr.bf16.mxu0 0
        %3744 = vmatpush1.bf16.msra.mxu0 %v3727
        %3745 = vmatprep.subr.bf16.mxu0 0
        %3746 = vmatpush1.bf16.msra.mxu0 %v3726
        %3747 = vmatprep.subr.bf16.mxu0 0
        %3748 = vmatpush1.bf16.msra.mxu0 %v3725
        %3749 = vmatprep.subr.bf16.mxu0 0
        %3750 = vmatpush1.bf16.msra.mxu0 %v3724
        %3751 = vmatprep.subr.bf16.mxu0 0
        %3752 = vmatpush2.bf16.msra.mxu0 0
        %3753 = vmatprep.subr.bf16.mxu0 0
        %3754 = vmatpush2.bf16.msra.mxu0 0
        %3755 = vmatprep.subr.bf16.mxu0 0
        %3756 = vmatpush2.bf16.msra.mxu0 0
        %3757 = vmatprep.subr.bf16.mxu0 0
        %3758 = vmatpush2.bf16.msra.mxu0 0
        %3759 = vmatprep.subr.bf16.mxu0 0
        %3760 = vmatpush2.bf16.msra.mxu0 0
        %3761 = vmatprep.subr.bf16.mxu0 0
        %3762 = vmatpush2.bf16.msra.mxu0 0
        %3763 = vmatprep.subr.bf16.mxu0 0
        %3764 = vmatpush2.bf16.msra.mxu0 0
        %3765 = vmatprep.subr.bf16.mxu0 0
        %3766 = vmatpush2.bf16.msra.mxu0 0
        %3767 = vmatprep.mubr.bf16.mxu0 0
        %3768 = vmatmul.mubr.bf16.gmra.mxu0 %v3733
        %v3769 = vpop.f32.mrf.mxu0
        %v3770 = vadd.f32 0.0, %v3769
        %v3771 = vpop.f32.mrf.mxu0
        %v3772 = vpop.f32.mrf.mxu0
        %v3773 = vpop.f32.mrf.mxu0
        %3774 = vdwg.mxu0
        %v3775 = vadd.f32 %v3707, %v3770
        %v3776 = vshrl.u32 %v2877, 16
        %v3786 = vunpack.c.l.b16 %v3100
        %v3787 = vunpack.c.l.b16 %v3101
        %v3788 = vunpack.c.l.b16 %v3102
        %v3789 = vunpack.c.l.b16 %v3103
        %v3790 = vunpack.c.l.b16 %v3104
        %v3791 = vunpack.c.l.b16 %v3105
        %v3792 = vunpack.c.l.b16 %v3106
        %v3793 = vunpack.c.l.b16 %v3107
        %v3794 = vpack.c.b16 %v3787, %v3786
        %v3795 = vpack.c.b16 %v3789, %v3788
        %v3796 = vpack.c.b16 %v3791, %v3790
        %v3797 = vpack.c.b16 %v3793, %v3792
        %v3803 = vsel %vm664, %v3776, 0
        %3805 = vmatprep.subr.bf16.mxu0 0
        %3806 = vmatpush1.bf16.msra.mxu0 0
        %3807 = vmatprep.subr.bf16.mxu0 0
        %3808 = vmatpush1.bf16.msra.mxu0 0
        %3809 = vmatprep.subr.bf16.mxu0 0
        %3810 = vmatpush1.bf16.msra.mxu0 0
        %3811 = vmatprep.subr.bf16.mxu0 0
        %3812 = vmatpush1.bf16.msra.mxu0 0
        %3813 = vmatprep.subr.bf16.mxu0 0
        %3814 = vmatpush1.bf16.msra.mxu0 %v3797
        %3815 = vmatprep.subr.bf16.mxu0 0
        %3816 = vmatpush1.bf16.msra.mxu0 %v3796
        %3817 = vmatprep.subr.bf16.mxu0 0
        %3818 = vmatpush1.bf16.msra.mxu0 %v3795
        %3819 = vmatprep.subr.bf16.mxu0 0
        %3820 = vmatpush1.bf16.msra.mxu0 %v3794
        %3821 = vmatprep.subr.bf16.mxu0 0
        %3822 = vmatpush2.bf16.msra.mxu0 0
        %3823 = vmatprep.subr.bf16.mxu0 0
        %3824 = vmatpush2.bf16.msra.mxu0 0
        %3825 = vmatprep.subr.bf16.mxu0 0
        %3826 = vmatpush2.bf16.msra.mxu0 0
        %3827 = vmatprep.subr.bf16.mxu0 0
        %3828 = vmatpush2.bf16.msra.mxu0 0
        %3829 = vmatprep.subr.bf16.mxu0 0
        %3830 = vmatpush2.bf16.msra.mxu0 0
        %3831 = vmatprep.subr.bf16.mxu0 0
        %3832 = vmatpush2.bf16.msra.mxu0 0
        %3833 = vmatprep.subr.bf16.mxu0 0
        %3834 = vmatpush2.bf16.msra.mxu0 0
        %3835 = vmatprep.subr.bf16.mxu0 0
        %3836 = vmatpush2.bf16.msra.mxu0 0
        %3837 = vmatprep.mubr.bf16.mxu0 0
        %3838 = vmatmul.mubr.bf16.gmra.mxu0 %v3803
        %v3839 = vpop.f32.mrf.mxu0
        %v3840 = vadd.f32 0.0, %v3839
        %v3841 = vpop.f32.mrf.mxu0
        %v3842 = vpop.f32.mrf.mxu0
        %v3843 = vpop.f32.mrf.mxu0
        %3844 = vdwg.mxu0
        %v3845 = vadd.f32 %v3775, %v3840
        %v3847 = vrot.slane %v2877, 1
        %v3856 = vunpack.c.l.b16 %v3108
        %v3857 = vunpack.c.l.b16 %v3109
        %v3858 = vunpack.c.l.b16 %v3110
        %v3859 = vunpack.c.l.b16 %v3111
        %v3860 = vunpack.c.l.b16 %v3112
        %v3861 = vunpack.c.l.b16 %v3113
        %v3862 = vunpack.c.l.b16 %v3114
        %v3863 = vunpack.c.l.b16 %v3115
        %v3864 = vpack.c.b16 %v3857, %v3856
        %v3865 = vpack.c.b16 %v3859, %v3858
        %v3866 = vpack.c.b16 %v3861, %v3860
        %v3867 = vpack.c.b16 %v3863, %v3862
        %v3873 = vsel %vm664, %v3847, 0
        %3875 = vmatprep.subr.bf16.mxu0 0
        %3876 = vmatpush1.bf16.msra.mxu0 0
        %3877 = vmatprep.subr.bf16.mxu0 0
        %3878 = vmatpush1.bf16.msra.mxu0 0
        %3879 = vmatprep.subr.bf16.mxu0 0
        %3880 = vmatpush1.bf16.msra.mxu0 0
        %3881 = vmatprep.subr.bf16.mxu0 0
        %3882 = vmatpush1.bf16.msra.mxu0 0
        %3883 = vmatprep.subr.bf16.mxu0 0
        %3884 = vmatpush1.bf16.msra.mxu0 %v3867
        %3885 = vmatprep.subr.bf16.mxu0 0
        %3886 = vmatpush1.bf16.msra.mxu0 %v3866
        %3887 = vmatprep.subr.bf16.mxu0 0
        %3888 = vmatpush1.bf16.msra.mxu0 %v3865
        %3889 = vmatprep.subr.bf16.mxu0 0
        %3890 = vmatpush1.bf16.msra.mxu0 %v3864
        %3891 = vmatprep.subr.bf16.mxu0 0
        %3892 = vmatpush2.bf16.msra.mxu0 0
        %3893 = vmatprep.subr.bf16.mxu0 0
        %3894 = vmatpush2.bf16.msra.mxu0 0
        %3895 = vmatprep.subr.bf16.mxu0 0
        %3896 = vmatpush2.bf16.msra.mxu0 0
        %3897 = vmatprep.subr.bf16.mxu0 0
        %3898 = vmatpush2.bf16.msra.mxu0 0
        %3899 = vmatprep.subr.bf16.mxu0 0
        %3900 = vmatpush2.bf16.msra.mxu0 0
        %3901 = vmatprep.subr.bf16.mxu0 0
        %3902 = vmatpush2.bf16.msra.mxu0 0
        %3903 = vmatprep.subr.bf16.mxu0 0
        %3904 = vmatpush2.bf16.msra.mxu0 0
        %3905 = vmatprep.subr.bf16.mxu0 0
        %3906 = vmatpush2.bf16.msra.mxu0 0
        %3907 = vmatprep.mubr.bf16.mxu0 0
        %3908 = vmatmul.mubr.bf16.gmra.mxu0 %v3873
        %v3909 = vpop.f32.mrf.mxu0
        %v3910 = vadd.f32 0.0, %v3909
        %v3911 = vpop.f32.mrf.mxu0
        %v3912 = vpop.f32.mrf.mxu0
        %v3913 = vpop.f32.mrf.mxu0
        %3914 = vdwg.mxu0
        %v3915 = vadd.f32 %v3845, %v3910
        %v3916 = vrot.slane %v3776, 1
        %v3925 = vunpack.c.l.b16 %v3116
        %v3926 = vunpack.c.l.b16 %v3117
        %v3927 = vunpack.c.l.b16 %v3118
        %v3928 = vunpack.c.l.b16 %v3119
        %v3929 = vunpack.c.l.b16 %v3120
        %v3930 = vunpack.c.l.b16 %v3121
        %v3931 = vunpack.c.l.b16 %v3122
        %v3932 = vunpack.c.l.b16 %v3123
        %v3933 = vpack.c.b16 %v3926, %v3925
        %v3934 = vpack.c.b16 %v3928, %v3927
        %v3935 = vpack.c.b16 %v3930, %v3929
        %v3936 = vpack.c.b16 %v3932, %v3931
        %v3942 = vsel %vm664, %v3916, 0
        %3944 = vmatprep.subr.bf16.mxu0 0
        %3945 = vmatpush1.bf16.msra.mxu0 0
        %3946 = vmatprep.subr.bf16.mxu0 0
        %3947 = vmatpush1.bf16.msra.mxu0 0
        %3948 = vmatprep.subr.bf16.mxu0 0
        %3949 = vmatpush1.bf16.msra.mxu0 0
        %3950 = vmatprep.subr.bf16.mxu0 0
        %3951 = vmatpush1.bf16.msra.mxu0 0
        %3952 = vmatprep.subr.bf16.mxu0 0
        %3953 = vmatpush1.bf16.msra.mxu0 %v3936
        %3954 = vmatprep.subr.bf16.mxu0 0
        %3955 = vmatpush1.bf16.msra.mxu0 %v3935
        %3956 = vmatprep.subr.bf16.mxu0 0
        %3957 = vmatpush1.bf16.msra.mxu0 %v3934
        %3958 = vmatprep.subr.bf16.mxu0 0
        %3959 = vmatpush1.bf16.msra.mxu0 %v3933
        %3960 = vmatprep.subr.bf16.mxu0 0
        %3961 = vmatpush2.bf16.msra.mxu0 0
        %3962 = vmatprep.subr.bf16.mxu0 0
        %3963 = vmatpush2.bf16.msra.mxu0 0
        %3964 = vmatprep.subr.bf16.mxu0 0
        %3965 = vmatpush2.bf16.msra.mxu0 0
        %3966 = vmatprep.subr.bf16.mxu0 0
        %3967 = vmatpush2.bf16.msra.mxu0 0
        %3968 = vmatprep.subr.bf16.mxu0 0
        %3969 = vmatpush2.bf16.msra.mxu0 0
        %3970 = vmatprep.subr.bf16.mxu0 0
        %3971 = vmatpush2.bf16.msra.mxu0 0
        %3972 = vmatprep.subr.bf16.mxu0 0
        %3973 = vmatpush2.bf16.msra.mxu0 0
        %3974 = vmatprep.subr.bf16.mxu0 0
        %3975 = vmatpush2.bf16.msra.mxu0 0
        %3976 = vmatprep.mubr.bf16.mxu0 0
        %3977 = vmatmul.mubr.bf16.gmra.mxu0 %v3942
        %v3978 = vpop.f32.mrf.mxu0
        %v3979 = vadd.f32 0.0, %v3978
        %v3980 = vpop.f32.mrf.mxu0
        %v3981 = vpop.f32.mrf.mxu0
        %v3982 = vpop.f32.mrf.mxu0
        %3983 = vdwg.mxu0
        %v3984 = vadd.f32 %v3915, %v3979
        %v3993 = vunpack.c.l.b16 %v3124
        %v3994 = vunpack.c.l.b16 %v3125
        %v3995 = vunpack.c.l.b16 %v3126
        %v3996 = vunpack.c.l.b16 %v3127
        %v3997 = vunpack.c.l.b16 %v3128
        %v3998 = vunpack.c.l.b16 %v3129
        %v3999 = vunpack.c.l.b16 %v3130
        %v4000 = vunpack.c.l.b16 %v3131
        %v4001 = vpack.c.b16 %v3994, %v3993
        %v4002 = vpack.c.b16 %v3996, %v3995
        %v4003 = vpack.c.b16 %v3998, %v3997
        %v4004 = vpack.c.b16 %v4000, %v3999
        %v4010 = vsel %vm664, %v3027, 0
        %4012 = vmatprep.subr.bf16.mxu0 0
        %4013 = vmatpush1.bf16.msra.mxu0 0
        %4014 = vmatprep.subr.bf16.mxu0 0
        %4015 = vmatpush1.bf16.msra.mxu0 0
        %4016 = vmatprep.subr.bf16.mxu0 0
        %4017 = vmatpush1.bf16.msra.mxu0 0
        %4018 = vmatprep.subr.bf16.mxu0 0
        %4019 = vmatpush1.bf16.msra.mxu0 0
        %4020 = vmatprep.subr.bf16.mxu0 0
        %4021 = vmatpush1.bf16.msra.mxu0 %v4004
        %4022 = vmatprep.subr.bf16.mxu0 0
        %4023 = vmatpush1.bf16.msra.mxu0 %v4003
        %4024 = vmatprep.subr.bf16.mxu0 0
        %4025 = vmatpush1.bf16.msra.mxu0 %v4002
        %4026 = vmatprep.subr.bf16.mxu0 0
        %4027 = vmatpush1.bf16.msra.mxu0 %v4001
        %4028 = vmatprep.subr.bf16.mxu0 0
        %4029 = vmatpush2.bf16.msra.mxu0 0
        %4030 = vmatprep.subr.bf16.mxu0 0
        %4031 = vmatpush2.bf16.msra.mxu0 0
        %4032 = vmatprep.subr.bf16.mxu0 0
        %4033 = vmatpush2.bf16.msra.mxu0 0
        %4034 = vmatprep.subr.bf16.mxu0 0
        %4035 = vmatpush2.bf16.msra.mxu0 0
        %4036 = vmatprep.subr.bf16.mxu0 0
        %4037 = vmatpush2.bf16.msra.mxu0 0
        %4038 = vmatprep.subr.bf16.mxu0 0
        %4039 = vmatpush2.bf16.msra.mxu0 0
        %4040 = vmatprep.subr.bf16.mxu0 0
        %4041 = vmatpush2.bf16.msra.mxu0 0
        %4042 = vmatprep.subr.bf16.mxu0 0
        %4043 = vmatpush2.bf16.msra.mxu0 0
        %4044 = vmatprep.mubr.bf16.mxu0 0
        %4045 = vmatmul.mubr.bf16.gmra.mxu0 %v4010
        %v4046 = vpop.f32.mrf.mxu0
        %v4047 = vadd.f32 0.0, %v4046
        %v4048 = vpop.f32.mrf.mxu0
        %v4049 = vpop.f32.mrf.mxu0
        %v4050 = vpop.f32.mrf.mxu0
        %4051 = vdwg.mxu0
        %v4052 = vadd.f32 %v3984, %v4047
        %v4053 = vshrl.u32 %v3027, 16
        %v4063 = vunpack.c.l.b16 %v3132
        %v4064 = vunpack.c.l.b16 %v3133
        %v4065 = vunpack.c.l.b16 %v3134
        %v4066 = vunpack.c.l.b16 %v3135
        %v4067 = vunpack.c.l.b16 %v3136
        %v4068 = vunpack.c.l.b16 %v3137
        %v4069 = vunpack.c.l.b16 %v3138
        %v4070 = vunpack.c.l.b16 %v3139
        %v4071 = vpack.c.b16 %v4064, %v4063
        %v4072 = vpack.c.b16 %v4066, %v4065
        %v4073 = vpack.c.b16 %v4068, %v4067
        %v4074 = vpack.c.b16 %v4070, %v4069
        %v4080 = vsel %vm664, %v4053, 0
        %4082 = vmatprep.subr.bf16.mxu0 0
        %4083 = vmatpush1.bf16.msra.mxu0 0
        %4084 = vmatprep.subr.bf16.mxu0 0
        %4085 = vmatpush1.bf16.msra.mxu0 0
        %4086 = vmatprep.subr.bf16.mxu0 0
        %4087 = vmatpush1.bf16.msra.mxu0 0
        %4088 = vmatprep.subr.bf16.mxu0 0
        %4089 = vmatpush1.bf16.msra.mxu0 0
        %4090 = vmatprep.subr.bf16.mxu0 0
        %4091 = vmatpush1.bf16.msra.mxu0 %v4074
        %4092 = vmatprep.subr.bf16.mxu0 0
        %4093 = vmatpush1.bf16.msra.mxu0 %v4073
        %4094 = vmatprep.subr.bf16.mxu0 0
        %4095 = vmatpush1.bf16.msra.mxu0 %v4072
        %4096 = vmatprep.subr.bf16.mxu0 0
        %4097 = vmatpush1.bf16.msra.mxu0 %v4071
        %4098 = vmatprep.subr.bf16.mxu0 0
        %4099 = vmatpush2.bf16.msra.mxu0 0
        %4100 = vmatprep.subr.bf16.mxu0 0
        %4101 = vmatpush2.bf16.msra.mxu0 0
        %4102 = vmatprep.subr.bf16.mxu0 0
        %4103 = vmatpush2.bf16.msra.mxu0 0
        %4104 = vmatprep.subr.bf16.mxu0 0
        %4105 = vmatpush2.bf16.msra.mxu0 0
        %4106 = vmatprep.subr.bf16.mxu0 0
        %4107 = vmatpush2.bf16.msra.mxu0 0
        %4108 = vmatprep.subr.bf16.mxu0 0
        %4109 = vmatpush2.bf16.msra.mxu0 0
        %4110 = vmatprep.subr.bf16.mxu0 0
        %4111 = vmatpush2.bf16.msra.mxu0 0
        %4112 = vmatprep.subr.bf16.mxu0 0
        %4113 = vmatpush2.bf16.msra.mxu0 0
        %4114 = vmatprep.mubr.bf16.mxu0 0
        %4115 = vmatmul.mubr.bf16.gmra.mxu0 %v4080
        %v4116 = vpop.f32.mrf.mxu0
        %v4117 = vadd.f32 0.0, %v4116
        %v4118 = vpop.f32.mrf.mxu0
        %v4119 = vpop.f32.mrf.mxu0
        %v4120 = vpop.f32.mrf.mxu0
        %4121 = vdwg.mxu0
        %v4122 = vadd.f32 %v4052, %v4117
        %v4124 = vrot.slane %v3027, 1
        %v4133 = vunpack.c.l.b16 %v3140
        %v4134 = vunpack.c.l.b16 %v3141
        %v4135 = vunpack.c.l.b16 %v3142
        %v4136 = vunpack.c.l.b16 %v3143
        %v4137 = vunpack.c.l.b16 %v3144
        %v4138 = vunpack.c.l.b16 %v3145
        %v4139 = vunpack.c.l.b16 %v3146
        %v4140 = vunpack.c.l.b16 %v3147
        %v4141 = vpack.c.b16 %v4134, %v4133
        %v4142 = vpack.c.b16 %v4136, %v4135
        %v4143 = vpack.c.b16 %v4138, %v4137
        %v4144 = vpack.c.b16 %v4140, %v4139
        %v4150 = vsel %vm664, %v4124, 0
        %4152 = vmatprep.subr.bf16.mxu0 0
        %4153 = vmatpush1.bf16.msra.mxu0 0
        %4154 = vmatprep.subr.bf16.mxu0 0
        %4155 = vmatpush1.bf16.msra.mxu0 0
        %4156 = vmatprep.subr.bf16.mxu0 0
        %4157 = vmatpush1.bf16.msra.mxu0 0
        %4158 = vmatprep.subr.bf16.mxu0 0
        %4159 = vmatpush1.bf16.msra.mxu0 0
        %4160 = vmatprep.subr.bf16.mxu0 0
        %4161 = vmatpush1.bf16.msra.mxu0 %v4144
        %4162 = vmatprep.subr.bf16.mxu0 0
        %4163 = vmatpush1.bf16.msra.mxu0 %v4143
        %4164 = vmatprep.subr.bf16.mxu0 0
        %4165 = vmatpush1.bf16.msra.mxu0 %v4142
        %4166 = vmatprep.subr.bf16.mxu0 0
        %4167 = vmatpush1.bf16.msra.mxu0 %v4141
        %4168 = vmatprep.subr.bf16.mxu0 0
        %4169 = vmatpush2.bf16.msra.mxu0 0
        %4170 = vmatprep.subr.bf16.mxu0 0
        %4171 = vmatpush2.bf16.msra.mxu0 0
        %4172 = vmatprep.subr.bf16.mxu0 0
        %4173 = vmatpush2.bf16.msra.mxu0 0
        %4174 = vmatprep.subr.bf16.mxu0 0
        %4175 = vmatpush2.bf16.msra.mxu0 0
        %4176 = vmatprep.subr.bf16.mxu0 0
        %4177 = vmatpush2.bf16.msra.mxu0 0
        %4178 = vmatprep.subr.bf16.mxu0 0
        %4179 = vmatpush2.bf16.msra.mxu0 0
        %4180 = vmatprep.subr.bf16.mxu0 0
        %4181 = vmatpush2.bf16.msra.mxu0 0
        %4182 = vmatprep.subr.bf16.mxu0 0
        %4183 = vmatpush2.bf16.msra.mxu0 0
        %4184 = vmatprep.mubr.bf16.mxu0 0
        %4185 = vmatmul.mubr.bf16.gmra.mxu0 %v4150
        %v4186 = vpop.f32.mrf.mxu0
        %v4187 = vadd.f32 0.0, %v4186
        %v4188 = vpop.f32.mrf.mxu0
        %v4189 = vpop.f32.mrf.mxu0
        %v4190 = vpop.f32.mrf.mxu0
        %4191 = vdwg.mxu0
        %v4192 = vadd.f32 %v4122, %v4187
        %v4193 = vrot.slane %v4053, 1
        %v4202 = vunpack.c.l.b16 %v3148
        %v4203 = vunpack.c.l.b16 %v3149
        %v4204 = vunpack.c.l.b16 %v3150
        %v4205 = vunpack.c.l.b16 %v3151
        %v4206 = vunpack.c.l.b16 %v3152
        %v4207 = vunpack.c.l.b16 %v3153
        %v4208 = vunpack.c.l.b16 %v3154
        %v4209 = vunpack.c.l.b16 %v3155
        %v4210 = vpack.c.b16 %v4203, %v4202
        %v4211 = vpack.c.b16 %v4205, %v4204
        %v4212 = vpack.c.b16 %v4207, %v4206
        %v4213 = vpack.c.b16 %v4209, %v4208
        %v4219 = vsel %vm664, %v4193, 0
        %4221 = vmatprep.subr.bf16.mxu0 0
        %4222 = vmatpush1.bf16.msra.mxu0 0
        %4223 = vmatprep.subr.bf16.mxu0 0
        %4224 = vmatpush1.bf16.msra.mxu0 0
        %4225 = vmatprep.subr.bf16.mxu0 0
        %4226 = vmatpush1.bf16.msra.mxu0 0
        %4227 = vmatprep.subr.bf16.mxu0 0
        %4228 = vmatpush1.bf16.msra.mxu0 0
        %4229 = vmatprep.subr.bf16.mxu0 0
        %4230 = vmatpush1.bf16.msra.mxu0 %v4213
        %4231 = vmatprep.subr.bf16.mxu0 0
        %4232 = vmatpush1.bf16.msra.mxu0 %v4212
        %4233 = vmatprep.subr.bf16.mxu0 0
        %4234 = vmatpush1.bf16.msra.mxu0 %v4211
        %4235 = vmatprep.subr.bf16.mxu0 0
        %4236 = vmatpush1.bf16.msra.mxu0 %v4210
        %4237 = vmatprep.subr.bf16.mxu0 0
        %4238 = vmatpush2.bf16.msra.mxu0 0
        %4239 = vmatprep.subr.bf16.mxu0 0
        %4240 = vmatpush2.bf16.msra.mxu0 0
        %4241 = vmatprep.subr.bf16.mxu0 0
        %4242 = vmatpush2.bf16.msra.mxu0 0
        %4243 = vmatprep.subr.bf16.mxu0 0
        %4244 = vmatpush2.bf16.msra.mxu0 0
        %4245 = vmatprep.subr.bf16.mxu0 0
        %4246 = vmatpush2.bf16.msra.mxu0 0
        %4247 = vmatprep.subr.bf16.mxu0 0
        %4248 = vmatpush2.bf16.msra.mxu0 0
        %4249 = vmatprep.subr.bf16.mxu0 0
        %4250 = vmatpush2.bf16.msra.mxu0 0
        %4251 = vmatprep.subr.bf16.mxu0 0
        %4252 = vmatpush2.bf16.msra.mxu0 0
        %4253 = vmatprep.mubr.bf16.mxu0 0
        %4254 = vmatmul.mubr.bf16.gmra.mxu0 %v4219
        %v4255 = vpop.f32.mrf.mxu0
        %v4256 = vadd.f32 0.0, %v4255
        %v4257 = vpop.f32.mrf.mxu0
        %v4258 = vpop.f32.mrf.mxu0
        %v4259 = vpop.f32.mrf.mxu0
        %4260 = vdwg.mxu0
        %v4261 = vadd.f32 %v4192, %v4256
        %v4262 = vld [vmem:[%s8] sm:$0x1]
        %v4263 = vadd.f32 %v4261, %v4262
        %v4264 = vmax.f32 %v4263, 0.0
        %v4265 = vpack.c.bf16 %v4264, %v4264
        %v4266 = vld [vmem:[%s9] sm:$0xf]
        %v4267 = vld [vmem:[%s9 + $0x4] sm:$0xf]
        %v4268 = vld [vmem:[%s9 + $0x8] sm:$0xf]
        %v4269 = vld [vmem:[%s9 + $0xc] sm:$0xf]
        %v4270 = vld [vmem:[%s9 + $0x10] sm:$0xf]
        %v4271 = vld [vmem:[%s9 + $0x14] sm:$0xf]
        %v4272 = vld [vmem:[%s9 + $0x18] sm:$0xf]
        %v4273 = vld [vmem:[%s9 + $0x1c] sm:$0xf]
        %v4274 = vld [vmem:[%s9 + $0x20] sm:$0xf]
        %v4275 = vld [vmem:[%s9 + $0x24] sm:$0xf]
        %v4276 = vld [vmem:[%s9 + $0x28] sm:$0xf]
        %v4277 = vld [vmem:[%s9 + $0x2c] sm:$0xf]
        %v4278 = vld [vmem:[%s9 + $0x30] sm:$0xf]
        %v4279 = vld [vmem:[%s9 + $0x34] sm:$0xf]
        %v4280 = vld [vmem:[%s9 + $0x38] sm:$0xf]
        %v4281 = vld [vmem:[%s9 + $0x3c] sm:$0xf]
        %v4282 = vld [vmem:[%s10] sm:$0x1]
        %v4299 = vunpack.c.l.b16 %v4266
        %v4300 = vunpack.c.l.b16 %v4267
        %v4301 = vunpack.c.l.b16 %v4268
        %v4302 = vunpack.c.l.b16 %v4269
        %v4303 = vunpack.c.l.b16 %v4270
        %v4304 = vunpack.c.l.b16 %v4271
        %v4305 = vunpack.c.l.b16 %v4272
        %v4306 = vunpack.c.l.b16 %v4273
        %v4307 = vunpack.c.l.b16 %v4274
        %v4308 = vunpack.c.l.b16 %v4275
        %v4309 = vunpack.c.l.b16 %v4276
        %v4310 = vunpack.c.l.b16 %v4277
        %v4311 = vunpack.c.l.b16 %v4278
        %v4312 = vunpack.c.l.b16 %v4279
        %v4313 = vunpack.c.l.b16 %v4280
        %v4314 = vunpack.c.l.b16 %v4281
        %v4315 = vpack.c.b16 %v4300, %v4299
        %v4316 = vpack.c.b16 %v4302, %v4301
        %v4317 = vpack.c.b16 %v4304, %v4303
        %v4318 = vpack.c.b16 %v4306, %v4305
        %v4319 = vpack.c.b16 %v4308, %v4307
        %v4320 = vpack.c.b16 %v4310, %v4309
        %v4321 = vpack.c.b16 %v4312, %v4311
        %v4322 = vpack.c.b16 %v4314, %v4313
        %4331 = vmatprep.subr.bf16.mxu0 0
        %4332 = vmatpush1.bf16.msra.mxu0 %v4322
        %4333 = vmatprep.subr.bf16.mxu0 0
        %4334 = vmatpush1.bf16.msra.mxu0 %v4321
        %4335 = vmatprep.subr.bf16.mxu0 0
        %4336 = vmatpush1.bf16.msra.mxu0 %v4320
        %4337 = vmatprep.subr.bf16.mxu0 0
        %4338 = vmatpush1.bf16.msra.mxu0 %v4319
        %4339 = vmatprep.subr.bf16.mxu0 0
        %4340 = vmatpush1.bf16.msra.mxu0 %v4318
        %4341 = vmatprep.subr.bf16.mxu0 0
        %4342 = vmatpush1.bf16.msra.mxu0 %v4317
        %4343 = vmatprep.subr.bf16.mxu0 0
        %4344 = vmatpush1.bf16.msra.mxu0 %v4316
        %4345 = vmatprep.subr.bf16.mxu0 0
        %4346 = vmatpush1.bf16.msra.mxu0 %v4315
        %4347 = vmatprep.subr.bf16.mxu0 0
        %4348 = vmatpush2.bf16.msra.mxu0 0
        %4349 = vmatprep.subr.bf16.mxu0 0
        %4350 = vmatpush2.bf16.msra.mxu0 0
        %4351 = vmatprep.subr.bf16.mxu0 0
        %4352 = vmatpush2.bf16.msra.mxu0 0
        %4353 = vmatprep.subr.bf16.mxu0 0
        %4354 = vmatpush2.bf16.msra.mxu0 0
        %4355 = vmatprep.subr.bf16.mxu0 0
        %4356 = vmatpush2.bf16.msra.mxu0 0
        %4357 = vmatprep.subr.bf16.mxu0 0
        %4358 = vmatpush2.bf16.msra.mxu0 0
        %4359 = vmatprep.subr.bf16.mxu0 0
        %4360 = vmatpush2.bf16.msra.mxu0 0
        %4361 = vmatprep.subr.bf16.mxu0 0
        %4362 = vmatpush2.bf16.msra.mxu0 0
        %4363 = vmatprep.mubr.bf16.mxu0 0
        %4364 = vmatmul.mubr.bf16.gmra.mxu0 %v4265
        %v4365 = vpop.f32.mrf.mxu0
        %v4366 = vadd.f32 %v4282, %v4365
        %v4367 = vpop.f32.mrf.mxu0
        %v4368 = vpop.f32.mrf.mxu0
        %v4369 = vpop.f32.mrf.mxu0
        %4370 = vdwg.mxu0
        %vm4371 = vcmask 1040384
        %v4372 = vsel %vm4371, %v4366, -inf
        %4373 = vmax.xlane.f32.xlu0 %v4372
        %v4374 = vpop.xlane.xlu0 %4373
        %v4375 = vsub.f32 %v4366, %v4374
        %v4376 = vmul.f32 %v4375, 1.442695
        %v4377 = vpow.pop %v4376
        %v4378 = vsel %vm4371, %v4377, 0.0
        %4379 = vadd.xlane.f32.xlu0 %v4378
        %v4380 = vpop.xlane.xlu0 %4379
        %v4381 = vrcp.pop %v4380
        %v4382 = vmul.f32 %v4377, %v4381
        %4383 = vst [vmem:[%s378] sm:$0x1] %v4382
        %s4384 = sand.u32 %s269, 1
        %s4385 = scalar_lea.sflag [#allocation3], %s4384
        %s4386 = sand.u32 %s269, 1
        %s4387 = scalar_lea.vmem [#allocation2], %s4386
        // Predicated region
        $region65: #{actor_forward.1} parent=63 // pred_check
          %p4388 = pneg %p279
        $region66: #{actor_forward.1} parent=63 // pred_check_branch
          %4390 = sbr.rel (%p4388) target = $region68
        $region67: #{actor_forward.1} parent=63 // pred_region
          %s4392 = ssub.s32 16, 16
          %4393 = vsyncadd %s4385, %s4392
          %s4394 = smul.addr %s25, 16
          %s4395 = scalar_lea.hbm %s11, %s4394
          %s4397 = sshll.u32 %s4387, 4
          %s4398 = int_to_ptr.vmem [resolvable:$true] %s4397
          %4400 = dma.vmem_to_hbm [thread:$0]  %s4398, 16, %s4395, %s4385
        $region68: #{actor_forward.1} parent=63 // pred_fallthru
          _
      $region64: #{actor_forward.1} parent=5 // pred_fallthru
        _
      %p4401 = scmp.le.s32.totalorder 2, %s20
      // Predicated region
      $region69: #{actor_forward.1} parent=5 // pred_check
        %p4402 = pneg %p4401
      $region70: #{actor_forward.1} parent=5 // pred_check_branch
        %4404 = sbr.rel (%p4402) target = $region72
      $region71: #{actor_forward.1} parent=5 // pred_region
        %s4405 = ssub.s32 %s20, 2
        // Predicated region
        $region73: #{actor_forward.1} parent=71 // pred_check
          %p4406 = pneg %p285
        $region74: #{actor_forward.1} parent=71 // pred_check_branch
          %4408 = sbr.rel (%p4406) target = $region76
        $region75: #{actor_forward.1} parent=71 // pred_region
          %s4409 = sand.u32 %s270, 1
          %s4410 = scalar_lea.sflag [#allocation3], %s4409
          %s4411 = sand.u32 %s270, 1
          %s4412 = scalar_lea.vmem [#allocation2], %s4411
          %4413 = dma.done %s4410, 16
        $region76: #{actor_forward.1} parent=71 // pred_fallthru
          _
      $region72: #{actor_forward.1} parent=5 // pred_fallthru
        _
    $region6: #{actor_forward.1} parent=1 // loop_footer
      %s24 = sadd.s32 1, %s20
    $region7: #{actor_forward.1} parent=1 // loop_footer_branch
      %19 = sbr.rel target = $region3
    $region8: #{actor_forward.1} parent=1 // loop_exit
      _
    %4414 = vsyncpa [#allocation3], 1
    %s4415 = scalar_lea.sflag [#allocation3], 1
    %4416 = vsyncpa %s4415, 1

</llo_original>
